<compile_context>
chip_gen: v7x
topology: tpu7x:2x2x1
jax: 0.10.0
libtpu: 0.0.40
codegen_flags: <defaults>
</compile_context>

<pallas_src>
import math
from functools import partial

import jax
import jax.numpy as jnp
from jax.experimental import pallas as pl
from jax.experimental.pallas import tpu as pltpu


def _layer_norm(z, eps=1e-5):
    mu = jnp.mean(z, axis=-1, keepdims=True)
    var = jnp.mean((z - mu) ** 2, axis=-1, keepdims=True)
    return (z - mu) * jax.lax.rsqrt(var + eps)


def _mha(x_q, x_kv, mask_hqk, wq_h, wk_h, wv_h, wo_h, num_heads, scale):
    """Batched-over-heads multi-head attention.

    x_q: [Tq, E] f32, x_kv: [Tk, E] f32, mask_hqk: [H, Tq, Tk] (nonzero = masked).
    wq_h/wk_h/wv_h: [H, E, d] bf16, wo_h: [H, d, E] bf16.
    """
    H = num_heads
    xq_b = jnp.broadcast_to(x_q.astype(jnp.bfloat16)[None], (H,) + x_q.shape)
    xkv_b = jnp.broadcast_to(x_kv.astype(jnp.bfloat16)[None], (H,) + x_kv.shape)

    q = jnp.einsum('hqe,hed->hqd', xq_b, wq_h, preferred_element_type=jnp.float32)
    k = jnp.einsum('hke,hed->hkd', xkv_b, wk_h, preferred_element_type=jnp.float32)
    v = jnp.einsum('hke,hed->hkd', xkv_b, wv_h, preferred_element_type=jnp.float32)

    s = jnp.einsum('hqd,hkd->hqk', q.astype(jnp.bfloat16), k.astype(jnp.bfloat16),
                   preferred_element_type=jnp.float32) * scale
    s = jnp.where(mask_hqk != 0, -1e9, s)            # masked_fill_(mask, -1e9)

    m = jnp.max(s, axis=-1, keepdims=True)
    e = jnp.exp(s - m)
    denom = jnp.sum(e, axis=-1, keepdims=True)
    p = e * pl.reciprocal(denom, approx=True)        # EUP reciprocal, off VALU path

    ctx = jnp.einsum('hqk,hkd->hqd', p.astype(jnp.bfloat16), v.astype(jnp.bfloat16),
                     preferred_element_type=jnp.float32)
    # sum_h ctx_h @ WO[h]  ==  concat_h(ctx_h) @ WO   (single batched MXU op + cheap reduce)
    per_head = jnp.einsum('hqd,hde->hqe', ctx.astype(jnp.bfloat16), wo_h,
                          preferred_element_type=jnp.float32)
    return jnp.sum(per_head, axis=0)                 # [Tq, E]


def decoder_layer_kernel(de_q_ref, de_full_ref, en_ref, self_mask_ref, ende_mask_ref,
                         wq1_ref, wk1_ref, wv1_ref, wo1_ref,
                         wq2_ref, wk2_ref, wv2_ref, wo2_ref,
                         w1_ref, w2_ref,
                         out_ref,
                         *, num_heads, k_size):
    xq = de_q_ref[0]                 # [TQ, E]  query-tile rows of decoder input
    x_full = de_full_ref[0]          # [T, E]   full decoder input (K/V for self-attn)
    enc = en_ref[0]                  # [S, E]
    self_mask = self_mask_ref[0]     # [H, TQ, T]
    ende_mask = ende_mask_ref[0]     # [H, TQ, S]
    scale = 1.0 / math.sqrt(k_size)

    # Sub-layer 1: masked self-attention + AddNorm
    attn1 = _mha(xq, x_full, self_mask,
                 wq1_ref[...], wk1_ref[...], wv1_ref[...], wo1_ref[...],
                 num_heads, scale)
    mid1 = _layer_norm(xq + attn1)

    # Sub-layer 2: encoder-decoder attention + AddNorm
    attn2 = _mha(mid1, enc, ende_mask,
                 wq2_ref[...], wk2_ref[...], wv2_ref[...], wo2_ref[...],
                 num_heads, scale)
    mid2 = _layer_norm(mid1 + attn2)

    # Sub-layer 3: position-wise feed-forward + AddNorm (bf16 matmuls, f32 accumulate)
    hid = jnp.maximum(
        jnp.dot(mid2.astype(jnp.bfloat16), w1_ref[...],
                preferred_element_type=jnp.float32), 0.0)
    ffn = jnp.dot(hid.astype(jnp.bfloat16), w2_ref[...],
                  preferred_element_type=jnp.float32)
    out_ref[0] = _layer_norm(mid2 + ffn)


def decoder_layer(de_inputs, en_outputs, self_mask, ende_mask, params,
                  num_heads, q_size, k_size, v_size, *, q_tile=128):
    """de_inputs: [B,T,E] f32, en_outputs: [B,S,E] f32,
       self_mask: [B,H,T,T], ende_mask: [B,H,T,S] (nonzero = masked).
       params: PyTorch-style bias-free weights laid out [in_features, out_features]."""
    B, T, E = de_inputs.shape
    _, S, _ = en_outputs.shape
    (wq1, wk1, wv1, wo1, wq2, wk2, wv2, wo2, w1, w2) = params
    H = num_heads

    TQ = min(q_tile, T)
    assert T % TQ == 0, "tgtLen must be divisible by the query tile"
    nq = T // TQ

    # Host-side (free) re-layout to head-major + bf16: avoids in-kernel relayouts and
    # halves weight DMA / VMEM footprint.
    def head_major_in(w, d):    # [E, H*d] -> [H, E, d]
        return jnp.transpose(w.reshape(E, H, d), (1, 0, 2)).astype(jnp.bfloat16)

    def head_major_out(w, d):   # [H*d, E] -> [H, d, E]
        return w.reshape(H, d, E).astype(jnp.bfloat16)

    wq1h = head_major_in(wq1, q_size); wk1h = head_major_in(wk1, k_size)
    wv1h = head_major_in(wv1, v_size); wo1h = head_major_out(wo1, v_size)
    wq2h = head_major_in(wq2, q_size); wk2h = head_major_in(wk2, k_size)
    wv2h = head_major_in(wv2, v_size); wo2h = head_major_out(wo2, v_size)
    w1b = w1.astype(jnp.bfloat16); w2b = w2.astype(jnp.bfloat16)

    kernel = partial(decoder_layer_kernel, num_heads=H, k_size=k_size)

    def wspec(shape):
        nd = len(shape)
        return pl.BlockSpec(shape, lambda b, q, _n=nd: (0,) * _n)

    grid_spec = pltpu.PrefetchScalarGridSpec(
        num_scalar_prefetch=0,
        grid=(B, nq),
        in_specs=[
            pl.BlockSpec((1, TQ, E), lambda b, q: (b, q, 0)),      # query tile (Q + residual)
            pl.BlockSpec((1, T, E), lambda b, q: (b, 0, 0)),       # full decoder input (K/V)
            pl.BlockSpec((1, S, E), lambda b, q: (b, 0, 0)),       # encoder output
            pl.BlockSpec((1, H, TQ, T), lambda b, q: (b, 0, q, 0)),
            pl.BlockSpec((1, H, TQ, S), lambda b, q: (b, 0, q, 0)),
            wspec(wq1h.shape), wspec(wk1h.shape), wspec(wv1h.shape), wspec(wo1h.shape),
            wspec(wq2h.shape), wspec(wk2h.shape), wspec(wv2h.shape), wspec(wo2h.shape),
            wspec(w1b.shape), wspec(w2b.shape),
        ],
        out_specs=pl.BlockSpec((1, TQ, E), lambda b, q: (b, q, 0)),
    )

    return pl.pallas_call(
        kernel,
        out_shape=jax.ShapeDtypeStruct((B, T, E), jnp.float32),
        grid_spec=grid_spec,
        compiler_params=pltpu.CompilerParams(
            dimension_semantics=("parallel", "parallel"),
            vmem_limit_bytes=32 * 1024 * 1024),
    )(de_inputs, de_inputs, en_outputs, self_mask, ende_mask,
      wq1h, wk1h, wv1h, wo1h, wq2h, wk2h, wv2h, wo2h, w1b, w2b)


if __name__ == "__main__":
    # Small shapes consistent with the module
    B, T, S = 2, 8, 8          # batchSize, tgtLen, seqLen
    E, H = 32, 8               # embSize, numHeads
    qS = kS = vS = 8           # qSize, kSize, vSize (per head)
    hidden = 64                # hiddenSize

    key = jax.random.PRNGKey(0)
    keys = jax.random.split(key, 12)

    def init(k, shape):
        return jax.random.normal(k, shape, jnp.float32) * 0.05

    # MHA #1 (self-attention) weights, [in, out] layout, bias=False
    wq1 = init(keys[0], (E, H * qS)); wk1 = init(keys[1], (E, H * kS))
    wv1 = init(keys[2], (E, H * vS)); wo1 = init(keys[3], (H * vS, E))
    # MHA #2 (enc-dec attention)
    wq2 = init(keys[4], (E, H * qS)); wk2 = init(keys[5], (E, H * kS))
    wv2 = init(keys[6], (E, H * vS)); wo2 = init(keys[7], (H * vS, E))
    # FeedForward
    w1 = init(keys[8], (E, hidden)); w2 = init(keys[9], (hidden, E))

    de_inputs = jax.random.normal(keys[10], (B, T, E), jnp.float32)
    en_outputs = jax.random.normal(keys[11], (B, S, E), jnp.float32)

    # selfMask: causal (upper triangle masked); enDeMask: pad last 2 encoder positions
    causal = jnp.triu(jnp.ones((T, T), jnp.float32), k=1)
    self_mask = jnp.broadcast_to(causal, (B, H, T, T))
    pad = (jnp.arange(S) >= 6).astype(jnp.float32)
    ende_mask = jnp.broadcast_to(pad[None, None, None, :], (B, H, T, S))

    out = decoder_layer(de_inputs, en_outputs, self_mask, ende_mask,
                        (wq1, wk1, wv1, wo1, wq2, wk2, wv2, wo2, w1, w2),
                        H, qS, kS, vS)
    jax.block_until_ready(out)
    assert out.shape == (B, T, E)
    assert bool(jnp.all(jnp.isfinite(out)))
    print("KERNEL_OK")
</pallas_src>

<mosaic_0001>
module attributes {stable_mosaic.version = 11 : i64} {
  func.func @decoder_layer_kernel(%arg0: i32, %arg1: i32, %arg2: memref<1x8x32xf32, #tpu.memory_space<vmem>>, %arg3: memref<1x8x32xf32, #tpu.memory_space<vmem>>, %arg4: memref<1x8x32xf32, #tpu.memory_space<vmem>>, %arg5: memref<1x8x8x8xf32, #tpu.memory_space<vmem>>, %arg6: memref<1x8x8x8xf32, #tpu.memory_space<vmem>>, %arg7: memref<8x32x8xbf16, #tpu.memory_space<vmem>>, %arg8: memref<8x32x8xbf16, #tpu.memory_space<vmem>>, %arg9: memref<8x32x8xbf16, #tpu.memory_space<vmem>>, %arg10: memref<8x8x32xbf16, #tpu.memory_space<vmem>>, %arg11: memref<8x32x8xbf16, #tpu.memory_space<vmem>>, %arg12: memref<8x32x8xbf16, #tpu.memory_space<vmem>>, %arg13: memref<8x32x8xbf16, #tpu.memory_space<vmem>>, %arg14: memref<8x8x32xbf16, #tpu.memory_space<vmem>>, %arg15: memref<32x64xbf16, #tpu.memory_space<vmem>>, %arg16: memref<64x32xbf16, #tpu.memory_space<vmem>>, %arg17: memref<1x8x32xf32, #tpu.memory_space<vmem>>) attributes {dimension_semantics = [#tpu.dimension_semantics<parallel>, #tpu.dimension_semantics<parallel>], iteration_bounds = array<i64: 2, 1>, scalar_prefetch = 0 : i64, scratch_operands = 0 : i64, tpu.core_type = #tpu.core_type<tc>, window_params = [{transform_indices = @transform_0, window_bounds = array<i64: 1, 8, 32>}, {transform_indices = @transform_1, window_bounds = array<i64: 1, 8, 32>}, {transform_indices = @transform_2, window_bounds = array<i64: 1, 8, 32>}, {transform_indices = @transform_3, window_bounds = array<i64: 1, 8, 8, 8>}, {transform_indices = @transform_4, window_bounds = array<i64: 1, 8, 8, 8>}, {pipeline_mode = #tpu.pipeline_mode<synchronous>, transform_indices = @transform_5, window_bounds = array<i64: 8, 32, 8>}, {pipeline_mode = #tpu.pipeline_mode<synchronous>, transform_indices = @transform_6, window_bounds = array<i64: 8, 32, 8>}, {pipeline_mode = #tpu.pipeline_mode<synchronous>, transform_indices = @transform_7, window_bounds = array<i64: 8, 32, 8>}, {pipeline_mode = #tpu.pipeline_mode<synchronous>, transform_indices = @transform_8, window_bounds = array<i64: 8, 8, 32>}, {pipeline_mode = #tpu.pipeline_mode<synchronous>, transform_indices = @transform_9, window_bounds = array<i64: 8, 32, 8>}, {pipeline_mode = #tpu.pipeline_mode<synchronous>, transform_indices = @transform_10, window_bounds = array<i64: 8, 32, 8>}, {pipeline_mode = #tpu.pipeline_mode<synchronous>, transform_indices = @transform_11, window_bounds = array<i64: 8, 32, 8>}, {pipeline_mode = #tpu.pipeline_mode<synchronous>, transform_indices = @transform_12, window_bounds = array<i64: 8, 8, 32>}, {pipeline_mode = #tpu.pipeline_mode<synchronous>, transform_indices = @transform_13, window_bounds = array<i64: 32, 64>}, {pipeline_mode = #tpu.pipeline_mode<synchronous>, transform_indices = @transform_14, window_bounds = array<i64: 64, 32>}, {transform_indices = @transform_15, window_bounds = array<i64: 1, 8, 32>}]} {
    %c0 = arith.constant 0 : index
    %c0_0 = arith.constant 0 : index
    %c0_1 = arith.constant 0 : index
    %0 = vector.load %arg2[%c0, %c0_0, %c0_1] : memref<1x8x32xf32, #tpu.memory_space<vmem>>, vector<1x8x32xf32>
    %1 = vector.shape_cast %0 : vector<1x8x32xf32> to vector<8x32xf32>
    %c0_2 = arith.constant 0 : index
    %c0_3 = arith.constant 0 : index
    %c0_4 = arith.constant 0 : index
    %2 = vector.load %arg3[%c0_2, %c0_3, %c0_4] : memref<1x8x32xf32, #tpu.memory_space<vmem>>, vector<1x8x32xf32>
    %3 = vector.shape_cast %2 : vector<1x8x32xf32> to vector<8x32xf32>
    %c0_5 = arith.constant 0 : index
    %c0_6 = arith.constant 0 : index
    %c0_7 = arith.constant 0 : index
    %4 = vector.load %arg4[%c0_5, %c0_6, %c0_7] : memref<1x8x32xf32, #tpu.memory_space<vmem>>, vector<1x8x32xf32>
    %5 = vector.shape_cast %4 : vector<1x8x32xf32> to vector<8x32xf32>
    %c0_8 = arith.constant 0 : index
    %c0_9 = arith.constant 0 : index
    %c0_10 = arith.constant 0 : index
    %c0_11 = arith.constant 0 : index
    %6 = vector.load %arg5[%c0_8, %c0_9, %c0_10, %c0_11] : memref<1x8x8x8xf32, #tpu.memory_space<vmem>>, vector<1x8x8x8xf32>
    %7 = vector.shape_cast %6 : vector<1x8x8x8xf32> to vector<8x8x8xf32>
    %c0_12 = arith.constant 0 : index
    %c0_13 = arith.constant 0 : index
    %c0_14 = arith.constant 0 : index
    %c0_15 = arith.constant 0 : index
    %8 = vector.load %arg6[%c0_12, %c0_13, %c0_14, %c0_15] : memref<1x8x8x8xf32, #tpu.memory_space<vmem>>, vector<1x8x8x8xf32>
    %9 = vector.shape_cast %8 : vector<1x8x8x8xf32> to vector<8x8x8xf32>
    %c0_16 = arith.constant 0 : index
    %c0_17 = arith.constant 0 : index
    %c0_18 = arith.constant 0 : index
    %10 = vector.load %arg7[%c0_16, %c0_17, %c0_18] : memref<8x32x8xbf16, #tpu.memory_space<vmem>>, vector<8x32x8xbf16>
    %c0_19 = arith.constant 0 : index
    %c0_20 = arith.constant 0 : index
    %c0_21 = arith.constant 0 : index
    %11 = vector.load %arg8[%c0_19, %c0_20, %c0_21] : memref<8x32x8xbf16, #tpu.memory_space<vmem>>, vector<8x32x8xbf16>
    %c0_22 = arith.constant 0 : index
    %c0_23 = arith.constant 0 : index
    %c0_24 = arith.constant 0 : index
    %12 = vector.load %arg9[%c0_22, %c0_23, %c0_24] : memref<8x32x8xbf16, #tpu.memory_space<vmem>>, vector<8x32x8xbf16>
    %c0_25 = arith.constant 0 : index
    %c0_26 = arith.constant 0 : index
    %c0_27 = arith.constant 0 : index
    %13 = vector.load %arg10[%c0_25, %c0_26, %c0_27] : memref<8x8x32xbf16, #tpu.memory_space<vmem>>, vector<8x8x32xbf16>
    %14 = arith.truncf %1 : vector<8x32xf32> to vector<8x32xbf16>
    %15 = vector.shape_cast %14 : vector<8x32xbf16> to vector<1x8x32xbf16>
    %16 = vector.shape_cast %15 : vector<1x8x32xbf16> to vector<1x8x32xbf16>
    %17 = vector.broadcast %16 : vector<1x8x32xbf16> to vector<8x8x32xbf16>
    %18 = arith.truncf %3 : vector<8x32xf32> to vector<8x32xbf16>
    %19 = vector.shape_cast %18 : vector<8x32xbf16> to vector<1x8x32xbf16>
    %20 = vector.shape_cast %19 : vector<1x8x32xbf16> to vector<1x8x32xbf16>
    %21 = vector.broadcast %20 : vector<1x8x32xbf16> to vector<8x8x32xbf16>
    "tpu.trace_start"() <{level = 10 : i32, message = "hqe,hed->hqd"}> : () -> ()
    %cst = arith.constant dense<0.000000e+00> : vector<8x8x8xf32>
    %22 = tpu.matmul %17, %10, %cst {dimension_numbers = #tpu.dot_dimension_numbers<[2], [1], [1], [2], [0, 0, 0, 1, 1, 2], [0], [0]>} : vector<8x8x32xbf16>, vector<8x32x8xbf16>, vector<8x8x8xf32> -> vector<8x8x8xf32>
    "tpu.trace_stop"() : () -> ()
    "tpu.trace_start"() <{level = 10 : i32, message = "hke,hed->hkd"}> : () -> ()
    %cst_28 = arith.constant dense<0.000000e+00> : vector<8x8x8xf32>
    %23 = tpu.matmul %21, %11, %cst_28 {dimension_numbers = #tpu.dot_dimension_numbers<[2], [1], [1], [2], [0, 0, 0, 1, 1, 2], [0], [0]>} : vector<8x8x32xbf16>, vector<8x32x8xbf16>, vector<8x8x8xf32> -> vector<8x8x8xf32>
    %cst_29 = arith.constant dense<0.000000e+00> : vector<8x8x8xf32>
    %24 = tpu.matmul %21, %12, %cst_29 {dimension_numbers = #tpu.dot_dimension_numbers<[2], [1], [1], [2], [0, 0, 0, 1, 1, 2], [0], [0]>} : vector<8x8x32xbf16>, vector<8x32x8xbf16>, vector<8x8x8xf32> -> vector<8x8x8xf32>
    "tpu.trace_stop"() : () -> ()
    %25 = arith.truncf %22 : vector<8x8x8xf32> to vector<8x8x8xbf16>
    %26 = arith.truncf %23 : vector<8x8x8xf32> to vector<8x8x8xbf16>
    "tpu.trace_start"() <{level = 10 : i32, message = "hqd,hkd->hqk"}> : () -> ()
    %cst_30 = arith.constant dense<0.000000e+00> : vector<8x8x8xf32>
    %27 = tpu.matmul %25, %26, %cst_30 {dimension_numbers = #tpu.dot_dimension_numbers<[2], [2], [1], [1], [0, 0, 0, 1, 1, 1], [0], [0]>} : vector<8x8x8xbf16>, vector<8x8x8xbf16>, vector<8x8x8xf32> -> vector<8x8x8xf32>
    "tpu.trace_stop"() : () -> ()
    %cst_31 = arith.constant 0.353553385 : f32
    %28 = vector.broadcast %cst_31 : f32 to vector<8x8x8xf32>
    %29 = arith.mulf %27, %28 : vector<8x8x8xf32>
    %cst_32 = arith.constant 0.000000e+00 : f32
    %30 = vector.broadcast %cst_32 : f32 to vector<8x8x8xf32>
    %31 = arith.cmpf one, %7, %30 : vector<8x8x8xf32>
    %cst_33 = arith.constant -1.000000e+09 : f32
    %32 = vector.broadcast %cst_33 : f32 to vector<8x8x8xf32>
    %33 = arith.select %31, %32, %29 : vector<8x8x8xi1>, vector<8x8x8xf32>
    %cst_34 = arith.constant dense<0xFF800000> : vector<8x8xf32>
    %34 = vector.multi_reduction <maximumf>, %33, %cst_34 [2] : vector<8x8x8xf32> to vector<8x8xf32>
    %35 = vector.shape_cast %34 : vector<8x8xf32> to vector<8x8x1xf32>
    %36 = vector.broadcast %35 : vector<8x8x1xf32> to vector<8x8x8xf32>
    %37 = arith.subf %33, %36 : vector<8x8x8xf32>
    %38 = math.exp %37 : vector<8x8x8xf32>
    %cst_35 = arith.constant dense<0.000000e+00> : vector<8x8xf32>
    %39 = vector.multi_reduction <add>, %38, %cst_35 [2] : vector<8x8x8xf32> to vector<8x8xf32>
    %40 = vector.shape_cast %39 : vector<8x8xf32> to vector<8x8x1xf32>
    %41 = tpu.reciprocal %40 {approx = true} : vector<8x8x1xf32> -> vector<8x8x1xf32>
    %42 = vector.broadcast %41 : vector<8x8x1xf32> to vector<8x8x8xf32>
    %43 = arith.mulf %38, %42 : vector<8x8x8xf32>
    %44 = arith.truncf %43 : vector<8x8x8xf32> to vector<8x8x8xbf16>
    %45 = arith.truncf %24 : vector<8x8x8xf32> to vector<8x8x8xbf16>
    "tpu.trace_start"() <{level = 10 : i32, message = "hqk,hkd->hqd"}> : () -> ()
    %cst_36 = arith.constant dense<0.000000e+00> : vector<8x8x8xf32>
    %46 = tpu.matmul %44, %45, %cst_36 {dimension_numbers = #tpu.dot_dimension_numbers<[2], [1], [1], [2], [0, 0, 0, 1, 1, 2], [0], [0]>} : vector<8x8x8xbf16>, vector<8x8x8xbf16>, vector<8x8x8xf32> -> vector<8x8x8xf32>
    "tpu.trace_stop"() : () -> ()
    %47 = arith.truncf %46 : vector<8x8x8xf32> to vector<8x8x8xbf16>
    "tpu.trace_start"() <{level = 10 : i32, message = "hqd,hde->hqe"}> : () -> ()
    %cst_37 = arith.constant dense<0.000000e+00> : vector<8x8x32xf32>
    %48 = tpu.matmul %47, %13, %cst_37 {dimension_numbers = #tpu.dot_dimension_numbers<[2], [1], [1], [2], [0, 0, 0, 1, 1, 2], [0], [0]>} : vector<8x8x8xbf16>, vector<8x8x32xbf16>, vector<8x8x32xf32> -> vector<8x8x32xf32>
    "tpu.trace_stop"() : () -> ()
    %cst_38 = arith.constant dense<0.000000e+00> : vector<8x32xf32>
    %49 = vector.multi_reduction <add>, %48, %cst_38 [0] : vector<8x8x32xf32> to vector<8x32xf32>
    %50 = arith.addf %1, %49 : vector<8x32xf32>
    %cst_39 = arith.constant dense<0.000000e+00> : vector<8xf32>
    %51 = vector.multi_reduction <add>, %50, %cst_39 [1] : vector<8x32xf32> to vector<8xf32>
    %52 = vector.shape_cast %51 : vector<8xf32> to vector<8x1xf32>
    %cst_40 = arith.constant 3.200000e+01 : f32
    %53 = vector.broadcast %cst_40 : f32 to vector<8x1xf32>
    %54 = arith.divf %52, %53 : vector<8x1xf32>
    %55 = vector.broadcast %54 : vector<8x1xf32> to vector<8x32xf32>
    %56 = arith.subf %50, %55 : vector<8x32xf32>
    %57 = arith.mulf %56, %56 : vector<8x32xf32>
    %cst_41 = arith.constant dense<0.000000e+00> : vector<8xf32>
    %58 = vector.multi_reduction <add>, %57, %cst_41 [1] : vector<8x32xf32> to vector<8xf32>
    %59 = vector.shape_cast %58 : vector<8xf32> to vector<8x1xf32>
    %cst_42 = arith.constant 3.200000e+01 : f32
    %60 = vector.broadcast %cst_42 : f32 to vector<8x1xf32>
    %61 = arith.divf %59, %60 : vector<8x1xf32>
    %62 = vector.broadcast %54 : vector<8x1xf32> to vector<8x32xf32>
    %63 = arith.subf %50, %62 : vector<8x32xf32>
    %cst_43 = arith.constant 9.99999974E-6 : f32
    %64 = vector.broadcast %cst_43 : f32 to vector<8x1xf32>
    %65 = arith.addf %61, %64 : vector<8x1xf32>
    %66 = math.rsqrt %65 : vector<8x1xf32>
    %67 = vector.broadcast %66 : vector<8x1xf32> to vector<8x32xf32>
    %68 = arith.mulf %63, %67 : vector<8x32xf32>
    %c0_44 = arith.constant 0 : index
    %c0_45 = arith.constant 0 : index
    %c0_46 = arith.constant 0 : index
    %69 = vector.load %arg11[%c0_44, %c0_45, %c0_46] : memref<8x32x8xbf16, #tpu.memory_space<vmem>>, vector<8x32x8xbf16>
    %c0_47 = arith.constant 0 : index
    %c0_48 = arith.constant 0 : index
    %c0_49 = arith.constant 0 : index
    %70 = vector.load %arg12[%c0_47, %c0_48, %c0_49] : memref<8x32x8xbf16, #tpu.memory_space<vmem>>, vector<8x32x8xbf16>
    %c0_50 = arith.constant 0 : index
    %c0_51 = arith.constant 0 : index
    %c0_52 = arith.constant 0 : index
    %71 = vector.load %arg13[%c0_50, %c0_51, %c0_52] : memref<8x32x8xbf16, #tpu.memory_space<vmem>>, vector<8x32x8xbf16>
    %c0_53 = arith.constant 0 : index
    %c0_54 = arith.constant 0 : index
    %c0_55 = arith.constant 0 : index
    %72 = vector.load %arg14[%c0_53, %c0_54, %c0_55] : memref<8x8x32xbf16, #tpu.memory_space<vmem>>, vector<8x8x32xbf16>
    %73 = arith.truncf %68 : vector<8x32xf32> to vector<8x32xbf16>
    %74 = vector.shape_cast %73 : vector<8x32xbf16> to vector<1x8x32xbf16>
    %75 = vector.shape_cast %74 : vector<1x8x32xbf16> to vector<1x8x32xbf16>
    %76 = vector.broadcast %75 : vector<1x8x32xbf16> to vector<8x8x32xbf16>
    %77 = arith.truncf %5 : vector<8x32xf32> to vector<8x32xbf16>
    %78 = vector.shape_cast %77 : vector<8x32xbf16> to vector<1x8x32xbf16>
    %79 = vector.shape_cast %78 : vector<1x8x32xbf16> to vector<1x8x32xbf16>
    %80 = vector.broadcast %79 : vector<1x8x32xbf16> to vector<8x8x32xbf16>
    "tpu.trace_start"() <{level = 10 : i32, message = "hqe,hed->hqd"}> : () -> ()
    %cst_56 = arith.constant dense<0.000000e+00> : vector<8x8x8xf32>
    %81 = tpu.matmul %76, %69, %cst_56 {dimension_numbers = #tpu.dot_dimension_numbers<[2], [1], [1], [2], [0, 0, 0, 1, 1, 2], [0], [0]>} : vector<8x8x32xbf16>, vector<8x32x8xbf16>, vector<8x8x8xf32> -> vector<8x8x8xf32>
    "tpu.trace_stop"() : () -> ()
    "tpu.trace_start"() <{level = 10 : i32, message = "hke,hed->hkd"}> : () -> ()
    %cst_57 = arith.constant dense<0.000000e+00> : vector<8x8x8xf32>
    %82 = tpu.matmul %80, %70, %cst_57 {dimension_numbers = #tpu.dot_dimension_numbers<[2], [1], [1], [2], [0, 0, 0, 1, 1, 2], [0], [0]>} : vector<8x8x32xbf16>, vector<8x32x8xbf16>, vector<8x8x8xf32> -> vector<8x8x8xf32>
    %cst_58 = arith.constant dense<0.000000e+00> : vector<8x8x8xf32>
    %83 = tpu.matmul %80, %71, %cst_58 {dimension_numbers = #tpu.dot_dimension_numbers<[2], [1], [1], [2], [0, 0, 0, 1, 1, 2], [0], [0]>} : vector<8x8x32xbf16>, vector<8x32x8xbf16>, vector<8x8x8xf32> -> vector<8x8x8xf32>
    "tpu.trace_stop"() : () -> ()
    %84 = arith.truncf %81 : vector<8x8x8xf32> to vector<8x8x8xbf16>
    %85 = arith.truncf %82 : vector<8x8x8xf32> to vector<8x8x8xbf16>
    "tpu.trace_start"() <{level = 10 : i32, message = "hqd,hkd->hqk"}> : () -> ()
    %cst_59 = arith.constant dense<0.000000e+00> : vector<8x8x8xf32>
    %86 = tpu.matmul %84, %85, %cst_59 {dimension_numbers = #tpu.dot_dimension_numbers<[2], [2], [1], [1], [0, 0, 0, 1, 1, 1], [0], [0]>} : vector<8x8x8xbf16>, vector<8x8x8xbf16>, vector<8x8x8xf32> -> vector<8x8x8xf32>
    "tpu.trace_stop"() : () -> ()
    %cst_60 = arith.constant 0.353553385 : f32
    %87 = vector.broadcast %cst_60 : f32 to vector<8x8x8xf32>
    %88 = arith.mulf %86, %87 : vector<8x8x8xf32>
    %cst_61 = arith.constant 0.000000e+00 : f32
    %89 = vector.broadcast %cst_61 : f32 to vector<8x8x8xf32>
    %90 = arith.cmpf one, %9, %89 : vector<8x8x8xf32>
    %cst_62 = arith.constant -1.000000e+09 : f32
    %91 = vector.broadcast %cst_62 : f32 to vector<8x8x8xf32>
    %92 = arith.select %90, %91, %88 : vector<8x8x8xi1>, vector<8x8x8xf32>
    %cst_63 = arith.constant dense<0xFF800000> : vector<8x8xf32>
    %93 = vector.multi_reduction <maximumf>, %92, %cst_63 [2] : vector<8x8x8xf32> to vector<8x8xf32>
    %94 = vector.shape_cast %93 : vector<8x8xf32> to vector<8x8x1xf32>
    %95 = vector.broadcast %94 : vector<8x8x1xf32> to vector<8x8x8xf32>
    %96 = arith.subf %92, %95 : vector<8x8x8xf32>
    %97 = math.exp %96 : vector<8x8x8xf32>
    %cst_64 = arith.constant dense<0.000000e+00> : vector<8x8xf32>
    %98 = vector.multi_reduction <add>, %97, %cst_64 [2] : vector<8x8x8xf32> to vector<8x8xf32>
    %99 = vector.shape_cast %98 : vector<8x8xf32> to vector<8x8x1xf32>
    %100 = tpu.reciprocal %99 {approx = true} : vector<8x8x1xf32> -> vector<8x8x1xf32>
    %101 = vector.broadcast %100 : vector<8x8x1xf32> to vector<8x8x8xf32>
    %102 = arith.mulf %97, %101 : vector<8x8x8xf32>
    %103 = arith.truncf %102 : vector<8x8x8xf32> to vector<8x8x8xbf16>
    %104 = arith.truncf %83 : vector<8x8x8xf32> to vector<8x8x8xbf16>
    "tpu.trace_start"() <{level = 10 : i32, message = "hqk,hkd->hqd"}> : () -> ()
    %cst_65 = arith.constant dense<0.000000e+00> : vector<8x8x8xf32>
    %105 = tpu.matmul %103, %104, %cst_65 {dimension_numbers = #tpu.dot_dimension_numbers<[2], [1], [1], [2], [0, 0, 0, 1, 1, 2], [0], [0]>} : vector<8x8x8xbf16>, vector<8x8x8xbf16>, vector<8x8x8xf32> -> vector<8x8x8xf32>
    "tpu.trace_stop"() : () -> ()
    %106 = arith.truncf %105 : vector<8x8x8xf32> to vector<8x8x8xbf16>
    "tpu.trace_start"() <{level = 10 : i32, message = "hqd,hde->hqe"}> : () -> ()
    %cst_66 = arith.constant dense<0.000000e+00> : vector<8x8x32xf32>
    %107 = tpu.matmul %106, %72, %cst_66 {dimension_numbers = #tpu.dot_dimension_numbers<[2], [1], [1], [2], [0, 0, 0, 1, 1, 2], [0], [0]>} : vector<8x8x8xbf16>, vector<8x8x32xbf16>, vector<8x8x32xf32> -> vector<8x8x32xf32>
    "tpu.trace_stop"() : () -> ()
    %cst_67 = arith.constant dense<0.000000e+00> : vector<8x32xf32>
    %108 = vector.multi_reduction <add>, %107, %cst_67 [0] : vector<8x8x32xf32> to vector<8x32xf32>
    %109 = arith.addf %68, %108 : vector<8x32xf32>
    %cst_68 = arith.constant dense<0.000000e+00> : vector<8xf32>
    %110 = vector.multi_reduction <add>, %109, %cst_68 [1] : vector<8x32xf32> to vector<8xf32>
    %111 = vector.shape_cast %110 : vector<8xf32> to vector<8x1xf32>
    %cst_69 = arith.constant 3.200000e+01 : f32
    %112 = vector.broadcast %cst_69 : f32 to vector<8x1xf32>
    %113 = arith.divf %111, %112 : vector<8x1xf32>
    %114 = vector.broadcast %113 : vector<8x1xf32> to vector<8x32xf32>
    %115 = arith.subf %109, %114 : vector<8x32xf32>
    %116 = arith.mulf %115, %115 : vector<8x32xf32>
    %cst_70 = arith.constant dense<0.000000e+00> : vector<8xf32>
    %117 = vector.multi_reduction <add>, %116, %cst_70 [1] : vector<8x32xf32> to vector<8xf32>
    %118 = vector.shape_cast %117 : vector<8xf32> to vector<8x1xf32>
    %cst_71 = arith.constant 3.200000e+01 : f32
    %119 = vector.broadcast %cst_71 : f32 to vector<8x1xf32>
    %120 = arith.divf %118, %119 : vector<8x1xf32>
    %121 = vector.broadcast %113 : vector<8x1xf32> to vector<8x32xf32>
    %122 = arith.subf %109, %121 : vector<8x32xf32>
    %cst_72 = arith.constant 9.99999974E-6 : f32
    %123 = vector.broadcast %cst_72 : f32 to vector<8x1xf32>
    %124 = arith.addf %120, %123 : vector<8x1xf32>
    %125 = math.rsqrt %124 : vector<8x1xf32>
    %126 = vector.broadcast %125 : vector<8x1xf32> to vector<8x32xf32>
    %127 = arith.mulf %122, %126 : vector<8x32xf32>
    %128 = arith.truncf %127 : vector<8x32xf32> to vector<8x32xbf16>
    %c0_73 = arith.constant 0 : index
    %c0_74 = arith.constant 0 : index
    %129 = vector.load %arg15[%c0_73, %c0_74] : memref<32x64xbf16, #tpu.memory_space<vmem>>, vector<32x64xbf16>
    %cst_75 = arith.constant dense<0.000000e+00> : vector<8x64xf32>
    %130 = tpu.matmul %128, %129, %cst_75 {dimension_numbers = #tpu.dot_dimension_numbers<[1], [0], [0], [1], [0, 0, 1, 1], [], []>} : vector<8x32xbf16>, vector<32x64xbf16>, vector<8x64xf32> -> vector<8x64xf32>
    %cst_76 = arith.constant 0.000000e+00 : f32
    %131 = vector.broadcast %cst_76 : f32 to vector<8x64xf32>
    %132 = arith.maximumf %130, %131 : vector<8x64xf32>
    %133 = arith.truncf %132 : vector<8x64xf32> to vector<8x64xbf16>
    %c0_77 = arith.constant 0 : index
    %c0_78 = arith.constant 0 : index
    %134 = vector.load %arg16[%c0_77, %c0_78] : memref<64x32xbf16, #tpu.memory_space<vmem>>, vector<64x32xbf16>
    %cst_79 = arith.constant dense<0.000000e+00> : vector<8x32xf32>
    %135 = tpu.matmul %133, %134, %cst_79 {dimension_numbers = #tpu.dot_dimension_numbers<[1], [0], [0], [1], [0, 0, 1, 1], [], []>} : vector<8x64xbf16>, vector<64x32xbf16>, vector<8x32xf32> -> vector<8x32xf32>
    %136 = arith.addf %127, %135 : vector<8x32xf32>
    %cst_80 = arith.constant dense<0.000000e+00> : vector<8xf32>
    %137 = vector.multi_reduction <add>, %136, %cst_80 [1] : vector<8x32xf32> to vector<8xf32>
    %138 = vector.shape_cast %137 : vector<8xf32> to vector<8x1xf32>
    %cst_81 = arith.constant 3.200000e+01 : f32
    %139 = vector.broadcast %cst_81 : f32 to vector<8x1xf32>
    %140 = arith.divf %138, %139 : vector<8x1xf32>
    %141 = vector.broadcast %140 : vector<8x1xf32> to vector<8x32xf32>
    %142 = arith.subf %136, %141 : vector<8x32xf32>
    %143 = arith.mulf %142, %142 : vector<8x32xf32>
    %cst_82 = arith.constant dense<0.000000e+00> : vector<8xf32>
    %144 = vector.multi_reduction <add>, %143, %cst_82 [1] : vector<8x32xf32> to vector<8xf32>
    %145 = vector.shape_cast %144 : vector<8xf32> to vector<8x1xf32>
    %cst_83 = arith.constant 3.200000e+01 : f32
    %146 = vector.broadcast %cst_83 : f32 to vector<8x1xf32>
    %147 = arith.divf %145, %146 : vector<8x1xf32>
    %148 = vector.broadcast %140 : vector<8x1xf32> to vector<8x32xf32>
    %149 = arith.subf %136, %148 : vector<8x32xf32>
    %cst_84 = arith.constant 9.99999974E-6 : f32
    %150 = vector.broadcast %cst_84 : f32 to vector<8x1xf32>
    %151 = arith.addf %147, %150 : vector<8x1xf32>
    %152 = math.rsqrt %151 : vector<8x1xf32>
    %153 = vector.broadcast %152 : vector<8x1xf32> to vector<8x32xf32>
    %154 = arith.mulf %149, %153 : vector<8x32xf32>
    %c0_85 = arith.constant 0 : index
    %c0_86 = arith.constant 0 : index
    %c0_87 = arith.constant 0 : index
    %155 = vector.load %arg17[%c0_85, %c0_86, %c0_87] : memref<1x8x32xf32, #tpu.memory_space<vmem>>, vector<1x8x32xf32>
    %156 = vector.shape_cast %155 : vector<1x8x32xf32> to vector<8x32xf32>
    %157 = vector.shape_cast %154 : vector<8x32xf32> to vector<1x8x32xf32>
    tpu.vector_store %arg17[%c0_85, %c0_86, %c0_87], %157 {strides = array<i32>} : memref<1x8x32xf32, #tpu.memory_space<vmem>>, vector<1x8x32xf32>,
    return
  }
  func.func @transform_0(%arg0: i32, %arg1: i32) -> (i32, i32, i32) {
    %c0_i32 = arith.constant 0 : i32
    %c0_i32_0 = arith.constant 0 : i32
    return %arg0, %arg1, %c0_i32 : i32, i32, i32
  }
  func.func @transform_1(%arg0: i32, %arg1: i32) -> (i32, i32, i32) {
    %c0_i32 = arith.constant 0 : i32
    %c0_i32_0 = arith.constant 0 : i32
    %c0_i32_1 = arith.constant 0 : i32
    return %arg0, %c0_i32, %c0_i32_0 : i32, i32, i32
  }
  func.func @transform_2(%arg0: i32, %arg1: i32) -> (i32, i32, i32) {
    %c0_i32 = arith.constant 0 : i32
    %c0_i32_0 = arith.constant 0 : i32
    %c0_i32_1 = arith.constant 0 : i32
    return %arg0, %c0_i32, %c0_i32_0 : i32, i32, i32
  }
  func.func @transform_3(%arg0: i32, %arg1: i32) -> (i32, i32, i32, i32) {
    %c0_i32 = arith.constant 0 : i32
    %c0_i32_0 = arith.constant 0 : i32
    %c0_i32_1 = arith.constant 0 : i32
    return %arg0, %c0_i32, %arg1, %c0_i32_0 : i32, i32, i32, i32
  }
  func.func @transform_4(%arg0: i32, %arg1: i32) -> (i32, i32, i32, i32) {
    %c0_i32 = arith.constant 0 : i32
    %c0_i32_0 = arith.constant 0 : i32
    %c0_i32_1 = arith.constant 0 : i32
    return %arg0, %c0_i32, %arg1, %c0_i32_0 : i32, i32, i32, i32
  }
  func.func @transform_5(%arg0: i32, %arg1: i32) -> (i32, i32, i32) {
    %c0_i32 = arith.constant 0 : i32
    %c0_i32_0 = arith.constant 0 : i32
    %c0_i32_1 = arith.constant 0 : i32
    %c0_i32_2 = arith.constant 0 : i32
    return %c0_i32, %c0_i32_0, %c0_i32_1 : i32, i32, i32
  }
  func.func @transform_6(%arg0: i32, %arg1: i32) -> (i32, i32, i32) {
    %c0_i32 = arith.constant 0 : i32
    %c0_i32_0 = arith.constant 0 : i32
    %c0_i32_1 = arith.constant 0 : i32
    %c0_i32_2 = arith.constant 0 : i32
    return %c0_i32, %c0_i32_0, %c0_i32_1 : i32, i32, i32
  }
  func.func @transform_7(%arg0: i32, %arg1: i32) -> (i32, i32, i32) {
    %c0_i32 = arith.constant 0 : i32
    %c0_i32_0 = arith.constant 0 : i32
    %c0_i32_1 = arith.constant 0 : i32
    %c0_i32_2 = arith.constant 0 : i32
    return %c0_i32, %c0_i32_0, %c0_i32_1 : i32, i32, i32
  }
  func.func @transform_8(%arg0: i32, %arg1: i32) -> (i32, i32, i32) {
    %c0_i32 = arith.constant 0 : i32
    %c0_i32_0 = arith.constant 0 : i32
    %c0_i32_1 = arith.constant 0 : i32
    %c0_i32_2 = arith.constant 0 : i32
    return %c0_i32, %c0_i32_0, %c0_i32_1 : i32, i32, i32
  }
  func.func @transform_9(%arg0: i32, %arg1: i32) -> (i32, i32, i32) {
    %c0_i32 = arith.constant 0 : i32
    %c0_i32_0 = arith.constant 0 : i32
    %c0_i32_1 = arith.constant 0 : i32
    %c0_i32_2 = arith.constant 0 : i32
    return %c0_i32, %c0_i32_0, %c0_i32_1 : i32, i32, i32
  }
  func.func @transform_10(%arg0: i32, %arg1: i32) -> (i32, i32, i32) {
    %c0_i32 = arith.constant 0 : i32
    %c0_i32_0 = arith.constant 0 : i32
    %c0_i32_1 = arith.constant 0 : i32
    %c0_i32_2 = arith.constant 0 : i32
    return %c0_i32, %c0_i32_0, %c0_i32_1 : i32, i32, i32
  }
  func.func @transform_11(%arg0: i32, %arg1: i32) -> (i32, i32, i32) {
    %c0_i32 = arith.constant 0 : i32
    %c0_i32_0 = arith.constant 0 : i32
    %c0_i32_1 = arith.constant 0 : i32
    %c0_i32_2 = arith.constant 0 : i32
    return %c0_i32, %c0_i32_0, %c0_i32_1 : i32, i32, i32
  }
  func.func @transform_12(%arg0: i32, %arg1: i32) -> (i32, i32, i32) {
    %c0_i32 = arith.constant 0 : i32
    %c0_i32_0 = arith.constant 0 : i32
    %c0_i32_1 = arith.constant 0 : i32
    %c0_i32_2 = arith.constant 0 : i32
    return %c0_i32, %c0_i32_0, %c0_i32_1 : i32, i32, i32
  }
  func.func @transform_13(%arg0: i32, %arg1: i32) -> (i32, i32) {
    %c0_i32 = arith.constant 0 : i32
    %c0_i32_0 = arith.constant 0 : i32
    %c0_i32_1 = arith.constant 0 : i32
    return %c0_i32, %c0_i32_0 : i32, i32
  }
  func.func @transform_14(%arg0: i32, %arg1: i32) -> (i32, i32) {
    %c0_i32 = arith.constant 0 : i32
    %c0_i32_0 = arith.constant 0 : i32
    %c0_i32_1 = arith.constant 0 : i32
    return %c0_i32, %c0_i32_0 : i32, i32
  }
  func.func @transform_15(%arg0: i32, %arg1: i32) -> (i32, i32, i32) {
    %c0_i32 = arith.constant 0 : i32
    %c0_i32_0 = arith.constant 0 : i32
    return %arg0, %arg1, %c0_i32 : i32, i32, i32
  }
}

</mosaic_0001>

<llo_original>
// kernel: tpu_custom_call.1
$region0: #{tpu_custom_call.1}
  #allocation0 [shape = 'u32[]', space=smem, size = 0x4, offset = 0x4, fixed_abs, tag = 'smem constant byte address 0x4 - core index']
  #allocation1 [shape = 'u32[144,128]{1,0:T(1,128)}', space=vmem, size = 0x12000, scoped, tag = 'internal scratch']
  %s0 = inlined_call_operand.vmem [shape: f32[2,8,32], index: 0, kind: input, shape index: {}]
  %s1 = inlined_call_operand.vmem [shape: f32[2,8,32], index: 1, kind: input, shape index: {}]
  %s2 = inlined_call_operand.vmem [shape: f32[2,8,32], index: 2, kind: input, shape index: {}]
  %s3 = inlined_call_operand.vmem [shape: f32[2,8,8,8], index: 3, kind: input, shape index: {}]
  %s4 = inlined_call_operand.vmem [shape: f32[2,8,8,8], index: 4, kind: input, shape index: {}]
  %s5 = inlined_call_operand.vmem [shape: bf16[8,32,8], index: 5, kind: input, shape index: {}]
  %s6 = inlined_call_operand.vmem [shape: bf16[8,32,8], index: 6, kind: input, shape index: {}]
  %s7 = inlined_call_operand.vmem [shape: bf16[8,32,8], index: 7, kind: input, shape index: {}]
  %s8 = inlined_call_operand.vmem [shape: bf16[8,8,32], index: 8, kind: input, shape index: {}]
  %s9 = inlined_call_operand.vmem [shape: bf16[8,32,8], index: 9, kind: input, shape index: {}]
  %s10 = inlined_call_operand.vmem [shape: bf16[8,32,8], index: 10, kind: input, shape index: {}]
  %s11 = inlined_call_operand.vmem [shape: bf16[8,32,8], index: 11, kind: input, shape index: {}]
  %s12 = inlined_call_operand.vmem [shape: bf16[8,8,32], index: 12, kind: input, shape index: {}]
  %s13 = inlined_call_operand.vmem [shape: bf16[32,64], index: 13, kind: input, shape index: {}]
  %s14 = inlined_call_operand.vmem [shape: bf16[64,32], index: 14, kind: input, shape index: {}]
  %s15 = inlined_call_operand.hbm [shape: f32[2,8,32], index: 15, kind: output, shape index: {}]
  %s16 = sld [smem:[#allocation0]]
  $region93: #{tpu_custom_call.1} parent=0
    _
  %s18 = ssub.s32 1, %s16
  %s19 = scalar_select 0, %s18, %s16
  $region1: #{tpu_custom_call.1} parent=0
    #allocation2 [shape = 'u8[8192]{0}', space=vmem, size = 0x2000, scoped, tag = 'output window, operand 0']
    #allocation3 [shape = 's32[2]{0}', space=sflag, size = 0x8, scoped, tag = 'scoped memory for tpu_custom_call.1']
    %20 = vsyncpa [#allocation3], 0
    %s21 = scalar_lea.sflag [#allocation3], 1
    %22 = vsyncpa %s21, 0
    loop: start=0, step=1, limit=4
    $region2: #{tpu_custom_call.1} parent=1 // loop_pre_header
      _
    $region3: #{tpu_custom_call.1} parent=1 // loop_header
      %s24 = sphi 0, %s28
      %p25 = scmp.ge.s32.totalorder %s24, 4
      %s31 = sphi 0, %s43
      %s32 = sphi 0, %s39
      %s33 = sphi 0, %s31
      %s34 = sphi 0, %s32
      %s35 = sphi 0, %s33
      %s36 = sphi 0, %s34
      %s48 = sphi 0, %s50
      %s51 = sphi 0, %s48
      %s52 = sphi 0, %s51
      %s68 = sphi 0, %s52
      %s74 = sphi 0, %s76
      %s77 = sphi 0, %s74
      %s78 = sphi 0, %s77
      %s94 = sphi 0, %s78
      %s100 = sphi 0, %s102
      %s103 = sphi 0, %s100
      %s104 = sphi 0, %s103
      %s120 = sphi 0, %s104
      %s128 = sphi 0, %s130
      %s131 = sphi 0, %s128
      %s132 = sphi 0, %s131
      %s148 = sphi 0, %s132
      %s156 = sphi 0, %s158
      %s159 = sphi 0, %s156
      %s160 = sphi 0, %s159
      %s176 = sphi 0, %s160
      %s180 = sphi 0, %s180
      %s182 = sphi 0, %s180
      %s183 = sphi 0, %s182
      %s197 = sphi 0, %s183
      %s201 = sphi 0, %s201
      %s203 = sphi 0, %s201
      %s204 = sphi 0, %s203
      %s218 = sphi 0, %s204
      %s222 = sphi 0, %s222
      %s224 = sphi 0, %s222
      %s225 = sphi 0, %s224
      %s239 = sphi 0, %s225
      %s243 = sphi 0, %s243
      %s245 = sphi 0, %s243
      %s246 = sphi 0, %s245
      %s260 = sphi 0, %s246
      %s264 = sphi 0, %s264
      %s266 = sphi 0, %s264
      %s267 = sphi 0, %s266
      %s281 = sphi 0, %s267
      %s285 = sphi 0, %s285
      %s287 = sphi 0, %s285
      %s288 = sphi 0, %s287
      %s302 = sphi 0, %s288
      %s306 = sphi 0, %s306
      %s308 = sphi 0, %s306
      %s309 = sphi 0, %s308
      %s323 = sphi 0, %s309
      %s327 = sphi 0, %s327
      %s329 = sphi 0, %s327
      %s330 = sphi 0, %s329
      %s344 = sphi 0, %s330
      %s348 = sphi 0, %s348
      %s350 = sphi 0, %s348
      %s351 = sphi 0, %s350
      %s365 = sphi 0, %s351
      %s369 = sphi 0, %s369
      %s371 = sphi 0, %s369
      %s372 = sphi 0, %s371
      %s386 = sphi 0, %s372
      %s394 = sphi 0, %s396
      %s397 = sphi 0, %s394
      %s398 = sphi 0, %s397
      %s414 = sphi 0, %s398
    $region4: #{tpu_custom_call.1} parent=1 // loop_header_branch
      %27 = sbr.rel (%p25) target = $region8
    $region5: #{tpu_custom_call.1} parent=1 // loop_body
      %s29 = ssub.s32 %s24, 1
      %s30 = ssub.s32 %s24, 2
      %s37 = sadd.s32 1, %s32
      %p38 = scmp.ge.s32.totalorder %s37, 1
      %s39 = scalar_select %p38, 0, %s37
      %s40 = sadd.s32 1, %s31
      %s41 = scalar_select %p38, %s40, %s31
      %p42 = scmp.ge.s32.totalorder %s41, 2
      %s43 = scalar_select %p42, 0, %s41
      %s44 = ssub.s32 %s31, %s43
      %s45 = ssub.s32 %s32, %s39
      %s46 = sor.u32 %s44, %s45
      %p47 = scmp.eq.s32.totalorder %s46, 0
      %s49 = sadd.s32 %s48, 1
      %s50 = scalar_select %p47, %s48, %s49
      %p53 = pneg %p47
      %p54 = scmp.eq.s32.totalorder %s24, 1
      %p55 = por %p53, %p54
      %p56 = scmp.ne.s32.totalorder %s48, %s51
      %p57 = scmp.eq.s32.totalorder %s24, 0
      %p58 = por %p56, %p57
      %p59 = scmp.ne.s32.totalorder %s48, %s51
      %p60 = scmp.eq.s32.totalorder %s29, 1
      %p61 = por %p59, %p60
      %p62 = scmp.ne.s32.totalorder %s51, %s52
      %p63 = scmp.eq.s32.totalorder %s29, 0
      %p64 = por %p62, %p63
      %p65 = scmp.ne.s32.totalorder %s51, %s52
      %p66 = scmp.eq.s32.totalorder %s30, 1
      %p67 = por %p65, %p66
      %p69 = scmp.ne.s32.totalorder %s52, %s68
      %p70 = scmp.eq.s32.totalorder %s30, 0
      %p71 = por %p69, %p70
      %s72 = ssub.s32 %s31, %s43
      %p73 = scmp.eq.s32.totalorder %s72, 0
      %s75 = sadd.s32 %s74, 1
      %s76 = scalar_select %p73, %s74, %s75
      %p79 = pneg %p73
      %p80 = scmp.eq.s32.totalorder %s24, 1
      %p81 = por %p79, %p80
      %p82 = scmp.ne.s32.totalorder %s74, %s77
      %p83 = scmp.eq.s32.totalorder %s24, 0
      %p84 = por %p82, %p83
      %p85 = scmp.ne.s32.totalorder %s74, %s77
      %p86 = scmp.eq.s32.totalorder %s29, 1
      %p87 = por %p85, %p86
      %p88 = scmp.ne.s32.totalorder %s77, %s78
      %p89 = scmp.eq.s32.totalorder %s29, 0
      %p90 = por %p88, %p89
      %p91 = scmp.ne.s32.totalorder %s77, %s78
      %p92 = scmp.eq.s32.totalorder %s30, 1
      %p93 = por %p91, %p92
      %p95 = scmp.ne.s32.totalorder %s78, %s94
      %p96 = scmp.eq.s32.totalorder %s30, 0
      %p97 = por %p95, %p96
      %s98 = ssub.s32 %s31, %s43
      %p99 = scmp.eq.s32.totalorder %s98, 0
      %s101 = sadd.s32 %s100, 1
      %s102 = scalar_select %p99, %s100, %s101
      %p105 = pneg %p99
      %p106 = scmp.eq.s32.totalorder %s24, 1
      %p107 = por %p105, %p106
      %p108 = scmp.ne.s32.totalorder %s100, %s103
      %p109 = scmp.eq.s32.totalorder %s24, 0
      %p110 = por %p108, %p109
      %p111 = scmp.ne.s32.totalorder %s100, %s103
      %p112 = scmp.eq.s32.totalorder %s29, 1
      %p113 = por %p111, %p112
      %p114 = scmp.ne.s32.totalorder %s103, %s104
      %p115 = scmp.eq.s32.totalorder %s29, 0
      %p116 = por %p114, %p115
      %p117 = scmp.ne.s32.totalorder %s103, %s104
      %p118 = scmp.eq.s32.totalorder %s30, 1
      %p119 = por %p117, %p118
      %p121 = scmp.ne.s32.totalorder %s104, %s120
      %p122 = scmp.eq.s32.totalorder %s30, 0
      %p123 = por %p121, %p122
      %s124 = ssub.s32 %s31, %s43
      %s125 = ssub.s32 %s32, %s39
      %s126 = sor.u32 %s124, %s125
      %p127 = scmp.eq.s32.totalorder %s126, 0
      %s129 = sadd.s32 %s128, 1
      %s130 = scalar_select %p127, %s128, %s129
      %p133 = pneg %p127
      %p134 = scmp.eq.s32.totalorder %s24, 1
      %p135 = por %p133, %p134
      %p136 = scmp.ne.s32.totalorder %s128, %s131
      %p137 = scmp.eq.s32.totalorder %s24, 0
      %p138 = por %p136, %p137
      %p139 = scmp.ne.s32.totalorder %s128, %s131
      %p140 = scmp.eq.s32.totalorder %s29, 1
      %p141 = por %p139, %p140
      %p142 = scmp.ne.s32.totalorder %s131, %s132
      %p143 = scmp.eq.s32.totalorder %s29, 0
      %p144 = por %p142, %p143
      %p145 = scmp.ne.s32.totalorder %s131, %s132
      %p146 = scmp.eq.s32.totalorder %s30, 1
      %p147 = por %p145, %p146
      %p149 = scmp.ne.s32.totalorder %s132, %s148
      %p150 = scmp.eq.s32.totalorder %s30, 0
      %p151 = por %p149, %p150
      %s152 = ssub.s32 %s31, %s43
      %s153 = ssub.s32 %s32, %s39
      %s154 = sor.u32 %s152, %s153
      %p155 = scmp.eq.s32.totalorder %s154, 0
      %s157 = sadd.s32 %s156, 1
      %s158 = scalar_select %p155, %s156, %s157
      %p161 = pneg %p155
      %p162 = scmp.eq.s32.totalorder %s24, 1
      %p163 = por %p161, %p162
      %p164 = scmp.ne.s32.totalorder %s156, %s159
      %p165 = scmp.eq.s32.totalorder %s24, 0
      %p166 = por %p164, %p165
      %p167 = scmp.ne.s32.totalorder %s156, %s159
      %p168 = scmp.eq.s32.totalorder %s29, 1
      %p169 = por %p167, %p168
      %p170 = scmp.ne.s32.totalorder %s159, %s160
      %p171 = scmp.eq.s32.totalorder %s29, 0
      %p172 = por %p170, %p171
      %p173 = scmp.ne.s32.totalorder %s159, %s160
      %p174 = scmp.eq.s32.totalorder %s30, 1
      %p175 = por %p173, %p174
      %p177 = scmp.ne.s32.totalorder %s160, %s176
      %p178 = scmp.eq.s32.totalorder %s30, 0
      %p179 = por %p177, %p178
      %s181 = sadd.s32 %s180, 1
      %p184 = scmp.eq.s32.totalorder %s24, 1
      %p185 = scmp.ne.s32.totalorder %s180, %s182
      %p186 = scmp.eq.s32.totalorder %s24, 0
      %p187 = por %p185, %p186
      %p188 = scmp.ne.s32.totalorder %s180, %s182
      %p189 = scmp.eq.s32.totalorder %s29, 1
      %p190 = por %p188, %p189
      %p191 = scmp.ne.s32.totalorder %s182, %s183
      %p192 = scmp.eq.s32.totalorder %s29, 0
      %p193 = por %p191, %p192
      %p194 = scmp.ne.s32.totalorder %s182, %s183
      %p195 = scmp.eq.s32.totalorder %s30, 1
      %p196 = por %p194, %p195
      %p198 = scmp.ne.s32.totalorder %s183, %s197
      %p199 = scmp.eq.s32.totalorder %s30, 0
      %p200 = por %p198, %p199
      %s202 = sadd.s32 %s201, 1
      %p205 = scmp.eq.s32.totalorder %s24, 1
      %p206 = scmp.ne.s32.totalorder %s201, %s203
      %p207 = scmp.eq.s32.totalorder %s24, 0
      %p208 = por %p206, %p207
      %p209 = scmp.ne.s32.totalorder %s201, %s203
      %p210 = scmp.eq.s32.totalorder %s29, 1
      %p211 = por %p209, %p210
      %p212 = scmp.ne.s32.totalorder %s203, %s204
      %p213 = scmp.eq.s32.totalorder %s29, 0
      %p214 = por %p212, %p213
      %p215 = scmp.ne.s32.totalorder %s203, %s204
      %p216 = scmp.eq.s32.totalorder %s30, 1
      %p217 = por %p215, %p216
      %p219 = scmp.ne.s32.totalorder %s204, %s218
      %p220 = scmp.eq.s32.totalorder %s30, 0
      %p221 = por %p219, %p220
      %s223 = sadd.s32 %s222, 1
      %p226 = scmp.eq.s32.totalorder %s24, 1
      %p227 = scmp.ne.s32.totalorder %s222, %s224
      %p228 = scmp.eq.s32.totalorder %s24, 0
      %p229 = por %p227, %p228
      %p230 = scmp.ne.s32.totalorder %s222, %s224
      %p231 = scmp.eq.s32.totalorder %s29, 1
      %p232 = por %p230, %p231
      %p233 = scmp.ne.s32.totalorder %s224, %s225
      %p234 = scmp.eq.s32.totalorder %s29, 0
      %p235 = por %p233, %p234
      %p236 = scmp.ne.s32.totalorder %s224, %s225
      %p237 = scmp.eq.s32.totalorder %s30, 1
      %p238 = por %p236, %p237
      %p240 = scmp.ne.s32.totalorder %s225, %s239
      %p241 = scmp.eq.s32.totalorder %s30, 0
      %p242 = por %p240, %p241
      %s244 = sadd.s32 %s243, 1
      %p247 = scmp.eq.s32.totalorder %s24, 1
      %p248 = scmp.ne.s32.totalorder %s243, %s245
      %p249 = scmp.eq.s32.totalorder %s24, 0
      %p250 = por %p248, %p249
      %p251 = scmp.ne.s32.totalorder %s243, %s245
      %p252 = scmp.eq.s32.totalorder %s29, 1
      %p253 = por %p251, %p252
      %p254 = scmp.ne.s32.totalorder %s245, %s246
      %p255 = scmp.eq.s32.totalorder %s29, 0
      %p256 = por %p254, %p255
      %p257 = scmp.ne.s32.totalorder %s245, %s246
      %p258 = scmp.eq.s32.totalorder %s30, 1
      %p259 = por %p257, %p258
      %p261 = scmp.ne.s32.totalorder %s246, %s260
      %p262 = scmp.eq.s32.totalorder %s30, 0
      %p263 = por %p261, %p262
      %s265 = sadd.s32 %s264, 1
      %p268 = scmp.eq.s32.totalorder %s24, 1
      %p269 = scmp.ne.s32.totalorder %s264, %s266
      %p270 = scmp.eq.s32.totalorder %s24, 0
      %p271 = por %p269, %p270
      %p272 = scmp.ne.s32.totalorder %s264, %s266
      %p273 = scmp.eq.s32.totalorder %s29, 1
      %p274 = por %p272, %p273
      %p275 = scmp.ne.s32.totalorder %s266, %s267
      %p276 = scmp.eq.s32.totalorder %s29, 0
      %p277 = por %p275, %p276
      %p278 = scmp.ne.s32.totalorder %s266, %s267
      %p279 = scmp.eq.s32.totalorder %s30, 1
      %p280 = por %p278, %p279
      %p282 = scmp.ne.s32.totalorder %s267, %s281
      %p283 = scmp.eq.s32.totalorder %s30, 0
      %p284 = por %p282, %p283
      %s286 = sadd.s32 %s285, 1
      %p289 = scmp.eq.s32.totalorder %s24, 1
      %p290 = scmp.ne.s32.totalorder %s285, %s287
      %p291 = scmp.eq.s32.totalorder %s24, 0
      %p292 = por %p290, %p291
      %p293 = scmp.ne.s32.totalorder %s285, %s287
      %p294 = scmp.eq.s32.totalorder %s29, 1
      %p295 = por %p293, %p294
      %p296 = scmp.ne.s32.totalorder %s287, %s288
      %p297 = scmp.eq.s32.totalorder %s29, 0
      %p298 = por %p296, %p297
      %p299 = scmp.ne.s32.totalorder %s287, %s288
      %p300 = scmp.eq.s32.totalorder %s30, 1
      %p301 = por %p299, %p300
      %p303 = scmp.ne.s32.totalorder %s288, %s302
      %p304 = scmp.eq.s32.totalorder %s30, 0
      %p305 = por %p303, %p304
      %s307 = sadd.s32 %s306, 1
      %p310 = scmp.eq.s32.totalorder %s24, 1
      %p311 = scmp.ne.s32.totalorder %s306, %s308
      %p312 = scmp.eq.s32.totalorder %s24, 0
      %p313 = por %p311, %p312
      %p314 = scmp.ne.s32.totalorder %s306, %s308
      %p315 = scmp.eq.s32.totalorder %s29, 1
      %p316 = por %p314, %p315
      %p317 = scmp.ne.s32.totalorder %s308, %s309
      %p318 = scmp.eq.s32.totalorder %s29, 0
      %p319 = por %p317, %p318
      %p320 = scmp.ne.s32.totalorder %s308, %s309
      %p321 = scmp.eq.s32.totalorder %s30, 1
      %p322 = por %p320, %p321
      %p324 = scmp.ne.s32.totalorder %s309, %s323
      %p325 = scmp.eq.s32.totalorder %s30, 0
      %p326 = por %p324, %p325
      %s328 = sadd.s32 %s327, 1
      %p331 = scmp.eq.s32.totalorder %s24, 1
      %p332 = scmp.ne.s32.totalorder %s327, %s329
      %p333 = scmp.eq.s32.totalorder %s24, 0
      %p334 = por %p332, %p333
      %p335 = scmp.ne.s32.totalorder %s327, %s329
      %p336 = scmp.eq.s32.totalorder %s29, 1
      %p337 = por %p335, %p336
      %p338 = scmp.ne.s32.totalorder %s329, %s330
      %p339 = scmp.eq.s32.totalorder %s29, 0
      %p340 = por %p338, %p339
      %p341 = scmp.ne.s32.totalorder %s329, %s330
      %p342 = scmp.eq.s32.totalorder %s30, 1
      %p343 = por %p341, %p342
      %p345 = scmp.ne.s32.totalorder %s330, %s344
      %p346 = scmp.eq.s32.totalorder %s30, 0
      %p347 = por %p345, %p346
      %s349 = sadd.s32 %s348, 1
      %p352 = scmp.eq.s32.totalorder %s24, 1
      %p353 = scmp.ne.s32.totalorder %s348, %s350
      %p354 = scmp.eq.s32.totalorder %s24, 0
      %p355 = por %p353, %p354
      %p356 = scmp.ne.s32.totalorder %s348, %s350
      %p357 = scmp.eq.s32.totalorder %s29, 1
      %p358 = por %p356, %p357
      %p359 = scmp.ne.s32.totalorder %s350, %s351
      %p360 = scmp.eq.s32.totalorder %s29, 0
      %p361 = por %p359, %p360
      %p362 = scmp.ne.s32.totalorder %s350, %s351
      %p363 = scmp.eq.s32.totalorder %s30, 1
      %p364 = por %p362, %p363
      %p366 = scmp.ne.s32.totalorder %s351, %s365
      %p367 = scmp.eq.s32.totalorder %s30, 0
      %p368 = por %p366, %p367
      %s370 = sadd.s32 %s369, 1
      %p373 = scmp.eq.s32.totalorder %s24, 1
      %p374 = scmp.ne.s32.totalorder %s369, %s371
      %p375 = scmp.eq.s32.totalorder %s24, 0
      %p376 = por %p374, %p375
      %p377 = scmp.ne.s32.totalorder %s369, %s371
      %p378 = scmp.eq.s32.totalorder %s29, 1
      %p379 = por %p377, %p378
      %p380 = scmp.ne.s32.totalorder %s371, %s372
      %p381 = scmp.eq.s32.totalorder %s29, 0
      %p382 = por %p380, %p381
      %p383 = scmp.ne.s32.totalorder %s371, %s372
      %p384 = scmp.eq.s32.totalorder %s30, 1
      %p385 = por %p383, %p384
      %p387 = scmp.ne.s32.totalorder %s372, %s386
      %p388 = scmp.eq.s32.totalorder %s30, 0
      %p389 = por %p387, %p388
      %s390 = ssub.s32 %s31, %s43
      %s391 = ssub.s32 %s32, %s39
      %s392 = sor.u32 %s390, %s391
      %p393 = scmp.eq.s32.totalorder %s392, 0
      %s395 = sadd.s32 %s394, 1
      %s396 = scalar_select %p393, %s394, %s395
      %p399 = pneg %p393
      %p400 = scmp.eq.s32.totalorder %s24, 1
      %p401 = por %p399, %p400
      %p402 = scmp.ne.s32.totalorder %s394, %s397
      %p403 = scmp.eq.s32.totalorder %s24, 0
      %p404 = por %p402, %p403
      %p405 = scmp.ne.s32.totalorder %s394, %s397
      %p406 = scmp.eq.s32.totalorder %s29, 1
      %p407 = por %p405, %p406
      %p408 = scmp.ne.s32.totalorder %s397, %s398
      %p409 = scmp.eq.s32.totalorder %s29, 0
      %p410 = por %p408, %p409
      %p411 = scmp.ne.s32.totalorder %s397, %s398
      %p412 = scmp.eq.s32.totalorder %s30, 1
      %p413 = por %p411, %p412
      %p415 = scmp.ne.s32.totalorder %s398, %s414
      %p416 = scmp.eq.s32.totalorder %s30, 0
      %p417 = por %p415, %p416
      %p418 = scmp.le.s32.totalorder 1, %s24
      %p419 = scmp.lt.s32.totalorder %s24, 3
      %p420 = pnand %p418, %p419
      %p421 = pneg %p420
      // Predicated region
      $region9: #{tpu_custom_call.1} parent=5 // pred_check
        _
      $region10: #{tpu_custom_call.1} parent=5 // pred_check_branch
        %423 = sbr.rel (%p420) target = $region12
      $region11: #{tpu_custom_call.1} parent=5 // pred_region
        %s424 = ssub.s32 %s24, 1
        // Predicated region
        $region13: #{tpu_custom_call.1} parent=11 // pred_check
          %p425 = pneg %p193
        $region14: #{tpu_custom_call.1} parent=11 // pred_check_branch
          %427 = sbr.rel (%p425) target = $region16
        $region15: #{tpu_custom_call.1} parent=11 // pred_region
          _
        $region16: #{tpu_custom_call.1} parent=11 // pred_fallthru
          _
        // Predicated region
        $region17: #{tpu_custom_call.1} parent=11 // pred_check
          %p428 = pneg %p214
        $region18: #{tpu_custom_call.1} parent=11 // pred_check_branch
          %430 = sbr.rel (%p428) target = $region20
        $region19: #{tpu_custom_call.1} parent=11 // pred_region
          _
        $region20: #{tpu_custom_call.1} parent=11 // pred_fallthru
          _
        // Predicated region
        $region21: #{tpu_custom_call.1} parent=11 // pred_check
          %p431 = pneg %p235
        $region22: #{tpu_custom_call.1} parent=11 // pred_check_branch
          %433 = sbr.rel (%p431) target = $region24
        $region23: #{tpu_custom_call.1} parent=11 // pred_region
          _
        $region24: #{tpu_custom_call.1} parent=11 // pred_fallthru
          _
        // Predicated region
        $region25: #{tpu_custom_call.1} parent=11 // pred_check
          %p434 = pneg %p256
        $region26: #{tpu_custom_call.1} parent=11 // pred_check_branch
          %436 = sbr.rel (%p434) target = $region28
        $region27: #{tpu_custom_call.1} parent=11 // pred_region
          _
        $region28: #{tpu_custom_call.1} parent=11 // pred_fallthru
          _
        // Predicated region
        $region29: #{tpu_custom_call.1} parent=11 // pred_check
          %p437 = pneg %p277
        $region30: #{tpu_custom_call.1} parent=11 // pred_check_branch
          %439 = sbr.rel (%p437) target = $region32
        $region31: #{tpu_custom_call.1} parent=11 // pred_region
          _
        $region32: #{tpu_custom_call.1} parent=11 // pred_fallthru
          _
        // Predicated region
        $region33: #{tpu_custom_call.1} parent=11 // pred_check
          %p440 = pneg %p298
        $region34: #{tpu_custom_call.1} parent=11 // pred_check_branch
          %442 = sbr.rel (%p440) target = $region36
        $region35: #{tpu_custom_call.1} parent=11 // pred_region
          _
        $region36: #{tpu_custom_call.1} parent=11 // pred_fallthru
          _
        // Predicated region
        $region37: #{tpu_custom_call.1} parent=11 // pred_check
          %p443 = pneg %p319
        $region38: #{tpu_custom_call.1} parent=11 // pred_check_branch
          %445 = sbr.rel (%p443) target = $region40
        $region39: #{tpu_custom_call.1} parent=11 // pred_region
          _
        $region40: #{tpu_custom_call.1} parent=11 // pred_fallthru
          _
        // Predicated region
        $region41: #{tpu_custom_call.1} parent=11 // pred_check
          %p446 = pneg %p340
        $region42: #{tpu_custom_call.1} parent=11 // pred_check_branch
          %448 = sbr.rel (%p446) target = $region44
        $region43: #{tpu_custom_call.1} parent=11 // pred_region
          _
        $region44: #{tpu_custom_call.1} parent=11 // pred_fallthru
          _
        // Predicated region
        $region45: #{tpu_custom_call.1} parent=11 // pred_check
          %p449 = pneg %p361
        $region46: #{tpu_custom_call.1} parent=11 // pred_check_branch
          %451 = sbr.rel (%p449) target = $region48
        $region47: #{tpu_custom_call.1} parent=11 // pred_region
          _
        $region48: #{tpu_custom_call.1} parent=11 // pred_fallthru
          _
        // Predicated region
        $region49: #{tpu_custom_call.1} parent=11 // pred_check
          %p452 = pneg %p382
        $region50: #{tpu_custom_call.1} parent=11 // pred_check_branch
          %454 = sbr.rel (%p452) target = $region52
        $region51: #{tpu_custom_call.1} parent=11 // pred_region
          _
        $region52: #{tpu_custom_call.1} parent=11 // pred_fallthru
          _
      $region12: #{tpu_custom_call.1} parent=5 // pred_fallthru
        _
      %p455 = scmp.lt.s32.totalorder %s24, 2
      // Predicated region
      $region53: #{tpu_custom_call.1} parent=5 // pred_check
        %p456 = pneg %p455
      $region54: #{tpu_custom_call.1} parent=5 // pred_check_branch
        %458 = sbr.rel (%p456) target = $region56
      $region55: #{tpu_custom_call.1} parent=5 // pred_region
        // Predicated region
        $region57: #{tpu_custom_call.1} parent=55 // pred_check
          %p459 = pneg %p58
        $region58: #{tpu_custom_call.1} parent=55 // pred_check_branch
          %461 = sbr.rel (%p459) target = $region60
        $region59: #{tpu_custom_call.1} parent=55 // pred_region
          %p462 = scmp.lt.s32.totalorder %s31, 1
          %s463 = scalar_select %p462, %s31, 1
          %p464 = scmp.lt.s32.totalorder %s32, 0
          %s465 = scalar_select %p464, %s32, 0
          %s466 = sadd.s32 %s465, %s463
          %s467 = smul.addr %s466, 8
          %s468 = scalar_lea.vmem %s0, %s467
        $region60: #{tpu_custom_call.1} parent=55 // pred_fallthru
          _
        // Predicated region
        $region61: #{tpu_custom_call.1} parent=55 // pred_check
          %p469 = pneg %p84
        $region62: #{tpu_custom_call.1} parent=55 // pred_check_branch
          %471 = sbr.rel (%p469) target = $region64
        $region63: #{tpu_custom_call.1} parent=55 // pred_region
          %p472 = scmp.lt.s32.totalorder %s31, 1
          %s473 = scalar_select %p472, %s31, 1
          %s474 = smul.addr %s473, 8
          %s475 = scalar_lea.vmem %s1, %s474
        $region64: #{tpu_custom_call.1} parent=55 // pred_fallthru
          _
        // Predicated region
        $region65: #{tpu_custom_call.1} parent=55 // pred_check
          %p476 = pneg %p110
        $region66: #{tpu_custom_call.1} parent=55 // pred_check_branch
          %478 = sbr.rel (%p476) target = $region68
        $region67: #{tpu_custom_call.1} parent=55 // pred_region
          %p479 = scmp.lt.s32.totalorder %s31, 1
          %s480 = scalar_select %p479, %s31, 1
          %s481 = smul.addr %s480, 8
          %s482 = scalar_lea.vmem %s2, %s481
        $region68: #{tpu_custom_call.1} parent=55 // pred_fallthru
          _
        // Predicated region
        $region69: #{tpu_custom_call.1} parent=55 // pred_check
          %p483 = pneg %p138
        $region70: #{tpu_custom_call.1} parent=55 // pred_check_branch
          %485 = sbr.rel (%p483) target = $region72
        $region71: #{tpu_custom_call.1} parent=55 // pred_region
          %p486 = scmp.lt.s32.totalorder %s31, 1
          %s487 = scalar_select %p486, %s31, 1
          %p488 = scmp.lt.s32.totalorder %s32, 0
          %s489 = scalar_select %p488, %s32, 0
          %s490 = smul.addr %s487, 8
          %s491 = sadd.s32 %s489, %s490
          %s492 = smul.addr %s491, 8
          %s493 = scalar_lea.vmem %s3, %s492
        $region72: #{tpu_custom_call.1} parent=55 // pred_fallthru
          _
        // Predicated region
        $region73: #{tpu_custom_call.1} parent=55 // pred_check
          %p494 = pneg %p166
        $region74: #{tpu_custom_call.1} parent=55 // pred_check_branch
          %496 = sbr.rel (%p494) target = $region76
        $region75: #{tpu_custom_call.1} parent=55 // pred_region
          %p497 = scmp.lt.s32.totalorder %s31, 1
          %s498 = scalar_select %p497, %s31, 1
          %p499 = scmp.lt.s32.totalorder %s32, 0
          %s500 = scalar_select %p499, %s32, 0
          %s501 = smul.addr %s498, 8
          %s502 = sadd.s32 %s500, %s501
          %s503 = smul.addr %s502, 8
          %s504 = scalar_lea.vmem %s4, %s503
        $region76: #{tpu_custom_call.1} parent=55 // pred_fallthru
          _
      $region56: #{tpu_custom_call.1} parent=5 // pred_fallthru
        _
      %p505 = scmp.le.s32.totalorder 1, %s24
      %p506 = scmp.lt.s32.totalorder %s24, 3
      %p507 = pnand %p505, %p506
      %p508 = pneg %p507
      // Predicated region
      $region77: #{tpu_custom_call.1} parent=5 // pred_check
        _
      $region78: #{tpu_custom_call.1} parent=5 // pred_check_branch
        %510 = sbr.rel (%p507) target = $region80
      $region79: #{tpu_custom_call.1} parent=5 // pred_region
        %s511 = ssub.s32 %s24, 1
        %p512 = scmp.lt.s32.totalorder %s33, 1
        %s513 = scalar_select %p512, %s33, 1
        %p514 = scmp.lt.s32.totalorder %s34, 0
        %s515 = scalar_select %p514, %s34, 0
        %s516 = sadd.s32 %s515, %s513
        %s517 = smul.addr %s516, 8
        %s518 = scalar_lea.vmem %s0, %s517
        %p519 = pneg %p64
        %p520 = pneg %p61
        %p521 = scmp.lt.s32.totalorder %s33, 1
        %s522 = scalar_select %p521, %s33, 1
        %s523 = smul.addr %s522, 8
        %s524 = scalar_lea.vmem %s1, %s523
        %p525 = pneg %p90
        %p526 = pneg %p87
        %p527 = scmp.lt.s32.totalorder %s33, 1
        %s528 = scalar_select %p527, %s33, 1
        %s529 = smul.addr %s528, 8
        %s530 = scalar_lea.vmem %s2, %s529
        %p531 = pneg %p116
        %p532 = pneg %p113
        %p533 = scmp.lt.s32.totalorder %s33, 1
        %s534 = scalar_select %p533, %s33, 1
        %p535 = scmp.lt.s32.totalorder %s34, 0
        %s536 = scalar_select %p535, %s34, 0
        %s537 = smul.addr %s534, 8
        %s538 = sadd.s32 %s536, %s537
        %s539 = smul.addr %s538, 8
        %s540 = scalar_lea.vmem %s3, %s539
        %p541 = pneg %p144
        %p542 = pneg %p141
        %p543 = scmp.lt.s32.totalorder %s33, 1
        %s544 = scalar_select %p543, %s33, 1
        %p545 = scmp.lt.s32.totalorder %s34, 0
        %s546 = scalar_select %p545, %s34, 0
        %s547 = smul.addr %s544, 8
        %s548 = sadd.s32 %s546, %s547
        %s549 = smul.addr %s548, 8
        %s550 = scalar_lea.vmem %s4, %s549
        %p551 = pneg %p172
        %p552 = pneg %p169
        %p553 = pneg %p193
        %p554 = pneg %p190
        %p555 = pneg %p214
        %p556 = pneg %p211
        %p557 = pneg %p235
        %p558 = pneg %p232
        %p559 = pneg %p256
        %p560 = pneg %p253
        %p561 = pneg %p277
        %p562 = pneg %p274
        %p563 = pneg %p298
        %p564 = pneg %p295
        %p565 = pneg %p319
        %p566 = pneg %p316
        %p567 = pneg %p340
        %p568 = pneg %p337
        %p569 = pneg %p361
        %p570 = pneg %p358
        %p571 = pneg %p382
        %p572 = pneg %p379
        %p573 = pneg %p410
        %p574 = pneg %p407
        %s575 = sand.u32 %s397, 1
        %s576 = scalar_lea.sflag [#allocation3], %s575
        %s577 = sand.u32 %s397, 1
        %s578 = smul.addr %s577, 8
        %s579 = scalar_lea.vmem [#allocation2], %s578
        %p580 = scmp.lt.s32.totalorder %s33, 1
        %s581 = scalar_select %p580, %s33, 1
        %p582 = scmp.lt.s32.totalorder %s34, 0
        %s583 = scalar_select %p582, %s34, 0
        %s584 = sadd.s32 %s583, %s581
        %s585 = smul.addr %s584, 8
        %s586 = scalar_lea.vmem %s0, %s585
        %p587 = scmp.lt.s32.totalorder %s33, 1
        %s588 = scalar_select %p587, %s33, 1
        %s589 = smul.addr %s588, 8
        %s590 = scalar_lea.vmem %s1, %s589
        %p591 = scmp.lt.s32.totalorder %s33, 1
        %s592 = scalar_select %p591, %s33, 1
        %s593 = smul.addr %s592, 8
        %s594 = scalar_lea.vmem %s2, %s593
        %p595 = scmp.lt.s32.totalorder %s33, 1
        %s596 = scalar_select %p595, %s33, 1
        %p597 = scmp.lt.s32.totalorder %s34, 0
        %s598 = scalar_select %p597, %s34, 0
        %s599 = smul.addr %s596, 8
        %s600 = sadd.s32 %s598, %s599
        %s601 = smul.addr %s600, 8
        %s602 = scalar_lea.vmem %s3, %s601
        %p603 = scmp.lt.s32.totalorder %s33, 1
        %s604 = scalar_select %p603, %s33, 1
        %p605 = scmp.lt.s32.totalorder %s34, 0
        %s606 = scalar_select %p605, %s34, 0
        %s607 = smul.addr %s604, 8
        %s608 = sadd.s32 %s606, %s607
        %s609 = smul.addr %s608, 8
        %s610 = scalar_lea.vmem %s4, %s609
        %v612 = vld [vmem:[%s586] sm:$0xff]
        %v613 = vld [vmem:[%s590] sm:$0xff]
        %v614 = vld [vmem:[%s594] sm:$0xff]
        %v615 = vld [vmem:[%s602] sm:$0xff]
        %v616 = vld [vmem:[%s602 + $0x8] sm:$0xff]
        %v617 = vld [vmem:[%s602 + $0x10] sm:$0xff]
        %v618 = vld [vmem:[%s602 + $0x18] sm:$0xff]
        %v619 = vld [vmem:[%s602 + $0x20] sm:$0xff]
        %v620 = vld [vmem:[%s602 + $0x28] sm:$0xff]
        %v621 = vld [vmem:[%s602 + $0x30] sm:$0xff]
        %v622 = vld [vmem:[%s602 + $0x38] sm:$0xff]
        %v623 = vld [vmem:[%s610] sm:$0xff]
        %v624 = vld [vmem:[%s610 + $0x8] sm:$0xff]
        %v625 = vld [vmem:[%s610 + $0x10] sm:$0xff]
        %v626 = vld [vmem:[%s610 + $0x18] sm:$0xff]
        %v627 = vld [vmem:[%s610 + $0x20] sm:$0xff]
        %v628 = vld [vmem:[%s610 + $0x28] sm:$0xff]
        %v629 = vld [vmem:[%s610 + $0x30] sm:$0xff]
        %v630 = vld [vmem:[%s610 + $0x38] sm:$0xff]
        %v631 = vld [vmem:[%s5] sm:$0xf]
        %v632 = vld [vmem:[%s5 + $0x4] sm:$0xf]
        %v633 = vld [vmem:[%s5 + $0x8] sm:$0xf]
        %v634 = vld [vmem:[%s5 + $0xc] sm:$0xf]
        %v635 = vld [vmem:[%s5 + $0x10] sm:$0xf]
        %v636 = vld [vmem:[%s5 + $0x14] sm:$0xf]
        %v637 = vld [vmem:[%s5 + $0x18] sm:$0xf]
        %v638 = vld [vmem:[%s5 + $0x1c] sm:$0xf]
        %v639 = vld [vmem:[%s5 + $0x20] sm:$0xf]
        %v640 = vld [vmem:[%s5 + $0x24] sm:$0xf]
        %v641 = vld [vmem:[%s5 + $0x28] sm:$0xf]
        %v642 = vld [vmem:[%s5 + $0x2c] sm:$0xf]
        %v643 = vld [vmem:[%s5 + $0x30] sm:$0xf]
        %v644 = vld [vmem:[%s5 + $0x34] sm:$0xf]
        %v645 = vld [vmem:[%s5 + $0x38] sm:$0xf]
        %v646 = vld [vmem:[%s5 + $0x3c] sm:$0xf]
        %v647 = vld [vmem:[%s5 + $0x40] sm:$0xf]
        %v648 = vld [vmem:[%s5 + $0x44] sm:$0xf]
        %v649 = vld [vmem:[%s5 + $0x48] sm:$0xf]
        %v650 = vld [vmem:[%s5 + $0x4c] sm:$0xf]
        %v651 = vld [vmem:[%s5 + $0x50] sm:$0xf]
        %v652 = vld [vmem:[%s5 + $0x54] sm:$0xf]
        %v653 = vld [vmem:[%s5 + $0x58] sm:$0xf]
        %v654 = vld [vmem:[%s5 + $0x5c] sm:$0xf]
        %v655 = vld [vmem:[%s5 + $0x60] sm:$0xf]
        %v656 = vld [vmem:[%s5 + $0x64] sm:$0xf]
        %v657 = vld [vmem:[%s5 + $0x68] sm:$0xf]
        %v658 = vld [vmem:[%s5 + $0x6c] sm:$0xf]
        %v659 = vld [vmem:[%s5 + $0x70] sm:$0xf]
        %v660 = vld [vmem:[%s5 + $0x74] sm:$0xf]
        %v661 = vld [vmem:[%s5 + $0x78] sm:$0xf]
        %v662 = vld [vmem:[%s5 + $0x7c] sm:$0xf]
        %v663 = vld [vmem:[%s6] sm:$0xf]
        %v664 = vld [vmem:[%s6 + $0x4] sm:$0xf]
        %v665 = vld [vmem:[%s6 + $0x8] sm:$0xf]
        %v666 = vld [vmem:[%s6 + $0xc] sm:$0xf]
        %v667 = vld [vmem:[%s6 + $0x10] sm:$0xf]
        %v668 = vld [vmem:[%s6 + $0x14] sm:$0xf]
        %v669 = vld [vmem:[%s6 + $0x18] sm:$0xf]
        %v670 = vld [vmem:[%s6 + $0x1c] sm:$0xf]
        %v671 = vld [vmem:[%s6 + $0x20] sm:$0xf]
        %v672 = vld [vmem:[%s6 + $0x24] sm:$0xf]
        %v673 = vld [vmem:[%s6 + $0x28] sm:$0xf]
        %v674 = vld [vmem:[%s6 + $0x2c] sm:$0xf]
        %v675 = vld [vmem:[%s6 + $0x30] sm:$0xf]
        %v676 = vld [vmem:[%s6 + $0x34] sm:$0xf]
        %v677 = vld [vmem:[%s6 + $0x38] sm:$0xf]
        %v678 = vld [vmem:[%s6 + $0x3c] sm:$0xf]
        %v679 = vld [vmem:[%s6 + $0x40] sm:$0xf]
        %v680 = vld [vmem:[%s6 + $0x44] sm:$0xf]
        %v681 = vld [vmem:[%s6 + $0x48] sm:$0xf]
        %v682 = vld [vmem:[%s6 + $0x4c] sm:$0xf]
        %v683 = vld [vmem:[%s6 + $0x50] sm:$0xf]
        %v684 = vld [vmem:[%s6 + $0x54] sm:$0xf]
        %v685 = vld [vmem:[%s6 + $0x58] sm:$0xf]
        %v686 = vld [vmem:[%s6 + $0x5c] sm:$0xf]
        %v687 = vld [vmem:[%s6 + $0x60] sm:$0xf]
        %v688 = vld [vmem:[%s6 + $0x64] sm:$0xf]
        %v689 = vld [vmem:[%s6 + $0x68] sm:$0xf]
        %v690 = vld [vmem:[%s6 + $0x6c] sm:$0xf]
        %v691 = vld [vmem:[%s6 + $0x70] sm:$0xf]
        %v692 = vld [vmem:[%s6 + $0x74] sm:$0xf]
        %v693 = vld [vmem:[%s6 + $0x78] sm:$0xf]
        %v694 = vld [vmem:[%s6 + $0x7c] sm:$0xf]
        %v695 = vld [vmem:[%s7] sm:$0xf]
        %v696 = vld [vmem:[%s7 + $0x4] sm:$0xf]
        %v697 = vld [vmem:[%s7 + $0x8] sm:$0xf]
        %v698 = vld [vmem:[%s7 + $0xc] sm:$0xf]
        %v699 = vld [vmem:[%s7 + $0x10] sm:$0xf]
        %v700 = vld [vmem:[%s7 + $0x14] sm:$0xf]
        %v701 = vld [vmem:[%s7 + $0x18] sm:$0xf]
        %v702 = vld [vmem:[%s7 + $0x1c] sm:$0xf]
        %v703 = vld [vmem:[%s7 + $0x20] sm:$0xf]
        %v704 = vld [vmem:[%s7 + $0x24] sm:$0xf]
        %v705 = vld [vmem:[%s7 + $0x28] sm:$0xf]
        %v706 = vld [vmem:[%s7 + $0x2c] sm:$0xf]
        %v707 = vld [vmem:[%s7 + $0x30] sm:$0xf]
        %v708 = vld [vmem:[%s7 + $0x34] sm:$0xf]
        %v709 = vld [vmem:[%s7 + $0x38] sm:$0xf]
        %v710 = vld [vmem:[%s7 + $0x3c] sm:$0xf]
        %v711 = vld [vmem:[%s7 + $0x40] sm:$0xf]
        %v712 = vld [vmem:[%s7 + $0x44] sm:$0xf]
        %v713 = vld [vmem:[%s7 + $0x48] sm:$0xf]
        %v714 = vld [vmem:[%s7 + $0x4c] sm:$0xf]
        %v715 = vld [vmem:[%s7 + $0x50] sm:$0xf]
        %v716 = vld [vmem:[%s7 + $0x54] sm:$0xf]
        %v717 = vld [vmem:[%s7 + $0x58] sm:$0xf]
        %v718 = vld [vmem:[%s7 + $0x5c] sm:$0xf]
        %v719 = vld [vmem:[%s7 + $0x60] sm:$0xf]
        %v720 = vld [vmem:[%s7 + $0x64] sm:$0xf]
        %v721 = vld [vmem:[%s7 + $0x68] sm:$0xf]
        %v722 = vld [vmem:[%s7 + $0x6c] sm:$0xf]
        %v723 = vld [vmem:[%s7 + $0x70] sm:$0xf]
        %v724 = vld [vmem:[%s7 + $0x74] sm:$0xf]
        %v725 = vld [vmem:[%s7 + $0x78] sm:$0xf]
        %v726 = vld [vmem:[%s7 + $0x7c] sm:$0xf]
        %v727 = vld [vmem:[%s8] sm:$0xf]
        %v728 = vld [vmem:[%s8 + $0x4] sm:$0xf]
        %v729 = vld [vmem:[%s8 + $0x8] sm:$0xf]
        %v730 = vld [vmem:[%s8 + $0xc] sm:$0xf]
        %v731 = vld [vmem:[%s8 + $0x10] sm:$0xf]
        %v732 = vld [vmem:[%s8 + $0x14] sm:$0xf]
        %v733 = vld [vmem:[%s8 + $0x18] sm:$0xf]
        %v734 = vld [vmem:[%s8 + $0x1c] sm:$0xf]
        %v735 = vpack.c.bf16 %v612, %v612
        %v736 = vpack.c.bf16 %v613, %v613
        %v741 = vunpack.c.l.b16 %v631
        %v742 = vunpack.c.l.b16 %v632
        %v743 = vunpack.c.l.b16 %v633
        %v744 = vunpack.c.l.b16 %v634
        %v745 = vpack.c.b16 %v742, %v741
        %v746 = vpack.c.b16 %v744, %v743
        %vm749 = vcmask 261120
        %v751 = vsel %vm749, %v735, 0
        %753 = vmatprep.subr.bf16.mxu0 0
        %754 = vmatpush1.bf16.msra.mxu0 %v745
        %755 = vmatprep.subr.bf16.mxu0 0
        %756 = vmatpush1.bf16.msra.mxu0 %v746
        %757 = vmatprep.subr.bf16.mxu0 0
        %758 = vmatpush1.bf16.msra.mxu0 0
        %759 = vmatprep.subr.bf16.mxu0 0
        %760 = vmatpush1.bf16.msra.mxu0 0
        %761 = vmatprep.subr.bf16.mxu0 0
        %762 = vmatpush1.bf16.msra.mxu0 0
        %763 = vmatprep.subr.bf16.mxu0 0
        %764 = vmatpush1.bf16.msra.mxu0 0
        %765 = vmatprep.subr.bf16.mxu0 0
        %766 = vmatpush1.bf16.msra.mxu0 0
        %767 = vmatprep.subr.bf16.mxu0 0
        %768 = vmatpush1.bf16.msra.mxu0 0
        %769 = vmatprep.subr.bf16.mxu0 0
        %770 = vmatpush1.bf16.msra.mxu0 0
        %771 = vmatprep.subr.bf16.mxu0 0
        %772 = vmatpush1.bf16.msra.mxu0 0
        %773 = vmatprep.subr.bf16.mxu0 0
        %774 = vmatpush1.bf16.msra.mxu0 0
        %775 = vmatprep.subr.bf16.mxu0 0
        %776 = vmatpush1.bf16.msra.mxu0 0
        %777 = vmatprep.subr.bf16.mxu0 0
        %778 = vmatpush1.bf16.msra.mxu0 0
        %779 = vmatprep.subr.bf16.mxu0 0
        %780 = vmatpush1.bf16.msra.mxu0 0
        %781 = vmatprep.subr.bf16.mxu0 0
        %782 = vmatpush1.bf16.msra.mxu0 0
        %783 = vmatprep.subr.bf16.mxu0 0
        %784 = vmatpush1.bf16.msra.mxu0 0
        %785 = vmatprep.mubr.bf16.mxu0 0
        %786 = vmatmul.mubr.bf16.gmra.mrb[0].mxu0 %v751
        %v787 = vpop.f32.mrb[0].mxu0
        %v788 = vadd.f32 0.0, %v787
        %v789 = vpop.f32.mrb[0].mxu0
        %v790 = vpop.f32.mrb[0].mxu0
        %v791 = vpop.f32.mrb[0].mxu0
        %792 = vdwg.mxu0
        %v797 = vunpack.c.l.b16 %v635
        %v798 = vunpack.c.l.b16 %v636
        %v799 = vunpack.c.l.b16 %v637
        %v800 = vunpack.c.l.b16 %v638
        %v801 = vpack.c.b16 %v798, %v797
        %v802 = vpack.c.b16 %v800, %v799
        %805 = vmatprep.subr.bf16.mxu0 0
        %806 = vmatpush1.bf16.msra.mxu0 %v801
        %807 = vmatprep.subr.bf16.mxu0 0
        %808 = vmatpush1.bf16.msra.mxu0 %v802
        %809 = vmatprep.subr.bf16.mxu0 0
        %810 = vmatpush1.bf16.msra.mxu0 0
        %811 = vmatprep.subr.bf16.mxu0 0
        %812 = vmatpush1.bf16.msra.mxu0 0
        %813 = vmatprep.subr.bf16.mxu0 0
        %814 = vmatpush1.bf16.msra.mxu0 0
        %815 = vmatprep.subr.bf16.mxu0 0
        %816 = vmatpush1.bf16.msra.mxu0 0
        %817 = vmatprep.subr.bf16.mxu0 0
        %818 = vmatpush1.bf16.msra.mxu0 0
        %819 = vmatprep.subr.bf16.mxu0 0
        %820 = vmatpush1.bf16.msra.mxu0 0
        %821 = vmatprep.subr.bf16.mxu0 0
        %822 = vmatpush1.bf16.msra.mxu0 0
        %823 = vmatprep.subr.bf16.mxu0 0
        %824 = vmatpush1.bf16.msra.mxu0 0
        %825 = vmatprep.subr.bf16.mxu0 0
        %826 = vmatpush1.bf16.msra.mxu0 0
        %827 = vmatprep.subr.bf16.mxu0 0
        %828 = vmatpush1.bf16.msra.mxu0 0
        %829 = vmatprep.subr.bf16.mxu0 0
        %830 = vmatpush1.bf16.msra.mxu0 0
        %831 = vmatprep.subr.bf16.mxu0 0
        %832 = vmatpush1.bf16.msra.mxu0 0
        %833 = vmatprep.subr.bf16.mxu0 0
        %834 = vmatpush1.bf16.msra.mxu0 0
        %835 = vmatprep.subr.bf16.mxu0 0
        %836 = vmatpush1.bf16.msra.mxu0 0
        %837 = vmatprep.mubr.bf16.mxu0 0
        %838 = vmatmul.mubr.bf16.gmra.mrb[0].mxu0 %v751
        %v839 = vpop.f32.mrb[0].mxu0
        %v840 = vadd.f32 0.0, %v839
        %v841 = vpop.f32.mrb[0].mxu0
        %v842 = vpop.f32.mrb[0].mxu0
        %v843 = vpop.f32.mrb[0].mxu0
        %844 = vdwg.mxu0
        %v849 = vunpack.c.l.b16 %v639
        %v850 = vunpack.c.l.b16 %v640
        %v851 = vunpack.c.l.b16 %v641
        %v852 = vunpack.c.l.b16 %v642
        %v853 = vpack.c.b16 %v850, %v849
        %v854 = vpack.c.b16 %v852, %v851
        %857 = vmatprep.subr.bf16.mxu0 0
        %858 = vmatpush1.bf16.msra.mxu0 %v853
        %859 = vmatprep.subr.bf16.mxu0 0
        %860 = vmatpush1.bf16.msra.mxu0 %v854
        %861 = vmatprep.subr.bf16.mxu0 0
        %862 = vmatpush1.bf16.msra.mxu0 0
        %863 = vmatprep.subr.bf16.mxu0 0
        %864 = vmatpush1.bf16.msra.mxu0 0
        %865 = vmatprep.subr.bf16.mxu0 0
        %866 = vmatpush1.bf16.msra.mxu0 0
        %867 = vmatprep.subr.bf16.mxu0 0
        %868 = vmatpush1.bf16.msra.mxu0 0
        %869 = vmatprep.subr.bf16.mxu0 0
        %870 = vmatpush1.bf16.msra.mxu0 0
        %871 = vmatprep.subr.bf16.mxu0 0
        %872 = vmatpush1.bf16.msra.mxu0 0
        %873 = vmatprep.subr.bf16.mxu0 0
        %874 = vmatpush1.bf16.msra.mxu0 0
        %875 = vmatprep.subr.bf16.mxu0 0
        %876 = vmatpush1.bf16.msra.mxu0 0
        %877 = vmatprep.subr.bf16.mxu0 0
        %878 = vmatpush1.bf16.msra.mxu0 0
        %879 = vmatprep.subr.bf16.mxu0 0
        %880 = vmatpush1.bf16.msra.mxu0 0
        %881 = vmatprep.subr.bf16.mxu0 0
        %882 = vmatpush1.bf16.msra.mxu0 0
        %883 = vmatprep.subr.bf16.mxu0 0
        %884 = vmatpush1.bf16.msra.mxu0 0
        %885 = vmatprep.subr.bf16.mxu0 0
        %886 = vmatpush1.bf16.msra.mxu0 0
        %887 = vmatprep.subr.bf16.mxu0 0
        %888 = vmatpush1.bf16.msra.mxu0 0
        %889 = vmatprep.mubr.bf16.mxu0 0
        %890 = vmatmul.mubr.bf16.gmra.mrb[0].mxu0 %v751
        %v891 = vpop.f32.mrb[0].mxu0
        %v892 = vadd.f32 0.0, %v891
        %v893 = vpop.f32.mrb[0].mxu0
        %v894 = vpop.f32.mrb[0].mxu0
        %v895 = vpop.f32.mrb[0].mxu0
        %896 = vdwg.mxu0
        %v901 = vunpack.c.l.b16 %v643
        %v902 = vunpack.c.l.b16 %v644
        %v903 = vunpack.c.l.b16 %v645
        %v904 = vunpack.c.l.b16 %v646
        %v905 = vpack.c.b16 %v902, %v901
        %v906 = vpack.c.b16 %v904, %v903
        %909 = vmatprep.subr.bf16.mxu0 0
        %910 = vmatpush1.bf16.msra.mxu0 %v905
        %911 = vmatprep.subr.bf16.mxu0 0
        %912 = vmatpush1.bf16.msra.mxu0 %v906
        %913 = vmatprep.subr.bf16.mxu0 0
        %914 = vmatpush1.bf16.msra.mxu0 0
        %915 = vmatprep.subr.bf16.mxu0 0
        %916 = vmatpush1.bf16.msra.mxu0 0
        %917 = vmatprep.subr.bf16.mxu0 0
        %918 = vmatpush1.bf16.msra.mxu0 0
        %919 = vmatprep.subr.bf16.mxu0 0
        %920 = vmatpush1.bf16.msra.mxu0 0
        %921 = vmatprep.subr.bf16.mxu0 0
        %922 = vmatpush1.bf16.msra.mxu0 0
        %923 = vmatprep.subr.bf16.mxu0 0
        %924 = vmatpush1.bf16.msra.mxu0 0
        %925 = vmatprep.subr.bf16.mxu0 0
        %926 = vmatpush1.bf16.msra.mxu0 0
        %927 = vmatprep.subr.bf16.mxu0 0
        %928 = vmatpush1.bf16.msra.mxu0 0
        %929 = vmatprep.subr.bf16.mxu0 0
        %930 = vmatpush1.bf16.msra.mxu0 0
        %931 = vmatprep.subr.bf16.mxu0 0
        %932 = vmatpush1.bf16.msra.mxu0 0
        %933 = vmatprep.subr.bf16.mxu0 0
        %934 = vmatpush1.bf16.msra.mxu0 0
        %935 = vmatprep.subr.bf16.mxu0 0
        %936 = vmatpush1.bf16.msra.mxu0 0
        %937 = vmatprep.subr.bf16.mxu0 0
        %938 = vmatpush1.bf16.msra.mxu0 0
        %939 = vmatprep.subr.bf16.mxu0 0
        %940 = vmatpush1.bf16.msra.mxu0 0
        %941 = vmatprep.mubr.bf16.mxu0 0
        %942 = vmatmul.mubr.bf16.gmra.mrb[0].mxu0 %v751
        %v943 = vpop.f32.mrb[0].mxu0
        %v944 = vadd.f32 0.0, %v943
        %v945 = vpop.f32.mrb[0].mxu0
        %v946 = vpop.f32.mrb[0].mxu0
        %v947 = vpop.f32.mrb[0].mxu0
        %948 = vdwg.mxu0
        %v953 = vunpack.c.l.b16 %v647
        %v954 = vunpack.c.l.b16 %v648
        %v955 = vunpack.c.l.b16 %v649
        %v956 = vunpack.c.l.b16 %v650
        %v957 = vpack.c.b16 %v954, %v953
        %v958 = vpack.c.b16 %v956, %v955
        %961 = vmatprep.subr.bf16.mxu0 0
        %962 = vmatpush1.bf16.msra.mxu0 %v957
        %963 = vmatprep.subr.bf16.mxu0 0
        %964 = vmatpush1.bf16.msra.mxu0 %v958
        %965 = vmatprep.subr.bf16.mxu0 0
        %966 = vmatpush1.bf16.msra.mxu0 0
        %967 = vmatprep.subr.bf16.mxu0 0
        %968 = vmatpush1.bf16.msra.mxu0 0
        %969 = vmatprep.subr.bf16.mxu0 0
        %970 = vmatpush1.bf16.msra.mxu0 0
        %971 = vmatprep.subr.bf16.mxu0 0
        %972 = vmatpush1.bf16.msra.mxu0 0
        %973 = vmatprep.subr.bf16.mxu0 0
        %974 = vmatpush1.bf16.msra.mxu0 0
        %975 = vmatprep.subr.bf16.mxu0 0
        %976 = vmatpush1.bf16.msra.mxu0 0
        %977 = vmatprep.subr.bf16.mxu0 0
        %978 = vmatpush1.bf16.msra.mxu0 0
        %979 = vmatprep.subr.bf16.mxu0 0
        %980 = vmatpush1.bf16.msra.mxu0 0
        %981 = vmatprep.subr.bf16.mxu0 0
        %982 = vmatpush1.bf16.msra.mxu0 0
        %983 = vmatprep.subr.bf16.mxu0 0
        %984 = vmatpush1.bf16.msra.mxu0 0
        %985 = vmatprep.subr.bf16.mxu0 0
        %986 = vmatpush1.bf16.msra.mxu0 0
        %987 = vmatprep.subr.bf16.mxu0 0
        %988 = vmatpush1.bf16.msra.mxu0 0
        %989 = vmatprep.subr.bf16.mxu0 0
        %990 = vmatpush1.bf16.msra.mxu0 0
        %991 = vmatprep.subr.bf16.mxu0 0
        %992 = vmatpush1.bf16.msra.mxu0 0
        %993 = vmatprep.mubr.bf16.mxu0 0
        %994 = vmatmul.mubr.bf16.gmra.mrb[0].mxu0 %v751
        %v995 = vpop.f32.mrb[0].mxu0
        %v996 = vadd.f32 0.0, %v995
        %v997 = vpop.f32.mrb[0].mxu0
        %v998 = vpop.f32.mrb[0].mxu0
        %v999 = vpop.f32.mrb[0].mxu0
        %1000 = vdwg.mxu0
        %v1005 = vunpack.c.l.b16 %v651
        %v1006 = vunpack.c.l.b16 %v652
        %v1007 = vunpack.c.l.b16 %v653
        %v1008 = vunpack.c.l.b16 %v654
        %v1009 = vpack.c.b16 %v1006, %v1005
        %v1010 = vpack.c.b16 %v1008, %v1007
        %1013 = vmatprep.subr.bf16.mxu0 0
        %1014 = vmatpush1.bf16.msra.mxu0 %v1009
        %1015 = vmatprep.subr.bf16.mxu0 0
        %1016 = vmatpush1.bf16.msra.mxu0 %v1010
        %1017 = vmatprep.subr.bf16.mxu0 0
        %1018 = vmatpush1.bf16.msra.mxu0 0
        %1019 = vmatprep.subr.bf16.mxu0 0
        %1020 = vmatpush1.bf16.msra.mxu0 0
        %1021 = vmatprep.subr.bf16.mxu0 0
        %1022 = vmatpush1.bf16.msra.mxu0 0
        %1023 = vmatprep.subr.bf16.mxu0 0
        %1024 = vmatpush1.bf16.msra.mxu0 0
        %1025 = vmatprep.subr.bf16.mxu0 0
        %1026 = vmatpush1.bf16.msra.mxu0 0
        %1027 = vmatprep.subr.bf16.mxu0 0
        %1028 = vmatpush1.bf16.msra.mxu0 0
        %1029 = vmatprep.subr.bf16.mxu0 0
        %1030 = vmatpush1.bf16.msra.mxu0 0
        %1031 = vmatprep.subr.bf16.mxu0 0
        %1032 = vmatpush1.bf16.msra.mxu0 0
        %1033 = vmatprep.subr.bf16.mxu0 0
        %1034 = vmatpush1.bf16.msra.mxu0 0
        %1035 = vmatprep.subr.bf16.mxu0 0
        %1036 = vmatpush1.bf16.msra.mxu0 0
        %1037 = vmatprep.subr.bf16.mxu0 0
        %1038 = vmatpush1.bf16.msra.mxu0 0
        %1039 = vmatprep.subr.bf16.mxu0 0
        %1040 = vmatpush1.bf16.msra.mxu0 0
        %1041 = vmatprep.subr.bf16.mxu0 0
        %1042 = vmatpush1.bf16.msra.mxu0 0
        %1043 = vmatprep.subr.bf16.mxu0 0
        %1044 = vmatpush1.bf16.msra.mxu0 0
        %1045 = vmatprep.mubr.bf16.mxu0 0
        %1046 = vmatmul.mubr.bf16.gmra.mrb[0].mxu0 %v751
        %v1047 = vpop.f32.mrb[0].mxu0
        %v1048 = vadd.f32 0.0, %v1047
        %v1049 = vpop.f32.mrb[0].mxu0
        %v1050 = vpop.f32.mrb[0].mxu0
        %v1051 = vpop.f32.mrb[0].mxu0
        %1052 = vdwg.mxu0
        %v1057 = vunpack.c.l.b16 %v655
        %v1058 = vunpack.c.l.b16 %v656
        %v1059 = vunpack.c.l.b16 %v657
        %v1060 = vunpack.c.l.b16 %v658
        %v1061 = vpack.c.b16 %v1058, %v1057
        %v1062 = vpack.c.b16 %v1060, %v1059
        %1065 = vmatprep.subr.bf16.mxu0 0
        %1066 = vmatpush1.bf16.msra.mxu0 %v1061
        %1067 = vmatprep.subr.bf16.mxu0 0
        %1068 = vmatpush1.bf16.msra.mxu0 %v1062
        %1069 = vmatprep.subr.bf16.mxu0 0
        %1070 = vmatpush1.bf16.msra.mxu0 0
        %1071 = vmatprep.subr.bf16.mxu0 0
        %1072 = vmatpush1.bf16.msra.mxu0 0
        %1073 = vmatprep.subr.bf16.mxu0 0
        %1074 = vmatpush1.bf16.msra.mxu0 0
        %1075 = vmatprep.subr.bf16.mxu0 0
        %1076 = vmatpush1.bf16.msra.mxu0 0
        %1077 = vmatprep.subr.bf16.mxu0 0
        %1078 = vmatpush1.bf16.msra.mxu0 0
        %1079 = vmatprep.subr.bf16.mxu0 0
        %1080 = vmatpush1.bf16.msra.mxu0 0
        %1081 = vmatprep.subr.bf16.mxu0 0
        %1082 = vmatpush1.bf16.msra.mxu0 0
        %1083 = vmatprep.subr.bf16.mxu0 0
        %1084 = vmatpush1.bf16.msra.mxu0 0
        %1085 = vmatprep.subr.bf16.mxu0 0
        %1086 = vmatpush1.bf16.msra.mxu0 0
        %1087 = vmatprep.subr.bf16.mxu0 0
        %1088 = vmatpush1.bf16.msra.mxu0 0
        %1089 = vmatprep.subr.bf16.mxu0 0
        %1090 = vmatpush1.bf16.msra.mxu0 0
        %1091 = vmatprep.subr.bf16.mxu0 0
        %1092 = vmatpush1.bf16.msra.mxu0 0
        %1093 = vmatprep.subr.bf16.mxu0 0
        %1094 = vmatpush1.bf16.msra.mxu0 0
        %1095 = vmatprep.subr.bf16.mxu0 0
        %1096 = vmatpush1.bf16.msra.mxu0 0
        %1097 = vmatprep.mubr.bf16.mxu0 0
        %1098 = vmatmul.mubr.bf16.gmra.mrb[0].mxu0 %v751
        %v1099 = vpop.f32.mrb[0].mxu0
        %v1100 = vadd.f32 0.0, %v1099
        %v1101 = vpop.f32.mrb[0].mxu0
        %v1102 = vpop.f32.mrb[0].mxu0
        %v1103 = vpop.f32.mrb[0].mxu0
        %1104 = vdwg.mxu0
        %v1109 = vunpack.c.l.b16 %v659
        %v1110 = vunpack.c.l.b16 %v660
        %v1111 = vunpack.c.l.b16 %v661
        %v1112 = vunpack.c.l.b16 %v662
        %v1113 = vpack.c.b16 %v1110, %v1109
        %v1114 = vpack.c.b16 %v1112, %v1111
        %1117 = vmatprep.subr.bf16.mxu0 0
        %1118 = vmatpush1.bf16.msra.mxu0 %v1113
        %1119 = vmatprep.subr.bf16.mxu0 0
        %1120 = vmatpush1.bf16.msra.mxu0 %v1114
        %1121 = vmatprep.subr.bf16.mxu0 0
        %1122 = vmatpush1.bf16.msra.mxu0 0
        %1123 = vmatprep.subr.bf16.mxu0 0
        %1124 = vmatpush1.bf16.msra.mxu0 0
        %1125 = vmatprep.subr.bf16.mxu0 0
        %1126 = vmatpush1.bf16.msra.mxu0 0
        %1127 = vmatprep.subr.bf16.mxu0 0
        %1128 = vmatpush1.bf16.msra.mxu0 0
        %1129 = vmatprep.subr.bf16.mxu0 0
        %1130 = vmatpush1.bf16.msra.mxu0 0
        %1131 = vmatprep.subr.bf16.mxu0 0
        %1132 = vmatpush1.bf16.msra.mxu0 0
        %1133 = vmatprep.subr.bf16.mxu0 0
        %1134 = vmatpush1.bf16.msra.mxu0 0
        %1135 = vmatprep.subr.bf16.mxu0 0
        %1136 = vmatpush1.bf16.msra.mxu0 0
        %1137 = vmatprep.subr.bf16.mxu0 0
        %1138 = vmatpush1.bf16.msra.mxu0 0
        %1139 = vmatprep.subr.bf16.mxu0 0
        %1140 = vmatpush1.bf16.msra.mxu0 0
        %1141 = vmatprep.subr.bf16.mxu0 0
        %1142 = vmatpush1.bf16.msra.mxu0 0
        %1143 = vmatprep.subr.bf16.mxu0 0
        %1144 = vmatpush1.bf16.msra.mxu0 0
        %1145 = vmatprep.subr.bf16.mxu0 0
        %1146 = vmatpush1.bf16.msra.mxu0 0
        %1147 = vmatprep.subr.bf16.mxu0 0
        %1148 = vmatpush1.bf16.msra.mxu0 0
        %1149 = vmatprep.mubr.bf16.mxu0 0
        %1150 = vmatmul.mubr.bf16.gmra.mrb[0].mxu0 %v751
        %v1151 = vpop.f32.mrb[0].mxu0
        %v1152 = vadd.f32 0.0, %v1151
        %v1153 = vpop.f32.mrb[0].mxu0
        %v1154 = vpop.f32.mrb[0].mxu0
        %v1155 = vpop.f32.mrb[0].mxu0
        %1156 = vdwg.mxu0
        %v1161 = vunpack.c.l.b16 %v663
        %v1162 = vunpack.c.l.b16 %v664
        %v1163 = vunpack.c.l.b16 %v665
        %v1164 = vunpack.c.l.b16 %v666
        %v1165 = vpack.c.b16 %v1162, %v1161
        %v1166 = vpack.c.b16 %v1164, %v1163
        %v1170 = vsel %vm749, %v736, 0
        %1172 = vmatprep.subr.bf16.mxu0 0
        %1173 = vmatpush1.bf16.msra.mxu0 %v1165
        %1174 = vmatprep.subr.bf16.mxu0 0
        %1175 = vmatpush1.bf16.msra.mxu0 %v1166
        %1176 = vmatprep.subr.bf16.mxu0 0
        %1177 = vmatpush1.bf16.msra.mxu0 0
        %1178 = vmatprep.subr.bf16.mxu0 0
        %1179 = vmatpush1.bf16.msra.mxu0 0
        %1180 = vmatprep.subr.bf16.mxu0 0
        %1181 = vmatpush1.bf16.msra.mxu0 0
        %1182 = vmatprep.subr.bf16.mxu0 0
        %1183 = vmatpush1.bf16.msra.mxu0 0
        %1184 = vmatprep.subr.bf16.mxu0 0
        %1185 = vmatpush1.bf16.msra.mxu0 0
        %1186 = vmatprep.subr.bf16.mxu0 0
        %1187 = vmatpush1.bf16.msra.mxu0 0
        %1188 = vmatprep.subr.bf16.mxu0 0
        %1189 = vmatpush1.bf16.msra.mxu0 0
        %1190 = vmatprep.subr.bf16.mxu0 0
        %1191 = vmatpush1.bf16.msra.mxu0 0
        %1192 = vmatprep.subr.bf16.mxu0 0
        %1193 = vmatpush1.bf16.msra.mxu0 0
        %1194 = vmatprep.subr.bf16.mxu0 0
        %1195 = vmatpush1.bf16.msra.mxu0 0
        %1196 = vmatprep.subr.bf16.mxu0 0
        %1197 = vmatpush1.bf16.msra.mxu0 0
        %1198 = vmatprep.subr.bf16.mxu0 0
        %1199 = vmatpush1.bf16.msra.mxu0 0
        %1200 = vmatprep.subr.bf16.mxu0 0
        %1201 = vmatpush1.bf16.msra.mxu0 0
        %1202 = vmatprep.subr.bf16.mxu0 0
        %1203 = vmatpush1.bf16.msra.mxu0 0
        %1204 = vmatprep.mubr.bf16.mxu0 0
        %1205 = vmatmul.mubr.bf16.gmra.mrb[0].mxu0 %v1170
        %v1206 = vpop.f32.mrb[0].mxu0
        %v1207 = vadd.f32 0.0, %v1206
        %v1208 = vpop.f32.mrb[0].mxu0
        %v1209 = vpop.f32.mrb[0].mxu0
        %v1210 = vpop.f32.mrb[0].mxu0
        %1211 = vdwg.mxu0
        %v1216 = vunpack.c.l.b16 %v667
        %v1217 = vunpack.c.l.b16 %v668
        %v1218 = vunpack.c.l.b16 %v669
        %v1219 = vunpack.c.l.b16 %v670
        %v1220 = vpack.c.b16 %v1217, %v1216
        %v1221 = vpack.c.b16 %v1219, %v1218
        %1224 = vmatprep.subr.bf16.mxu0 0
        %1225 = vmatpush1.bf16.msra.mxu0 %v1220
        %1226 = vmatprep.subr.bf16.mxu0 0
        %1227 = vmatpush1.bf16.msra.mxu0 %v1221
        %1228 = vmatprep.subr.bf16.mxu0 0
        %1229 = vmatpush1.bf16.msra.mxu0 0
        %1230 = vmatprep.subr.bf16.mxu0 0
        %1231 = vmatpush1.bf16.msra.mxu0 0
        %1232 = vmatprep.subr.bf16.mxu0 0
        %1233 = vmatpush1.bf16.msra.mxu0 0
        %1234 = vmatprep.subr.bf16.mxu0 0
        %1235 = vmatpush1.bf16.msra.mxu0 0
        %1236 = vmatprep.subr.bf16.mxu0 0
        %1237 = vmatpush1.bf16.msra.mxu0 0
        %1238 = vmatprep.subr.bf16.mxu0 0
        %1239 = vmatpush1.bf16.msra.mxu0 0
        %1240 = vmatprep.subr.bf16.mxu0 0
        %1241 = vmatpush1.bf16.msra.mxu0 0
        %1242 = vmatprep.subr.bf16.mxu0 0
        %1243 = vmatpush1.bf16.msra.mxu0 0
        %1244 = vmatprep.subr.bf16.mxu0 0
        %1245 = vmatpush1.bf16.msra.mxu0 0
        %1246 = vmatprep.subr.bf16.mxu0 0
        %1247 = vmatpush1.bf16.msra.mxu0 0
        %1248 = vmatprep.subr.bf16.mxu0 0
        %1249 = vmatpush1.bf16.msra.mxu0 0
        %1250 = vmatprep.subr.bf16.mxu0 0
        %1251 = vmatpush1.bf16.msra.mxu0 0
        %1252 = vmatprep.subr.bf16.mxu0 0
        %1253 = vmatpush1.bf16.msra.mxu0 0
        %1254 = vmatprep.subr.bf16.mxu0 0
        %1255 = vmatpush1.bf16.msra.mxu0 0
        %1256 = vmatprep.mubr.bf16.mxu0 0
        %1257 = vmatmul.mubr.bf16.gmra.mrb[0].mxu0 %v1170
        %v1258 = vpop.f32.mrb[0].mxu0
        %v1259 = vadd.f32 0.0, %v1258
        %v1260 = vpop.f32.mrb[0].mxu0
        %v1261 = vpop.f32.mrb[0].mxu0
        %v1262 = vpop.f32.mrb[0].mxu0
        %1263 = vdwg.mxu0
        %v1268 = vunpack.c.l.b16 %v671
        %v1269 = vunpack.c.l.b16 %v672
        %v1270 = vunpack.c.l.b16 %v673
        %v1271 = vunpack.c.l.b16 %v674
        %v1272 = vpack.c.b16 %v1269, %v1268
        %v1273 = vpack.c.b16 %v1271, %v1270
        %1276 = vmatprep.subr.bf16.mxu0 0
        %1277 = vmatpush1.bf16.msra.mxu0 %v1272
        %1278 = vmatprep.subr.bf16.mxu0 0
        %1279 = vmatpush1.bf16.msra.mxu0 %v1273
        %1280 = vmatprep.subr.bf16.mxu0 0
        %1281 = vmatpush1.bf16.msra.mxu0 0
        %1282 = vmatprep.subr.bf16.mxu0 0
        %1283 = vmatpush1.bf16.msra.mxu0 0
        %1284 = vmatprep.subr.bf16.mxu0 0
        %1285 = vmatpush1.bf16.msra.mxu0 0
        %1286 = vmatprep.subr.bf16.mxu0 0
        %1287 = vmatpush1.bf16.msra.mxu0 0
        %1288 = vmatprep.subr.bf16.mxu0 0
        %1289 = vmatpush1.bf16.msra.mxu0 0
        %1290 = vmatprep.subr.bf16.mxu0 0
        %1291 = vmatpush1.bf16.msra.mxu0 0
        %1292 = vmatprep.subr.bf16.mxu0 0
        %1293 = vmatpush1.bf16.msra.mxu0 0
        %1294 = vmatprep.subr.bf16.mxu0 0
        %1295 = vmatpush1.bf16.msra.mxu0 0
        %1296 = vmatprep.subr.bf16.mxu0 0
        %1297 = vmatpush1.bf16.msra.mxu0 0
        %1298 = vmatprep.subr.bf16.mxu0 0
        %1299 = vmatpush1.bf16.msra.mxu0 0
        %1300 = vmatprep.subr.bf16.mxu0 0
        %1301 = vmatpush1.bf16.msra.mxu0 0
        %1302 = vmatprep.subr.bf16.mxu0 0
        %1303 = vmatpush1.bf16.msra.mxu0 0
        %1304 = vmatprep.subr.bf16.mxu0 0
        %1305 = vmatpush1.bf16.msra.mxu0 0
        %1306 = vmatprep.subr.bf16.mxu0 0
        %1307 = vmatpush1.bf16.msra.mxu0 0
        %1308 = vmatprep.mubr.bf16.mxu0 0
        %1309 = vmatmul.mubr.bf16.gmra.mrb[0].mxu0 %v1170
        %v1310 = vpop.f32.mrb[0].mxu0
        %v1311 = vadd.f32 0.0, %v1310
        %v1312 = vpop.f32.mrb[0].mxu0
        %v1313 = vpop.f32.mrb[0].mxu0
        %v1314 = vpop.f32.mrb[0].mxu0
        %1315 = vdwg.mxu0
        %v1320 = vunpack.c.l.b16 %v675
        %v1321 = vunpack.c.l.b16 %v676
        %v1322 = vunpack.c.l.b16 %v677
        %v1323 = vunpack.c.l.b16 %v678
        %v1324 = vpack.c.b16 %v1321, %v1320
        %v1325 = vpack.c.b16 %v1323, %v1322
        %1328 = vmatprep.subr.bf16.mxu0 0
        %1329 = vmatpush1.bf16.msra.mxu0 %v1324
        %1330 = vmatprep.subr.bf16.mxu0 0
        %1331 = vmatpush1.bf16.msra.mxu0 %v1325
        %1332 = vmatprep.subr.bf16.mxu0 0
        %1333 = vmatpush1.bf16.msra.mxu0 0
        %1334 = vmatprep.subr.bf16.mxu0 0
        %1335 = vmatpush1.bf16.msra.mxu0 0
        %1336 = vmatprep.subr.bf16.mxu0 0
        %1337 = vmatpush1.bf16.msra.mxu0 0
        %1338 = vmatprep.subr.bf16.mxu0 0
        %1339 = vmatpush1.bf16.msra.mxu0 0
        %1340 = vmatprep.subr.bf16.mxu0 0
        %1341 = vmatpush1.bf16.msra.mxu0 0
        %1342 = vmatprep.subr.bf16.mxu0 0
        %1343 = vmatpush1.bf16.msra.mxu0 0
        %1344 = vmatprep.subr.bf16.mxu0 0
        %1345 = vmatpush1.bf16.msra.mxu0 0
        %1346 = vmatprep.subr.bf16.mxu0 0
        %1347 = vmatpush1.bf16.msra.mxu0 0
        %1348 = vmatprep.subr.bf16.mxu0 0
        %1349 = vmatpush1.bf16.msra.mxu0 0
        %1350 = vmatprep.subr.bf16.mxu0 0
        %1351 = vmatpush1.bf16.msra.mxu0 0
        %1352 = vmatprep.subr.bf16.mxu0 0
        %1353 = vmatpush1.bf16.msra.mxu0 0
        %1354 = vmatprep.subr.bf16.mxu0 0
        %1355 = vmatpush1.bf16.msra.mxu0 0
        %1356 = vmatprep.subr.bf16.mxu0 0
        %1357 = vmatpush1.bf16.msra.mxu0 0
        %1358 = vmatprep.subr.bf16.mxu0 0
        %1359 = vmatpush1.bf16.msra.mxu0 0
        %1360 = vmatprep.mubr.bf16.mxu0 0
        %1361 = vmatmul.mubr.bf16.gmra.mrb[0].mxu0 %v1170
        %v1362 = vpop.f32.mrb[0].mxu0
        %v1363 = vadd.f32 0.0, %v1362
        %v1364 = vpop.f32.mrb[0].mxu0
        %v1365 = vpop.f32.mrb[0].mxu0
        %v1366 = vpop.f32.mrb[0].mxu0
        %1367 = vdwg.mxu0
        %v1372 = vunpack.c.l.b16 %v679
        %v1373 = vunpack.c.l.b16 %v680
        %v1374 = vunpack.c.l.b16 %v681
        %v1375 = vunpack.c.l.b16 %v682
        %v1376 = vpack.c.b16 %v1373, %v1372
        %v1377 = vpack.c.b16 %v1375, %v1374
        %1380 = vmatprep.subr.bf16.mxu0 0
        %1381 = vmatpush1.bf16.msra.mxu0 %v1376
        %1382 = vmatprep.subr.bf16.mxu0 0
        %1383 = vmatpush1.bf16.msra.mxu0 %v1377
        %1384 = vmatprep.subr.bf16.mxu0 0
        %1385 = vmatpush1.bf16.msra.mxu0 0
        %1386 = vmatprep.subr.bf16.mxu0 0
        %1387 = vmatpush1.bf16.msra.mxu0 0
        %1388 = vmatprep.subr.bf16.mxu0 0
        %1389 = vmatpush1.bf16.msra.mxu0 0
        %1390 = vmatprep.subr.bf16.mxu0 0
        %1391 = vmatpush1.bf16.msra.mxu0 0
        %1392 = vmatprep.subr.bf16.mxu0 0
        %1393 = vmatpush1.bf16.msra.mxu0 0
        %1394 = vmatprep.subr.bf16.mxu0 0
        %1395 = vmatpush1.bf16.msra.mxu0 0
        %1396 = vmatprep.subr.bf16.mxu0 0
        %1397 = vmatpush1.bf16.msra.mxu0 0
        %1398 = vmatprep.subr.bf16.mxu0 0
        %1399 = vmatpush1.bf16.msra.mxu0 0
        %1400 = vmatprep.subr.bf16.mxu0 0
        %1401 = vmatpush1.bf16.msra.mxu0 0
        %1402 = vmatprep.subr.bf16.mxu0 0
        %1403 = vmatpush1.bf16.msra.mxu0 0
        %1404 = vmatprep.subr.bf16.mxu0 0
        %1405 = vmatpush1.bf16.msra.mxu0 0
        %1406 = vmatprep.subr.bf16.mxu0 0
        %1407 = vmatpush1.bf16.msra.mxu0 0
        %1408 = vmatprep.subr.bf16.mxu0 0
        %1409 = vmatpush1.bf16.msra.mxu0 0
        %1410 = vmatprep.subr.bf16.mxu0 0
        %1411 = vmatpush1.bf16.msra.mxu0 0
        %1412 = vmatprep.mubr.bf16.mxu0 0
        %1413 = vmatmul.mubr.bf16.gmra.mrb[0].mxu0 %v1170
        %v1414 = vpop.f32.mrb[0].mxu0
        %v1415 = vadd.f32 0.0, %v1414
        %v1416 = vpop.f32.mrb[0].mxu0
        %v1417 = vpop.f32.mrb[0].mxu0
        %v1418 = vpop.f32.mrb[0].mxu0
        %1419 = vdwg.mxu0
        %v1424 = vunpack.c.l.b16 %v683
        %v1425 = vunpack.c.l.b16 %v684
        %v1426 = vunpack.c.l.b16 %v685
        %v1427 = vunpack.c.l.b16 %v686
        %v1428 = vpack.c.b16 %v1425, %v1424
        %v1429 = vpack.c.b16 %v1427, %v1426
        %1432 = vmatprep.subr.bf16.mxu0 0
        %1433 = vmatpush1.bf16.msra.mxu0 %v1428
        %1434 = vmatprep.subr.bf16.mxu0 0
        %1435 = vmatpush1.bf16.msra.mxu0 %v1429
        %1436 = vmatprep.subr.bf16.mxu0 0
        %1437 = vmatpush1.bf16.msra.mxu0 0
        %1438 = vmatprep.subr.bf16.mxu0 0
        %1439 = vmatpush1.bf16.msra.mxu0 0
        %1440 = vmatprep.subr.bf16.mxu0 0
        %1441 = vmatpush1.bf16.msra.mxu0 0
        %1442 = vmatprep.subr.bf16.mxu0 0
        %1443 = vmatpush1.bf16.msra.mxu0 0
        %1444 = vmatprep.subr.bf16.mxu0 0
        %1445 = vmatpush1.bf16.msra.mxu0 0
        %1446 = vmatprep.subr.bf16.mxu0 0
        %1447 = vmatpush1.bf16.msra.mxu0 0
        %1448 = vmatprep.subr.bf16.mxu0 0
        %1449 = vmatpush1.bf16.msra.mxu0 0
        %1450 = vmatprep.subr.bf16.mxu0 0
        %1451 = vmatpush1.bf16.msra.mxu0 0
        %1452 = vmatprep.subr.bf16.mxu0 0
        %1453 = vmatpush1.bf16.msra.mxu0 0
        %1454 = vmatprep.subr.bf16.mxu0 0
        %1455 = vmatpush1.bf16.msra.mxu0 0
        %1456 = vmatprep.subr.bf16.mxu0 0
        %1457 = vmatpush1.bf16.msra.mxu0 0
        %1458 = vmatprep.subr.bf16.mxu0 0
        %1459 = vmatpush1.bf16.msra.mxu0 0
        %1460 = vmatprep.subr.bf16.mxu0 0
        %1461 = vmatpush1.bf16.msra.mxu0 0
        %1462 = vmatprep.subr.bf16.mxu0 0
        %1463 = vmatpush1.bf16.msra.mxu0 0
        %1464 = vmatprep.mubr.bf16.mxu0 0
        %1465 = vmatmul.mubr.bf16.gmra.mrb[0].mxu0 %v1170
        %v1466 = vpop.f32.mrb[0].mxu0
        %v1467 = vadd.f32 0.0, %v1466
        %v1468 = vpop.f32.mrb[0].mxu0
        %v1469 = vpop.f32.mrb[0].mxu0
        %v1470 = vpop.f32.mrb[0].mxu0
        %1471 = vdwg.mxu0
        %v1476 = vunpack.c.l.b16 %v687
        %v1477 = vunpack.c.l.b16 %v688
        %v1478 = vunpack.c.l.b16 %v689
        %v1479 = vunpack.c.l.b16 %v690
        %v1480 = vpack.c.b16 %v1477, %v1476
        %v1481 = vpack.c.b16 %v1479, %v1478
        %1484 = vmatprep.subr.bf16.mxu0 0
        %1485 = vmatpush1.bf16.msra.mxu0 %v1480
        %1486 = vmatprep.subr.bf16.mxu0 0
        %1487 = vmatpush1.bf16.msra.mxu0 %v1481
        %1488 = vmatprep.subr.bf16.mxu0 0
        %1489 = vmatpush1.bf16.msra.mxu0 0
        %1490 = vmatprep.subr.bf16.mxu0 0
        %1491 = vmatpush1.bf16.msra.mxu0 0
        %1492 = vmatprep.subr.bf16.mxu0 0
        %1493 = vmatpush1.bf16.msra.mxu0 0
        %1494 = vmatprep.subr.bf16.mxu0 0
        %1495 = vmatpush1.bf16.msra.mxu0 0
        %1496 = vmatprep.subr.bf16.mxu0 0
        %1497 = vmatpush1.bf16.msra.mxu0 0
        %1498 = vmatprep.subr.bf16.mxu0 0
        %1499 = vmatpush1.bf16.msra.mxu0 0
        %1500 = vmatprep.subr.bf16.mxu0 0
        %1501 = vmatpush1.bf16.msra.mxu0 0
        %1502 = vmatprep.subr.bf16.mxu0 0
        %1503 = vmatpush1.bf16.msra.mxu0 0
        %1504 = vmatprep.subr.bf16.mxu0 0
        %1505 = vmatpush1.bf16.msra.mxu0 0
        %1506 = vmatprep.subr.bf16.mxu0 0
        %1507 = vmatpush1.bf16.msra.mxu0 0
        %1508 = vmatprep.subr.bf16.mxu0 0
        %1509 = vmatpush1.bf16.msra.mxu0 0
        %1510 = vmatprep.subr.bf16.mxu0 0
        %1511 = vmatpush1.bf16.msra.mxu0 0
        %1512 = vmatprep.subr.bf16.mxu0 0
        %1513 = vmatpush1.bf16.msra.mxu0 0
        %1514 = vmatprep.subr.bf16.mxu0 0
        %1515 = vmatpush1.bf16.msra.mxu0 0
        %1516 = vmatprep.mubr.bf16.mxu0 0
        %1517 = vmatmul.mubr.bf16.gmra.mrb[0].mxu0 %v1170
        %v1518 = vpop.f32.mrb[0].mxu0
        %v1519 = vadd.f32 0.0, %v1518
        %v1520 = vpop.f32.mrb[0].mxu0
        %v1521 = vpop.f32.mrb[0].mxu0
        %v1522 = vpop.f32.mrb[0].mxu0
        %1523 = vdwg.mxu0
        %v1528 = vunpack.c.l.b16 %v691
        %v1529 = vunpack.c.l.b16 %v692
        %v1530 = vunpack.c.l.b16 %v693
        %v1531 = vunpack.c.l.b16 %v694
        %v1532 = vpack.c.b16 %v1529, %v1528
        %v1533 = vpack.c.b16 %v1531, %v1530
        %1536 = vmatprep.subr.bf16.mxu0 0
        %1537 = vmatpush1.bf16.msra.mxu0 %v1532
        %1538 = vmatprep.subr.bf16.mxu0 0
        %1539 = vmatpush1.bf16.msra.mxu0 %v1533
        %1540 = vmatprep.subr.bf16.mxu0 0
        %1541 = vmatpush1.bf16.msra.mxu0 0
        %1542 = vmatprep.subr.bf16.mxu0 0
        %1543 = vmatpush1.bf16.msra.mxu0 0
        %1544 = vmatprep.subr.bf16.mxu0 0
        %1545 = vmatpush1.bf16.msra.mxu0 0
        %1546 = vmatprep.subr.bf16.mxu0 0
        %1547 = vmatpush1.bf16.msra.mxu0 0
        %1548 = vmatprep.subr.bf16.mxu0 0
        %1549 = vmatpush1.bf16.msra.mxu0 0
        %1550 = vmatprep.subr.bf16.mxu0 0
        %1551 = vmatpush1.bf16.msra.mxu0 0
        %1552 = vmatprep.subr.bf16.mxu0 0
        %1553 = vmatpush1.bf16.msra.mxu0 0
        %1554 = vmatprep.subr.bf16.mxu0 0
        %1555 = vmatpush1.bf16.msra.mxu0 0
        %1556 = vmatprep.subr.bf16.mxu0 0
        %1557 = vmatpush1.bf16.msra.mxu0 0
        %1558 = vmatprep.subr.bf16.mxu0 0
        %1559 = vmatpush1.bf16.msra.mxu0 0
        %1560 = vmatprep.subr.bf16.mxu0 0
        %1561 = vmatpush1.bf16.msra.mxu0 0
        %1562 = vmatprep.subr.bf16.mxu0 0
        %1563 = vmatpush1.bf16.msra.mxu0 0
        %1564 = vmatprep.subr.bf16.mxu0 0
        %1565 = vmatpush1.bf16.msra.mxu0 0
        %1566 = vmatprep.subr.bf16.mxu0 0
        %1567 = vmatpush1.bf16.msra.mxu0 0
        %1568 = vmatprep.mubr.bf16.mxu0 0
        %1569 = vmatmul.mubr.bf16.gmra.mrb[0].mxu0 %v1170
        %v1570 = vpop.f32.mrb[0].mxu0
        %v1571 = vadd.f32 0.0, %v1570
        %v1572 = vpop.f32.mrb[0].mxu0
        %v1573 = vpop.f32.mrb[0].mxu0
        %v1574 = vpop.f32.mrb[0].mxu0
        %1575 = vdwg.mxu0
        %v1580 = vunpack.c.l.b16 %v695
        %v1581 = vunpack.c.l.b16 %v696
        %v1582 = vunpack.c.l.b16 %v697
        %v1583 = vunpack.c.l.b16 %v698
        %v1584 = vpack.c.b16 %v1581, %v1580
        %v1585 = vpack.c.b16 %v1583, %v1582
        %1588 = vmatprep.subr.bf16.mxu0 0
        %1589 = vmatpush1.bf16.msra.mxu0 %v1584
        %1590 = vmatprep.subr.bf16.mxu0 0
        %1591 = vmatpush1.bf16.msra.mxu0 %v1585
        %1592 = vmatprep.subr.bf16.mxu0 0
        %1593 = vmatpush1.bf16.msra.mxu0 0
        %1594 = vmatprep.subr.bf16.mxu0 0
        %1595 = vmatpush1.bf16.msra.mxu0 0
        %1596 = vmatprep.subr.bf16.mxu0 0
        %1597 = vmatpush1.bf16.msra.mxu0 0
        %1598 = vmatprep.subr.bf16.mxu0 0
        %1599 = vmatpush1.bf16.msra.mxu0 0
        %1600 = vmatprep.subr.bf16.mxu0 0
        %1601 = vmatpush1.bf16.msra.mxu0 0
        %1602 = vmatprep.subr.bf16.mxu0 0
        %1603 = vmatpush1.bf16.msra.mxu0 0
        %1604 = vmatprep.subr.bf16.mxu0 0
        %1605 = vmatpush1.bf16.msra.mxu0 0
        %1606 = vmatprep.subr.bf16.mxu0 0
        %1607 = vmatpush1.bf16.msra.mxu0 0
        %1608 = vmatprep.subr.bf16.mxu0 0
        %1609 = vmatpush1.bf16.msra.mxu0 0
        %1610 = vmatprep.subr.bf16.mxu0 0
        %1611 = vmatpush1.bf16.msra.mxu0 0
        %1612 = vmatprep.subr.bf16.mxu0 0
        %1613 = vmatpush1.bf16.msra.mxu0 0
        %1614 = vmatprep.subr.bf16.mxu0 0
        %1615 = vmatpush1.bf16.msra.mxu0 0
        %1616 = vmatprep.subr.bf16.mxu0 0
        %1617 = vmatpush1.bf16.msra.mxu0 0
        %1618 = vmatprep.subr.bf16.mxu0 0
        %1619 = vmatpush1.bf16.msra.mxu0 0
        %1620 = vmatprep.mubr.bf16.mxu0 0
        %1621 = vmatmul.mubr.bf16.gmra.mrb[0].mxu0 %v1170
        %v1622 = vpop.f32.mrb[0].mxu0
        %v1623 = vadd.f32 0.0, %v1622
        %v1624 = vpop.f32.mrb[0].mxu0
        %v1625 = vpop.f32.mrb[0].mxu0
        %v1626 = vpop.f32.mrb[0].mxu0
        %1627 = vdwg.mxu0
        %v1632 = vunpack.c.l.b16 %v699
        %v1633 = vunpack.c.l.b16 %v700
        %v1634 = vunpack.c.l.b16 %v701
        %v1635 = vunpack.c.l.b16 %v702
        %v1636 = vpack.c.b16 %v1633, %v1632
        %v1637 = vpack.c.b16 %v1635, %v1634
        %1640 = vmatprep.subr.bf16.mxu0 0
        %1641 = vmatpush1.bf16.msra.mxu0 %v1636
        %1642 = vmatprep.subr.bf16.mxu0 0
        %1643 = vmatpush1.bf16.msra.mxu0 %v1637
        %1644 = vmatprep.subr.bf16.mxu0 0
        %1645 = vmatpush1.bf16.msra.mxu0 0
        %1646 = vmatprep.subr.bf16.mxu0 0
        %1647 = vmatpush1.bf16.msra.mxu0 0
        %1648 = vmatprep.subr.bf16.mxu0 0
        %1649 = vmatpush1.bf16.msra.mxu0 0
        %1650 = vmatprep.subr.bf16.mxu0 0
        %1651 = vmatpush1.bf16.msra.mxu0 0
        %1652 = vmatprep.subr.bf16.mxu0 0
        %1653 = vmatpush1.bf16.msra.mxu0 0
        %1654 = vmatprep.subr.bf16.mxu0 0
        %1655 = vmatpush1.bf16.msra.mxu0 0
        %1656 = vmatprep.subr.bf16.mxu0 0
        %1657 = vmatpush1.bf16.msra.mxu0 0
        %1658 = vmatprep.subr.bf16.mxu0 0
        %1659 = vmatpush1.bf16.msra.mxu0 0
        %1660 = vmatprep.subr.bf16.mxu0 0
        %1661 = vmatpush1.bf16.msra.mxu0 0
        %1662 = vmatprep.subr.bf16.mxu0 0
        %1663 = vmatpush1.bf16.msra.mxu0 0
        %1664 = vmatprep.subr.bf16.mxu0 0
        %1665 = vmatpush1.bf16.msra.mxu0 0
        %1666 = vmatprep.subr.bf16.mxu0 0
        %1667 = vmatpush1.bf16.msra.mxu0 0
        %1668 = vmatprep.subr.bf16.mxu0 0
        %1669 = vmatpush1.bf16.msra.mxu0 0
        %1670 = vmatprep.subr.bf16.mxu0 0
        %1671 = vmatpush1.bf16.msra.mxu0 0
        %1672 = vmatprep.mubr.bf16.mxu0 0
        %1673 = vmatmul.mubr.bf16.gmra.mrb[0].mxu0 %v1170
        %v1674 = vpop.f32.mrb[0].mxu0
        %v1675 = vadd.f32 0.0, %v1674
        %v1676 = vpop.f32.mrb[0].mxu0
        %v1677 = vpop.f32.mrb[0].mxu0
        %v1678 = vpop.f32.mrb[0].mxu0
        %1679 = vdwg.mxu0
        %v1684 = vunpack.c.l.b16 %v703
        %v1685 = vunpack.c.l.b16 %v704
        %v1686 = vunpack.c.l.b16 %v705
        %v1687 = vunpack.c.l.b16 %v706
        %v1688 = vpack.c.b16 %v1685, %v1684
        %v1689 = vpack.c.b16 %v1687, %v1686
        %1692 = vmatprep.subr.bf16.mxu0 0
        %1693 = vmatpush1.bf16.msra.mxu0 %v1688
        %1694 = vmatprep.subr.bf16.mxu0 0
        %1695 = vmatpush1.bf16.msra.mxu0 %v1689
        %1696 = vmatprep.subr.bf16.mxu0 0
        %1697 = vmatpush1.bf16.msra.mxu0 0
        %1698 = vmatprep.subr.bf16.mxu0 0
        %1699 = vmatpush1.bf16.msra.mxu0 0
        %1700 = vmatprep.subr.bf16.mxu0 0
        %1701 = vmatpush1.bf16.msra.mxu0 0
        %1702 = vmatprep.subr.bf16.mxu0 0
        %1703 = vmatpush1.bf16.msra.mxu0 0
        %1704 = vmatprep.subr.bf16.mxu0 0
        %1705 = vmatpush1.bf16.msra.mxu0 0
        %1706 = vmatprep.subr.bf16.mxu0 0
        %1707 = vmatpush1.bf16.msra.mxu0 0
        %1708 = vmatprep.subr.bf16.mxu0 0
        %1709 = vmatpush1.bf16.msra.mxu0 0
        %1710 = vmatprep.subr.bf16.mxu0 0
        %1711 = vmatpush1.bf16.msra.mxu0 0
        %1712 = vmatprep.subr.bf16.mxu0 0
        %1713 = vmatpush1.bf16.msra.mxu0 0
        %1714 = vmatprep.subr.bf16.mxu0 0
        %1715 = vmatpush1.bf16.msra.mxu0 0
        %1716 = vmatprep.subr.bf16.mxu0 0
        %1717 = vmatpush1.bf16.msra.mxu0 0
        %1718 = vmatprep.subr.bf16.mxu0 0
        %1719 = vmatpush1.bf16.msra.mxu0 0
        %1720 = vmatprep.subr.bf16.mxu0 0
        %1721 = vmatpush1.bf16.msra.mxu0 0
        %1722 = vmatprep.subr.bf16.mxu0 0
        %1723 = vmatpush1.bf16.msra.mxu0 0
        %1724 = vmatprep.mubr.bf16.mxu0 0
        %1725 = vmatmul.mubr.bf16.gmra.mrb[0].mxu0 %v1170
        %v1726 = vpop.f32.mrb[0].mxu0
        %v1727 = vadd.f32 0.0, %v1726
        %v1728 = vpop.f32.mrb[0].mxu0
        %v1729 = vpop.f32.mrb[0].mxu0
        %v1730 = vpop.f32.mrb[0].mxu0
        %1731 = vdwg.mxu0
        %v1736 = vunpack.c.l.b16 %v707
        %v1737 = vunpack.c.l.b16 %v708
        %v1738 = vunpack.c.l.b16 %v709
        %v1739 = vunpack.c.l.b16 %v710
        %v1740 = vpack.c.b16 %v1737, %v1736
        %v1741 = vpack.c.b16 %v1739, %v1738
        %1744 = vmatprep.subr.bf16.mxu0 0
        %1745 = vmatpush1.bf16.msra.mxu0 %v1740
        %1746 = vmatprep.subr.bf16.mxu0 0
        %1747 = vmatpush1.bf16.msra.mxu0 %v1741
        %1748 = vmatprep.subr.bf16.mxu0 0
        %1749 = vmatpush1.bf16.msra.mxu0 0
        %1750 = vmatprep.subr.bf16.mxu0 0
        %1751 = vmatpush1.bf16.msra.mxu0 0
        %1752 = vmatprep.subr.bf16.mxu0 0
        %1753 = vmatpush1.bf16.msra.mxu0 0
        %1754 = vmatprep.subr.bf16.mxu0 0
        %1755 = vmatpush1.bf16.msra.mxu0 0
        %1756 = vmatprep.subr.bf16.mxu0 0
        %1757 = vmatpush1.bf16.msra.mxu0 0
        %1758 = vmatprep.subr.bf16.mxu0 0
        %1759 = vmatpush1.bf16.msra.mxu0 0
        %1760 = vmatprep.subr.bf16.mxu0 0
        %1761 = vmatpush1.bf16.msra.mxu0 0
        %1762 = vmatprep.subr.bf16.mxu0 0
        %1763 = vmatpush1.bf16.msra.mxu0 0
        %1764 = vmatprep.subr.bf16.mxu0 0
        %1765 = vmatpush1.bf16.msra.mxu0 0
        %1766 = vmatprep.subr.bf16.mxu0 0
        %1767 = vmatpush1.bf16.msra.mxu0 0
        %1768 = vmatprep.subr.bf16.mxu0 0
        %1769 = vmatpush1.bf16.msra.mxu0 0
        %1770 = vmatprep.subr.bf16.mxu0 0
        %1771 = vmatpush1.bf16.msra.mxu0 0
        %1772 = vmatprep.subr.bf16.mxu0 0
        %1773 = vmatpush1.bf16.msra.mxu0 0
        %1774 = vmatprep.subr.bf16.mxu0 0
        %1775 = vmatpush1.bf16.msra.mxu0 0
        %1776 = vmatprep.mubr.bf16.mxu0 0
        %1777 = vmatmul.mubr.bf16.gmra.mrb[0].mxu0 %v1170
        %v1778 = vpop.f32.mrb[0].mxu0
        %v1779 = vadd.f32 0.0, %v1778
        %v1780 = vpop.f32.mrb[0].mxu0
        %v1781 = vpop.f32.mrb[0].mxu0
        %v1782 = vpop.f32.mrb[0].mxu0
        %1783 = vdwg.mxu0
        %v1788 = vunpack.c.l.b16 %v711
        %v1789 = vunpack.c.l.b16 %v712
        %v1790 = vunpack.c.l.b16 %v713
        %v1791 = vunpack.c.l.b16 %v714
        %v1792 = vpack.c.b16 %v1789, %v1788
        %v1793 = vpack.c.b16 %v1791, %v1790
        %1796 = vmatprep.subr.bf16.mxu0 0
        %1797 = vmatpush1.bf16.msra.mxu0 %v1792
        %1798 = vmatprep.subr.bf16.mxu0 0
        %1799 = vmatpush1.bf16.msra.mxu0 %v1793
        %1800 = vmatprep.subr.bf16.mxu0 0
        %1801 = vmatpush1.bf16.msra.mxu0 0
        %1802 = vmatprep.subr.bf16.mxu0 0
        %1803 = vmatpush1.bf16.msra.mxu0 0
        %1804 = vmatprep.subr.bf16.mxu0 0
        %1805 = vmatpush1.bf16.msra.mxu0 0
        %1806 = vmatprep.subr.bf16.mxu0 0
        %1807 = vmatpush1.bf16.msra.mxu0 0
        %1808 = vmatprep.subr.bf16.mxu0 0
        %1809 = vmatpush1.bf16.msra.mxu0 0
        %1810 = vmatprep.subr.bf16.mxu0 0
        %1811 = vmatpush1.bf16.msra.mxu0 0
        %1812 = vmatprep.subr.bf16.mxu0 0
        %1813 = vmatpush1.bf16.msra.mxu0 0
        %1814 = vmatprep.subr.bf16.mxu0 0
        %1815 = vmatpush1.bf16.msra.mxu0 0
        %1816 = vmatprep.subr.bf16.mxu0 0
        %1817 = vmatpush1.bf16.msra.mxu0 0
        %1818 = vmatprep.subr.bf16.mxu0 0
        %1819 = vmatpush1.bf16.msra.mxu0 0
        %1820 = vmatprep.subr.bf16.mxu0 0
        %1821 = vmatpush1.bf16.msra.mxu0 0
        %1822 = vmatprep.subr.bf16.mxu0 0
        %1823 = vmatpush1.bf16.msra.mxu0 0
        %1824 = vmatprep.subr.bf16.mxu0 0
        %1825 = vmatpush1.bf16.msra.mxu0 0
        %1826 = vmatprep.subr.bf16.mxu0 0
        %1827 = vmatpush1.bf16.msra.mxu0 0
        %1828 = vmatprep.mubr.bf16.mxu0 0
        %1829 = vmatmul.mubr.bf16.gmra.mrb[0].mxu0 %v1170
        %v1830 = vpop.f32.mrb[0].mxu0
        %v1831 = vadd.f32 0.0, %v1830
        %v1832 = vpop.f32.mrb[0].mxu0
        %v1833 = vpop.f32.mrb[0].mxu0
        %v1834 = vpop.f32.mrb[0].mxu0
        %1835 = vdwg.mxu0
        %v1840 = vunpack.c.l.b16 %v715
        %v1841 = vunpack.c.l.b16 %v716
        %v1842 = vunpack.c.l.b16 %v717
        %v1843 = vunpack.c.l.b16 %v718
        %v1844 = vpack.c.b16 %v1841, %v1840
        %v1845 = vpack.c.b16 %v1843, %v1842
        %1848 = vmatprep.subr.bf16.mxu0 0
        %1849 = vmatpush1.bf16.msra.mxu0 %v1844
        %1850 = vmatprep.subr.bf16.mxu0 0
        %1851 = vmatpush1.bf16.msra.mxu0 %v1845
        %1852 = vmatprep.subr.bf16.mxu0 0
        %1853 = vmatpush1.bf16.msra.mxu0 0
        %1854 = vmatprep.subr.bf16.mxu0 0
        %1855 = vmatpush1.bf16.msra.mxu0 0
        %1856 = vmatprep.subr.bf16.mxu0 0
        %1857 = vmatpush1.bf16.msra.mxu0 0
        %1858 = vmatprep.subr.bf16.mxu0 0
        %1859 = vmatpush1.bf16.msra.mxu0 0
        %1860 = vmatprep.subr.bf16.mxu0 0
        %1861 = vmatpush1.bf16.msra.mxu0 0
        %1862 = vmatprep.subr.bf16.mxu0 0
        %1863 = vmatpush1.bf16.msra.mxu0 0
        %1864 = vmatprep.subr.bf16.mxu0 0
        %1865 = vmatpush1.bf16.msra.mxu0 0
        %1866 = vmatprep.subr.bf16.mxu0 0
        %1867 = vmatpush1.bf16.msra.mxu0 0
        %1868 = vmatprep.subr.bf16.mxu0 0
        %1869 = vmatpush1.bf16.msra.mxu0 0
        %1870 = vmatprep.subr.bf16.mxu0 0
        %1871 = vmatpush1.bf16.msra.mxu0 0
        %1872 = vmatprep.subr.bf16.mxu0 0
        %1873 = vmatpush1.bf16.msra.mxu0 0
        %1874 = vmatprep.subr.bf16.mxu0 0
        %1875 = vmatpush1.bf16.msra.mxu0 0
        %1876 = vmatprep.subr.bf16.mxu0 0
        %1877 = vmatpush1.bf16.msra.mxu0 0
        %1878 = vmatprep.subr.bf16.mxu0 0
        %1879 = vmatpush1.bf16.msra.mxu0 0
        %1880 = vmatprep.mubr.bf16.mxu0 0
        %1881 = vmatmul.mubr.bf16.gmra.mrb[0].mxu0 %v1170
        %v1882 = vpop.f32.mrb[0].mxu0
        %v1883 = vadd.f32 0.0, %v1882
        %v1884 = vpop.f32.mrb[0].mxu0
        %v1885 = vpop.f32.mrb[0].mxu0
        %v1886 = vpop.f32.mrb[0].mxu0
        %1887 = vdwg.mxu0
        %v1892 = vunpack.c.l.b16 %v719
        %v1893 = vunpack.c.l.b16 %v720
        %v1894 = vunpack.c.l.b16 %v721
        %v1895 = vunpack.c.l.b16 %v722
        %v1896 = vpack.c.b16 %v1893, %v1892
        %v1897 = vpack.c.b16 %v1895, %v1894
        %1900 = vmatprep.subr.bf16.mxu0 0
        %1901 = vmatpush1.bf16.msra.mxu0 %v1896
        %1902 = vmatprep.subr.bf16.mxu0 0
        %1903 = vmatpush1.bf16.msra.mxu0 %v1897
        %1904 = vmatprep.subr.bf16.mxu0 0
        %1905 = vmatpush1.bf16.msra.mxu0 0
        %1906 = vmatprep.subr.bf16.mxu0 0
        %1907 = vmatpush1.bf16.msra.mxu0 0
        %1908 = vmatprep.subr.bf16.mxu0 0
        %1909 = vmatpush1.bf16.msra.mxu0 0
        %1910 = vmatprep.subr.bf16.mxu0 0
        %1911 = vmatpush1.bf16.msra.mxu0 0
        %1912 = vmatprep.subr.bf16.mxu0 0
        %1913 = vmatpush1.bf16.msra.mxu0 0
        %1914 = vmatprep.subr.bf16.mxu0 0
        %1915 = vmatpush1.bf16.msra.mxu0 0
        %1916 = vmatprep.subr.bf16.mxu0 0
        %1917 = vmatpush1.bf16.msra.mxu0 0
        %1918 = vmatprep.subr.bf16.mxu0 0
        %1919 = vmatpush1.bf16.msra.mxu0 0
        %1920 = vmatprep.subr.bf16.mxu0 0
        %1921 = vmatpush1.bf16.msra.mxu0 0
        %1922 = vmatprep.subr.bf16.mxu0 0
        %1923 = vmatpush1.bf16.msra.mxu0 0
        %1924 = vmatprep.subr.bf16.mxu0 0
        %1925 = vmatpush1.bf16.msra.mxu0 0
        %1926 = vmatprep.subr.bf16.mxu0 0
        %1927 = vmatpush1.bf16.msra.mxu0 0
        %1928 = vmatprep.subr.bf16.mxu0 0
        %1929 = vmatpush1.bf16.msra.mxu0 0
        %1930 = vmatprep.subr.bf16.mxu0 0
        %1931 = vmatpush1.bf16.msra.mxu0 0
        %1932 = vmatprep.mubr.bf16.mxu0 0
        %1933 = vmatmul.mubr.bf16.gmra.mrb[0].mxu0 %v1170
        %v1934 = vpop.f32.mrb[0].mxu0
        %v1935 = vadd.f32 0.0, %v1934
        %v1936 = vpop.f32.mrb[0].mxu0
        %v1937 = vpop.f32.mrb[0].mxu0
        %v1938 = vpop.f32.mrb[0].mxu0
        %1939 = vdwg.mxu0
        %v1944 = vunpack.c.l.b16 %v723
        %v1945 = vunpack.c.l.b16 %v724
        %v1946 = vunpack.c.l.b16 %v725
        %v1947 = vunpack.c.l.b16 %v726
        %v1948 = vpack.c.b16 %v1945, %v1944
        %v1949 = vpack.c.b16 %v1947, %v1946
        %1952 = vmatprep.subr.bf16.mxu0 0
        %1953 = vmatpush1.bf16.msra.mxu0 %v1948
        %1954 = vmatprep.subr.bf16.mxu0 0
        %1955 = vmatpush1.bf16.msra.mxu0 %v1949
        %1956 = vmatprep.subr.bf16.mxu0 0
        %1957 = vmatpush1.bf16.msra.mxu0 0
        %1958 = vmatprep.subr.bf16.mxu0 0
        %1959 = vmatpush1.bf16.msra.mxu0 0
        %1960 = vmatprep.subr.bf16.mxu0 0
        %1961 = vmatpush1.bf16.msra.mxu0 0
        %1962 = vmatprep.subr.bf16.mxu0 0
        %1963 = vmatpush1.bf16.msra.mxu0 0
        %1964 = vmatprep.subr.bf16.mxu0 0
        %1965 = vmatpush1.bf16.msra.mxu0 0
        %1966 = vmatprep.subr.bf16.mxu0 0
        %1967 = vmatpush1.bf16.msra.mxu0 0
        %1968 = vmatprep.subr.bf16.mxu0 0
        %1969 = vmatpush1.bf16.msra.mxu0 0
        %1970 = vmatprep.subr.bf16.mxu0 0
        %1971 = vmatpush1.bf16.msra.mxu0 0
        %1972 = vmatprep.subr.bf16.mxu0 0
        %1973 = vmatpush1.bf16.msra.mxu0 0
        %1974 = vmatprep.subr.bf16.mxu0 0
        %1975 = vmatpush1.bf16.msra.mxu0 0
        %1976 = vmatprep.subr.bf16.mxu0 0
        %1977 = vmatpush1.bf16.msra.mxu0 0
        %1978 = vmatprep.subr.bf16.mxu0 0
        %1979 = vmatpush1.bf16.msra.mxu0 0
        %1980 = vmatprep.subr.bf16.mxu0 0
        %1981 = vmatpush1.bf16.msra.mxu0 0
        %1982 = vmatprep.subr.bf16.mxu0 0
        %1983 = vmatpush1.bf16.msra.mxu0 0
        %1984 = vmatprep.mubr.bf16.mxu0 0
        %1985 = vmatmul.mubr.bf16.gmra.mrb[0].mxu0 %v1170
        %v1986 = vpop.f32.mrb[0].mxu0
        %v1987 = vadd.f32 0.0, %v1986
        %v1988 = vpop.f32.mrb[0].mxu0
        %v1989 = vpop.f32.mrb[0].mxu0
        %v1990 = vpop.f32.mrb[0].mxu0
        %1991 = vdwg.mxu0
        %v1992 = vpack.c.bf16 %v788, %v788
        %v1993 = vpack.c.bf16 %v840, %v840
        %v1994 = vpack.c.bf16 %v892, %v892
        %v1995 = vpack.c.bf16 %v944, %v944
        %v1996 = vpack.c.bf16 %v996, %v996
        %v1997 = vpack.c.bf16 %v1048, %v1048
        %v1998 = vpack.c.bf16 %v1100, %v1100
        %v1999 = vpack.c.bf16 %v1152, %v1152
        %v2000 = vpack.c.bf16 %v1207, %v1207
        %v2001 = vpack.c.bf16 %v1259, %v1259
        %v2002 = vpack.c.bf16 %v1311, %v1311
        %v2003 = vpack.c.bf16 %v1363, %v1363
        %v2004 = vpack.c.bf16 %v1415, %v1415
        %v2005 = vpack.c.bf16 %v1467, %v1467
        %v2006 = vpack.c.bf16 %v1519, %v1519
        %v2007 = vpack.c.bf16 %v1571, %v1571
        %vm2008 = vcmask 64512
        %v2010 = vsel %vm2008, %v1992, 0
        %v2013 = vsel %vm2008, %v2000, 0
        %2015 = vmatprep.subr.bf16.mxu0 0
        %2016 = vmatpush1.bf16.xpose.msra.mxu0 %v2013
        %2017 = vmatprep.subr.bf16.mxu0 0
        %2018 = vmatpush1.bf16.xpose.msra.mxu0 0
        %2019 = vmatprep.subr.bf16.mxu0 0
        %2020 = vmatpush1.bf16.xpose.msra.mxu0 0
        %2021 = vmatprep.subr.bf16.mxu0 0
        %2022 = vmatpush1.bf16.xpose.msra.mxu0 0
        %2023 = vmatprep.subr.bf16.mxu0 0
        %2024 = vmatpush1.bf16.xpose.msra.mxu0 0
        %2025 = vmatprep.subr.bf16.mxu0 0
        %2026 = vmatpush1.bf16.xpose.msra.mxu0 0
        %2027 = vmatprep.subr.bf16.mxu0 0
        %2028 = vmatpush1.bf16.xpose.msra.mxu0 0
        %2029 = vmatprep.subr.bf16.mxu0 0
        %2030 = vmatpush1.bf16.xpose.msra.mxu0 0
        %2031 = vmatprep.subr.bf16.mxu0 0
        %2032 = vmatpush1.bf16.xpose.msra.mxu0 0
        %2033 = vmatprep.subr.bf16.mxu0 0
        %2034 = vmatpush1.bf16.xpose.msra.mxu0 0
        %2035 = vmatprep.subr.bf16.mxu0 0
        %2036 = vmatpush1.bf16.xpose.msra.mxu0 0
        %2037 = vmatprep.subr.bf16.mxu0 0
        %2038 = vmatpush1.bf16.xpose.msra.mxu0 0
        %2039 = vmatprep.subr.bf16.mxu0 0
        %2040 = vmatpush1.bf16.xpose.msra.mxu0 0
        %2041 = vmatprep.subr.bf16.mxu0 0
        %2042 = vmatpush1.bf16.xpose.msra.mxu0 0
        %2043 = vmatprep.subr.bf16.mxu0 0
        %2044 = vmatpush1.bf16.xpose.msra.mxu0 0
        %2045 = vmatprep.subr.bf16.mxu0 0
        %2046 = vmatpush1.bf16.xpose.msra.mxu0 0
        %2047 = vmatprep.mubr.bf16.mxu0 0
        %2048 = vmatmul.mubr.bf16.gmra.mrb[0].mxu0 %v2010
        %v2049 = vpop.f32.mrb[0].mxu0
        %v2050 = vadd.f32 0.0, %v2049
        %v2051 = vpop.f32.mrb[0].mxu0
        %v2052 = vpop.f32.mrb[0].mxu0
        %v2053 = vpop.f32.mrb[0].mxu0
        %2054 = vdwg.mxu0
        %v2056 = vsel %vm2008, %v1993, 0
        %v2059 = vsel %vm2008, %v2001, 0
        %2061 = vmatprep.subr.bf16.mxu0 0
        %2062 = vmatpush1.bf16.xpose.msra.mxu0 %v2059
        %2063 = vmatprep.subr.bf16.mxu0 0
        %2064 = vmatpush1.bf16.xpose.msra.mxu0 0
        %2065 = vmatprep.subr.bf16.mxu0 0
        %2066 = vmatpush1.bf16.xpose.msra.mxu0 0
        %2067 = vmatprep.subr.bf16.mxu0 0
        %2068 = vmatpush1.bf16.xpose.msra.mxu0 0
        %2069 = vmatprep.subr.bf16.mxu0 0
        %2070 = vmatpush1.bf16.xpose.msra.mxu0 0
        %2071 = vmatprep.subr.bf16.mxu0 0
        %2072 = vmatpush1.bf16.xpose.msra.mxu0 0
        %2073 = vmatprep.subr.bf16.mxu0 0
        %2074 = vmatpush1.bf16.xpose.msra.mxu0 0
        %2075 = vmatprep.subr.bf16.mxu0 0
        %2076 = vmatpush1.bf16.xpose.msra.mxu0 0
        %2077 = vmatprep.subr.bf16.mxu0 0
        %2078 = vmatpush1.bf16.xpose.msra.mxu0 0
        %2079 = vmatprep.subr.bf16.mxu0 0
        %2080 = vmatpush1.bf16.xpose.msra.mxu0 0
        %2081 = vmatprep.subr.bf16.mxu0 0
        %2082 = vmatpush1.bf16.xpose.msra.mxu0 0
        %2083 = vmatprep.subr.bf16.mxu0 0
        %2084 = vmatpush1.bf16.xpose.msra.mxu0 0
        %2085 = vmatprep.subr.bf16.mxu0 0
        %2086 = vmatpush1.bf16.xpose.msra.mxu0 0
        %2087 = vmatprep.subr.bf16.mxu0 0
        %2088 = vmatpush1.bf16.xpose.msra.mxu0 0
        %2089 = vmatprep.subr.bf16.mxu0 0
        %2090 = vmatpush1.bf16.xpose.msra.mxu0 0
        %2091 = vmatprep.subr.bf16.mxu0 0
        %2092 = vmatpush1.bf16.xpose.msra.mxu0 0
        %2093 = vmatprep.mubr.bf16.mxu0 0
        %2094 = vmatmul.mubr.bf16.gmra.mrb[0].mxu0 %v2056
        %v2095 = vpop.f32.mrb[0].mxu0
        %v2096 = vadd.f32 0.0, %v2095
        %v2097 = vpop.f32.mrb[0].mxu0
        %v2098 = vpop.f32.mrb[0].mxu0
        %v2099 = vpop.f32.mrb[0].mxu0
        %2100 = vdwg.mxu0
        %v2102 = vsel %vm2008, %v1994, 0
        %v2105 = vsel %vm2008, %v2002, 0
        %2107 = vmatprep.subr.bf16.mxu0 0
        %2108 = vmatpush1.bf16.xpose.msra.mxu0 %v2105
        %2109 = vmatprep.subr.bf16.mxu0 0
        %2110 = vmatpush1.bf16.xpose.msra.mxu0 0
        %2111 = vmatprep.subr.bf16.mxu0 0
        %2112 = vmatpush1.bf16.xpose.msra.mxu0 0
        %2113 = vmatprep.subr.bf16.mxu0 0
        %2114 = vmatpush1.bf16.xpose.msra.mxu0 0
        %2115 = vmatprep.subr.bf16.mxu0 0
        %2116 = vmatpush1.bf16.xpose.msra.mxu0 0
        %2117 = vmatprep.subr.bf16.mxu0 0
        %2118 = vmatpush1.bf16.xpose.msra.mxu0 0
        %2119 = vmatprep.subr.bf16.mxu0 0
        %2120 = vmatpush1.bf16.xpose.msra.mxu0 0
        %2121 = vmatprep.subr.bf16.mxu0 0
        %2122 = vmatpush1.bf16.xpose.msra.mxu0 0
        %2123 = vmatprep.subr.bf16.mxu0 0
        %2124 = vmatpush1.bf16.xpose.msra.mxu0 0
        %2125 = vmatprep.subr.bf16.mxu0 0
        %2126 = vmatpush1.bf16.xpose.msra.mxu0 0
        %2127 = vmatprep.subr.bf16.mxu0 0
        %2128 = vmatpush1.bf16.xpose.msra.mxu0 0
        %2129 = vmatprep.subr.bf16.mxu0 0
        %2130 = vmatpush1.bf16.xpose.msra.mxu0 0
        %2131 = vmatprep.subr.bf16.mxu0 0
        %2132 = vmatpush1.bf16.xpose.msra.mxu0 0
        %2133 = vmatprep.subr.bf16.mxu0 0
        %2134 = vmatpush1.bf16.xpose.msra.mxu0 0
        %2135 = vmatprep.subr.bf16.mxu0 0
        %2136 = vmatpush1.bf16.xpose.msra.mxu0 0
        %2137 = vmatprep.subr.bf16.mxu0 0
        %2138 = vmatpush1.bf16.xpose.msra.mxu0 0
        %2139 = vmatprep.mubr.bf16.mxu0 0
        %2140 = vmatmul.mubr.bf16.gmra.mrb[0].mxu0 %v2102
        %v2141 = vpop.f32.mrb[0].mxu0
        %v2142 = vadd.f32 0.0, %v2141
        %v2143 = vpop.f32.mrb[0].mxu0
        %v2144 = vpop.f32.mrb[0].mxu0
        %v2145 = vpop.f32.mrb[0].mxu0
        %2146 = vdwg.mxu0
        %v2148 = vsel %vm2008, %v1995, 0
        %v2151 = vsel %vm2008, %v2003, 0
        %2153 = vmatprep.subr.bf16.mxu0 0
        %2154 = vmatpush1.bf16.xpose.msra.mxu0 %v2151
        %2155 = vmatprep.subr.bf16.mxu0 0
        %2156 = vmatpush1.bf16.xpose.msra.mxu0 0
        %2157 = vmatprep.subr.bf16.mxu0 0
        %2158 = vmatpush1.bf16.xpose.msra.mxu0 0
        %2159 = vmatprep.subr.bf16.mxu0 0
        %2160 = vmatpush1.bf16.xpose.msra.mxu0 0
        %2161 = vmatprep.subr.bf16.mxu0 0
        %2162 = vmatpush1.bf16.xpose.msra.mxu0 0
        %2163 = vmatprep.subr.bf16.mxu0 0
        %2164 = vmatpush1.bf16.xpose.msra.mxu0 0
        %2165 = vmatprep.subr.bf16.mxu0 0
        %2166 = vmatpush1.bf16.xpose.msra.mxu0 0
        %2167 = vmatprep.subr.bf16.mxu0 0
        %2168 = vmatpush1.bf16.xpose.msra.mxu0 0
        %2169 = vmatprep.subr.bf16.mxu0 0
        %2170 = vmatpush1.bf16.xpose.msra.mxu0 0
        %2171 = vmatprep.subr.bf16.mxu0 0
        %2172 = vmatpush1.bf16.xpose.msra.mxu0 0
        %2173 = vmatprep.subr.bf16.mxu0 0
        %2174 = vmatpush1.bf16.xpose.msra.mxu0 0
        %2175 = vmatprep.subr.bf16.mxu0 0
        %2176 = vmatpush1.bf16.xpose.msra.mxu0 0
        %2177 = vmatprep.subr.bf16.mxu0 0
        %2178 = vmatpush1.bf16.xpose.msra.mxu0 0
        %2179 = vmatprep.subr.bf16.mxu0 0
        %2180 = vmatpush1.bf16.xpose.msra.mxu0 0
        %2181 = vmatprep.subr.bf16.mxu0 0
        %2182 = vmatpush1.bf16.xpose.msra.mxu0 0
        %2183 = vmatprep.subr.bf16.mxu0 0
        %2184 = vmatpush1.bf16.xpose.msra.mxu0 0
        %2185 = vmatprep.mubr.bf16.mxu0 0
        %2186 = vmatmul.mubr.bf16.gmra.mrb[0].mxu0 %v2148
        %v2187 = vpop.f32.mrb[0].mxu0
        %v2188 = vadd.f32 0.0, %v2187
        %v2189 = vpop.f32.mrb[0].mxu0
        %v2190 = vpop.f32.mrb[0].mxu0
        %v2191 = vpop.f32.mrb[0].mxu0
        %2192 = vdwg.mxu0
        %v2194 = vsel %vm2008, %v1996, 0
        %v2197 = vsel %vm2008, %v2004, 0
        %2199 = vmatprep.subr.bf16.mxu0 0
        %2200 = vmatpush1.bf16.xpose.msra.mxu0 %v2197
        %2201 = vmatprep.subr.bf16.mxu0 0
        %2202 = vmatpush1.bf16.xpose.msra.mxu0 0
        %2203 = vmatprep.subr.bf16.mxu0 0
        %2204 = vmatpush1.bf16.xpose.msra.mxu0 0
        %2205 = vmatprep.subr.bf16.mxu0 0
        %2206 = vmatpush1.bf16.xpose.msra.mxu0 0
        %2207 = vmatprep.subr.bf16.mxu0 0
        %2208 = vmatpush1.bf16.xpose.msra.mxu0 0
        %2209 = vmatprep.subr.bf16.mxu0 0
        %2210 = vmatpush1.bf16.xpose.msra.mxu0 0
        %2211 = vmatprep.subr.bf16.mxu0 0
        %2212 = vmatpush1.bf16.xpose.msra.mxu0 0
        %2213 = vmatprep.subr.bf16.mxu0 0
        %2214 = vmatpush1.bf16.xpose.msra.mxu0 0
        %2215 = vmatprep.subr.bf16.mxu0 0
        %2216 = vmatpush1.bf16.xpose.msra.mxu0 0
        %2217 = vmatprep.subr.bf16.mxu0 0
        %2218 = vmatpush1.bf16.xpose.msra.mxu0 0
        %2219 = vmatprep.subr.bf16.mxu0 0
        %2220 = vmatpush1.bf16.xpose.msra.mxu0 0
        %2221 = vmatprep.subr.bf16.mxu0 0
        %2222 = vmatpush1.bf16.xpose.msra.mxu0 0
        %2223 = vmatprep.subr.bf16.mxu0 0
        %2224 = vmatpush1.bf16.xpose.msra.mxu0 0
        %2225 = vmatprep.subr.bf16.mxu0 0
        %2226 = vmatpush1.bf16.xpose.msra.mxu0 0
        %2227 = vmatprep.subr.bf16.mxu0 0
        %2228 = vmatpush1.bf16.xpose.msra.mxu0 0
        %2229 = vmatprep.subr.bf16.mxu0 0
        %2230 = vmatpush1.bf16.xpose.msra.mxu0 0
        %2231 = vmatprep.mubr.bf16.mxu0 0
        %2232 = vmatmul.mubr.bf16.gmra.mrb[0].mxu0 %v2194
        %v2233 = vpop.f32.mrb[0].mxu0
        %v2234 = vadd.f32 0.0, %v2233
        %v2235 = vpop.f32.mrb[0].mxu0
        %v2236 = vpop.f32.mrb[0].mxu0
        %v2237 = vpop.f32.mrb[0].mxu0
        %2238 = vdwg.mxu0
        %v2240 = vsel %vm2008, %v1997, 0
        %v2243 = vsel %vm2008, %v2005, 0
        %2245 = vmatprep.subr.bf16.mxu0 0
        %2246 = vmatpush1.bf16.xpose.msra.mxu0 %v2243
        %2247 = vmatprep.subr.bf16.mxu0 0
        %2248 = vmatpush1.bf16.xpose.msra.mxu0 0
        %2249 = vmatprep.subr.bf16.mxu0 0
        %2250 = vmatpush1.bf16.xpose.msra.mxu0 0
        %2251 = vmatprep.subr.bf16.mxu0 0
        %2252 = vmatpush1.bf16.xpose.msra.mxu0 0
        %2253 = vmatprep.subr.bf16.mxu0 0
        %2254 = vmatpush1.bf16.xpose.msra.mxu0 0
        %2255 = vmatprep.subr.bf16.mxu0 0
        %2256 = vmatpush1.bf16.xpose.msra.mxu0 0
        %2257 = vmatprep.subr.bf16.mxu0 0
        %2258 = vmatpush1.bf16.xpose.msra.mxu0 0
        %2259 = vmatprep.subr.bf16.mxu0 0
        %2260 = vmatpush1.bf16.xpose.msra.mxu0 0
        %2261 = vmatprep.subr.bf16.mxu0 0
        %2262 = vmatpush1.bf16.xpose.msra.mxu0 0
        %2263 = vmatprep.subr.bf16.mxu0 0
        %2264 = vmatpush1.bf16.xpose.msra.mxu0 0
        %2265 = vmatprep.subr.bf16.mxu0 0
        %2266 = vmatpush1.bf16.xpose.msra.mxu0 0
        %2267 = vmatprep.subr.bf16.mxu0 0
        %2268 = vmatpush1.bf16.xpose.msra.mxu0 0
        %2269 = vmatprep.subr.bf16.mxu0 0
        %2270 = vmatpush1.bf16.xpose.msra.mxu0 0
        %2271 = vmatprep.subr.bf16.mxu0 0
        %2272 = vmatpush1.bf16.xpose.msra.mxu0 0
        %2273 = vmatprep.subr.bf16.mxu0 0
        %2274 = vmatpush1.bf16.xpose.msra.mxu0 0
        %2275 = vmatprep.subr.bf16.mxu0 0
        %2276 = vmatpush1.bf16.xpose.msra.mxu0 0
        %2277 = vmatprep.mubr.bf16.mxu0 0
        %2278 = vmatmul.mubr.bf16.gmra.mrb[0].mxu0 %v2240
        %v2279 = vpop.f32.mrb[0].mxu0
        %v2280 = vadd.f32 0.0, %v2279
        %v2281 = vpop.f32.mrb[0].mxu0
        %v2282 = vpop.f32.mrb[0].mxu0
        %v2283 = vpop.f32.mrb[0].mxu0
        %2284 = vdwg.mxu0
        %v2286 = vsel %vm2008, %v1998, 0
        %v2289 = vsel %vm2008, %v2006, 0
        %2291 = vmatprep.subr.bf16.mxu0 0
        %2292 = vmatpush1.bf16.xpose.msra.mxu0 %v2289
        %2293 = vmatprep.subr.bf16.mxu0 0
        %2294 = vmatpush1.bf16.xpose.msra.mxu0 0
        %2295 = vmatprep.subr.bf16.mxu0 0
        %2296 = vmatpush1.bf16.xpose.msra.mxu0 0
        %2297 = vmatprep.subr.bf16.mxu0 0
        %2298 = vmatpush1.bf16.xpose.msra.mxu0 0
        %2299 = vmatprep.subr.bf16.mxu0 0
        %2300 = vmatpush1.bf16.xpose.msra.mxu0 0
        %2301 = vmatprep.subr.bf16.mxu0 0
        %2302 = vmatpush1.bf16.xpose.msra.mxu0 0
        %2303 = vmatprep.subr.bf16.mxu0 0
        %2304 = vmatpush1.bf16.xpose.msra.mxu0 0
        %2305 = vmatprep.subr.bf16.mxu0 0
        %2306 = vmatpush1.bf16.xpose.msra.mxu0 0
        %2307 = vmatprep.subr.bf16.mxu0 0
        %2308 = vmatpush1.bf16.xpose.msra.mxu0 0
        %2309 = vmatprep.subr.bf16.mxu0 0
        %2310 = vmatpush1.bf16.xpose.msra.mxu0 0
        %2311 = vmatprep.subr.bf16.mxu0 0
        %2312 = vmatpush1.bf16.xpose.msra.mxu0 0
        %2313 = vmatprep.subr.bf16.mxu0 0
        %2314 = vmatpush1.bf16.xpose.msra.mxu0 0
        %2315 = vmatprep.subr.bf16.mxu0 0
        %2316 = vmatpush1.bf16.xpose.msra.mxu0 0
        %2317 = vmatprep.subr.bf16.mxu0 0
        %2318 = vmatpush1.bf16.xpose.msra.mxu0 0
        %2319 = vmatprep.subr.bf16.mxu0 0
        %2320 = vmatpush1.bf16.xpose.msra.mxu0 0
        %2321 = vmatprep.subr.bf16.mxu0 0
        %2322 = vmatpush1.bf16.xpose.msra.mxu0 0
        %2323 = vmatprep.mubr.bf16.mxu0 0
        %2324 = vmatmul.mubr.bf16.gmra.mrb[0].mxu0 %v2286
        %v2325 = vpop.f32.mrb[0].mxu0
        %v2326 = vadd.f32 0.0, %v2325
        %v2327 = vpop.f32.mrb[0].mxu0
        %v2328 = vpop.f32.mrb[0].mxu0
        %v2329 = vpop.f32.mrb[0].mxu0
        %2330 = vdwg.mxu0
        %v2332 = vsel %vm2008, %v1999, 0
        %v2335 = vsel %vm2008, %v2007, 0
        %2337 = vmatprep.subr.bf16.mxu0 0
        %2338 = vmatpush1.bf16.xpose.msra.mxu0 %v2335
        %2339 = vmatprep.subr.bf16.mxu0 0
        %2340 = vmatpush1.bf16.xpose.msra.mxu0 0
        %2341 = vmatprep.subr.bf16.mxu0 0
        %2342 = vmatpush1.bf16.xpose.msra.mxu0 0
        %2343 = vmatprep.subr.bf16.mxu0 0
        %2344 = vmatpush1.bf16.xpose.msra.mxu0 0
        %2345 = vmatprep.subr.bf16.mxu0 0
        %2346 = vmatpush1.bf16.xpose.msra.mxu0 0
        %2347 = vmatprep.subr.bf16.mxu0 0
        %2348 = vmatpush1.bf16.xpose.msra.mxu0 0
        %2349 = vmatprep.subr.bf16.mxu0 0
        %2350 = vmatpush1.bf16.xpose.msra.mxu0 0
        %2351 = vmatprep.subr.bf16.mxu0 0
        %2352 = vmatpush1.bf16.xpose.msra.mxu0 0
        %2353 = vmatprep.subr.bf16.mxu0 0
        %2354 = vmatpush1.bf16.xpose.msra.mxu0 0
        %2355 = vmatprep.subr.bf16.mxu0 0
        %2356 = vmatpush1.bf16.xpose.msra.mxu0 0
        %2357 = vmatprep.subr.bf16.mxu0 0
        %2358 = vmatpush1.bf16.xpose.msra.mxu0 0
        %2359 = vmatprep.subr.bf16.mxu0 0
        %2360 = vmatpush1.bf16.xpose.msra.mxu0 0
        %2361 = vmatprep.subr.bf16.mxu0 0
        %2362 = vmatpush1.bf16.xpose.msra.mxu0 0
        %2363 = vmatprep.subr.bf16.mxu0 0
        %2364 = vmatpush1.bf16.xpose.msra.mxu0 0
        %2365 = vmatprep.subr.bf16.mxu0 0
        %2366 = vmatpush1.bf16.xpose.msra.mxu0 0
        %2367 = vmatprep.subr.bf16.mxu0 0
        %2368 = vmatpush1.bf16.xpose.msra.mxu0 0
        %2369 = vmatprep.mubr.bf16.mxu0 0
        %2370 = vmatmul.mubr.bf16.gmra.mrb[0].mxu0 %v2332
        %v2371 = vpop.f32.mrb[0].mxu0
        %v2372 = vadd.f32 0.0, %v2371
        %v2373 = vpop.f32.mrb[0].mxu0
        %v2374 = vpop.f32.mrb[0].mxu0
        %v2375 = vpop.f32.mrb[0].mxu0
        %2376 = vdwg.mxu0
        %v2377 = vmul.f32 %v2050, 0.35355338
        %v2378 = vmul.f32 %v2096, 0.35355338
        %v2379 = vmul.f32 %v2142, 0.35355338
        %v2380 = vmul.f32 %v2188, 0.35355338
        %v2381 = vmul.f32 %v2234, 0.35355338
        %v2382 = vmul.f32 %v2280, 0.35355338
        %v2383 = vmul.f32 %v2326, 0.35355338
        %v2384 = vmul.f32 %v2372, 0.35355338
        %vm2385 = vcmp.ne.f32.partialorder %v615, 0.0
        %vm2386 = vcmp.ne.f32.partialorder %v616, 0.0
        %vm2387 = vcmp.ne.f32.partialorder %v617, 0.0
        %vm2388 = vcmp.ne.f32.partialorder %v618, 0.0
        %vm2389 = vcmp.ne.f32.partialorder %v619, 0.0
        %vm2390 = vcmp.ne.f32.partialorder %v620, 0.0
        %vm2391 = vcmp.ne.f32.partialorder %v621, 0.0
        %vm2392 = vcmp.ne.f32.partialorder %v622, 0.0
        %v2393 = vsel %vm2385, -1e+09, %v2377
        %v2394 = vsel %vm2386, -1e+09, %v2378
        %v2395 = vsel %vm2387, -1e+09, %v2379
        %v2396 = vsel %vm2388, -1e+09, %v2380
        %v2397 = vsel %vm2389, -1e+09, %v2381
        %v2398 = vsel %vm2390, -1e+09, %v2382
        %v2399 = vsel %vm2391, -1e+09, %v2383
        %v2400 = vsel %vm2392, -1e+09, %v2384
        %v2401 = vsel %vm2008, %v2393, -inf
        %2402 = vmax.xlane.f32.xlu0 %v2401
        %v2403 = vpop.xlane.xlu0 %2402
        %v2404 = vsel %vm2008, %v2394, -inf
        %2405 = vmax.xlane.f32.xlu0 %v2404
        %v2406 = vpop.xlane.xlu0 %2405
        %v2407 = vsel %vm2008, %v2395, -inf
        %2408 = vmax.xlane.f32.xlu0 %v2407
        %v2409 = vpop.xlane.xlu0 %2408
        %v2410 = vsel %vm2008, %v2396, -inf
        %2411 = vmax.xlane.f32.xlu0 %v2410
        %v2412 = vpop.xlane.xlu0 %2411
        %v2413 = vsel %vm2008, %v2397, -inf
        %2414 = vmax.xlane.f32.xlu0 %v2413
        %v2415 = vpop.xlane.xlu0 %2414
        %v2416 = vsel %vm2008, %v2398, -inf
        %2417 = vmax.xlane.f32.xlu0 %v2416
        %v2418 = vpop.xlane.xlu0 %2417
        %v2419 = vsel %vm2008, %v2399, -inf
        %2420 = vmax.xlane.f32.xlu0 %v2419
        %v2421 = vpop.xlane.xlu0 %2420
        %v2422 = vsel %vm2008, %v2400, -inf
        %2423 = vmax.xlane.f32.xlu0 %v2422
        %v2424 = vpop.xlane.xlu0 %2423
        %v2425 = vsub.f32 %v2393, %v2403
        %v2426 = vsub.f32 %v2394, %v2406
        %v2427 = vsub.f32 %v2395, %v2409
        %v2428 = vsub.f32 %v2396, %v2412
        %v2429 = vsub.f32 %v2397, %v2415
        %v2430 = vsub.f32 %v2398, %v2418
        %v2431 = vsub.f32 %v2399, %v2421
        %v2432 = vsub.f32 %v2400, %v2424
        %v2433 = vmul.f32 %v2425, 1.442695
        %v2434 = vpow.pop %v2433
        %v2435 = vmul.f32 %v2426, 1.442695
        %v2436 = vpow.pop %v2435
        %v2437 = vmul.f32 %v2427, 1.442695
        %v2438 = vpow.pop %v2437
        %v2439 = vmul.f32 %v2428, 1.442695
        %v2440 = vpow.pop %v2439
        %v2441 = vmul.f32 %v2429, 1.442695
        %v2442 = vpow.pop %v2441
        %v2443 = vmul.f32 %v2430, 1.442695
        %v2444 = vpow.pop %v2443
        %v2445 = vmul.f32 %v2431, 1.442695
        %v2446 = vpow.pop %v2445
        %v2447 = vmul.f32 %v2432, 1.442695
        %v2448 = vpow.pop %v2447
        %v2449 = vsel %vm2008, %v2434, 0.0
        %2450 = vadd.xlane.f32.xlu0 %v2449
        %v2451 = vpop.xlane.xlu0 %2450
        %v2452 = vsel %vm2008, %v2436, 0.0
        %2453 = vadd.xlane.f32.xlu0 %v2452
        %v2454 = vpop.xlane.xlu0 %2453
        %v2455 = vsel %vm2008, %v2438, 0.0
        %2456 = vadd.xlane.f32.xlu0 %v2455
        %v2457 = vpop.xlane.xlu0 %2456
        %v2458 = vsel %vm2008, %v2440, 0.0
        %2459 = vadd.xlane.f32.xlu0 %v2458
        %v2460 = vpop.xlane.xlu0 %2459
        %v2461 = vsel %vm2008, %v2442, 0.0
        %2462 = vadd.xlane.f32.xlu0 %v2461
        %v2463 = vpop.xlane.xlu0 %2462
        %v2464 = vsel %vm2008, %v2444, 0.0
        %2465 = vadd.xlane.f32.xlu0 %v2464
        %v2466 = vpop.xlane.xlu0 %2465
        %v2467 = vsel %vm2008, %v2446, 0.0
        %2468 = vadd.xlane.f32.xlu0 %v2467
        %v2469 = vpop.xlane.xlu0 %2468
        %v2470 = vsel %vm2008, %v2448, 0.0
        %2471 = vadd.xlane.f32.xlu0 %v2470
        %v2472 = vpop.xlane.xlu0 %2471
        %v2473 = vrcp.pop %v2451
        %v2474 = vrcp.pop %v2454
        %v2475 = vrcp.pop %v2457
        %v2476 = vrcp.pop %v2460
        %v2477 = vrcp.pop %v2463
        %v2478 = vrcp.pop %v2466
        %v2479 = vrcp.pop %v2469
        %v2480 = vrcp.pop %v2472
        %v2481 = vmul.f32 %v2434, %v2473
        %v2482 = vmul.f32 %v2436, %v2474
        %v2483 = vmul.f32 %v2438, %v2475
        %v2484 = vmul.f32 %v2440, %v2476
        %v2485 = vmul.f32 %v2442, %v2477
        %v2486 = vmul.f32 %v2444, %v2478
        %v2487 = vmul.f32 %v2446, %v2479
        %v2488 = vmul.f32 %v2448, %v2480
        %v2489 = vpack.c.bf16 %v2481, %v2481
        %v2490 = vpack.c.bf16 %v2482, %v2482
        %v2491 = vpack.c.bf16 %v2483, %v2483
        %v2492 = vpack.c.bf16 %v2484, %v2484
        %v2493 = vpack.c.bf16 %v2485, %v2485
        %v2494 = vpack.c.bf16 %v2486, %v2486
        %v2495 = vpack.c.bf16 %v2487, %v2487
        %v2496 = vpack.c.bf16 %v2488, %v2488
        %v2497 = vpack.c.bf16 %v1623, %v1623
        %v2498 = vpack.c.bf16 %v1675, %v1675
        %v2499 = vpack.c.bf16 %v1727, %v1727
        %v2500 = vpack.c.bf16 %v1779, %v1779
        %v2501 = vpack.c.bf16 %v1831, %v1831
        %v2502 = vpack.c.bf16 %v1883, %v1883
        %v2503 = vpack.c.bf16 %v1935, %v1935
        %v2504 = vpack.c.bf16 %v1987, %v1987
        %v2506 = vsel %vm2008, %v2489, 0
        %vm2508 = vcmask 1043456
        %v2510 = vsel %vm2508, %v2497, 0
        %2512 = vmatprep.subr.bf16.mxu0 0
        %2513 = vmatpush1.bf16.msra.mxu0 %v2510
        %2514 = vmatprep.subr.bf16.mxu0 0
        %2515 = vmatpush1.bf16.msra.mxu0 0
        %2516 = vmatprep.subr.bf16.mxu0 0
        %2517 = vmatpush1.bf16.msra.mxu0 0
        %2518 = vmatprep.subr.bf16.mxu0 0
        %2519 = vmatpush1.bf16.msra.mxu0 0
        %2520 = vmatprep.subr.bf16.mxu0 0
        %2521 = vmatpush1.bf16.msra.mxu0 0
        %2522 = vmatprep.subr.bf16.mxu0 0
        %2523 = vmatpush1.bf16.msra.mxu0 0
        %2524 = vmatprep.subr.bf16.mxu0 0
        %2525 = vmatpush1.bf16.msra.mxu0 0
        %2526 = vmatprep.subr.bf16.mxu0 0
        %2527 = vmatpush1.bf16.msra.mxu0 0
        %2528 = vmatprep.subr.bf16.mxu0 0
        %2529 = vmatpush1.bf16.msra.mxu0 0
        %2530 = vmatprep.subr.bf16.mxu0 0
        %2531 = vmatpush1.bf16.msra.mxu0 0
        %2532 = vmatprep.subr.bf16.mxu0 0
        %2533 = vmatpush1.bf16.msra.mxu0 0
        %2534 = vmatprep.subr.bf16.mxu0 0
        %2535 = vmatpush1.bf16.msra.mxu0 0
        %2536 = vmatprep.subr.bf16.mxu0 0
        %2537 = vmatpush1.bf16.msra.mxu0 0
        %2538 = vmatprep.subr.bf16.mxu0 0
        %2539 = vmatpush1.bf16.msra.mxu0 0
        %2540 = vmatprep.subr.bf16.mxu0 0
        %2541 = vmatpush1.bf16.msra.mxu0 0
        %2542 = vmatprep.subr.bf16.mxu0 0
        %2543 = vmatpush1.bf16.msra.mxu0 0
        %2544 = vmatprep.mubr.bf16.mxu0 0
        %2545 = vmatmul.mubr.bf16.gmra.mrb[0].mxu0 %v2506
        %v2546 = vpop.f32.mrb[0].mxu0
        %v2547 = vadd.f32 0.0, %v2546
        %v2548 = vpop.f32.mrb[0].mxu0
        %v2549 = vpop.f32.mrb[0].mxu0
        %v2550 = vpop.f32.mrb[0].mxu0
        %2551 = vdwg.mxu0
        %v2553 = vsel %vm2008, %v2490, 0
        %v2556 = vsel %vm2508, %v2498, 0
        %2558 = vmatprep.subr.bf16.mxu0 0
        %2559 = vmatpush1.bf16.msra.mxu0 %v2556
        %2560 = vmatprep.subr.bf16.mxu0 0
        %2561 = vmatpush1.bf16.msra.mxu0 0
        %2562 = vmatprep.subr.bf16.mxu0 0
        %2563 = vmatpush1.bf16.msra.mxu0 0
        %2564 = vmatprep.subr.bf16.mxu0 0
        %2565 = vmatpush1.bf16.msra.mxu0 0
        %2566 = vmatprep.subr.bf16.mxu0 0
        %2567 = vmatpush1.bf16.msra.mxu0 0
        %2568 = vmatprep.subr.bf16.mxu0 0
        %2569 = vmatpush1.bf16.msra.mxu0 0
        %2570 = vmatprep.subr.bf16.mxu0 0
        %2571 = vmatpush1.bf16.msra.mxu0 0
        %2572 = vmatprep.subr.bf16.mxu0 0
        %2573 = vmatpush1.bf16.msra.mxu0 0
        %2574 = vmatprep.subr.bf16.mxu0 0
        %2575 = vmatpush1.bf16.msra.mxu0 0
        %2576 = vmatprep.subr.bf16.mxu0 0
        %2577 = vmatpush1.bf16.msra.mxu0 0
        %2578 = vmatprep.subr.bf16.mxu0 0
        %2579 = vmatpush1.bf16.msra.mxu0 0
        %2580 = vmatprep.subr.bf16.mxu0 0
        %2581 = vmatpush1.bf16.msra.mxu0 0
        %2582 = vmatprep.subr.bf16.mxu0 0
        %2583 = vmatpush1.bf16.msra.mxu0 0
        %2584 = vmatprep.subr.bf16.mxu0 0
        %2585 = vmatpush1.bf16.msra.mxu0 0
        %2586 = vmatprep.subr.bf16.mxu0 0
        %2587 = vmatpush1.bf16.msra.mxu0 0
        %2588 = vmatprep.subr.bf16.mxu0 0
        %2589 = vmatpush1.bf16.msra.mxu0 0
        %2590 = vmatprep.mubr.bf16.mxu0 0
        %2591 = vmatmul.mubr.bf16.gmra.mrb[0].mxu0 %v2553
        %v2592 = vpop.f32.mrb[0].mxu0
        %v2593 = vadd.f32 0.0, %v2592
        %v2594 = vpop.f32.mrb[0].mxu0
        %v2595 = vpop.f32.mrb[0].mxu0
        %v2596 = vpop.f32.mrb[0].mxu0
        %2597 = vdwg.mxu0
        %v2599 = vsel %vm2008, %v2491, 0
        %v2602 = vsel %vm2508, %v2499, 0
        %2604 = vmatprep.subr.bf16.mxu0 0
        %2605 = vmatpush1.bf16.msra.mxu0 %v2602
        %2606 = vmatprep.subr.bf16.mxu0 0
        %2607 = vmatpush1.bf16.msra.mxu0 0
        %2608 = vmatprep.subr.bf16.mxu0 0
        %2609 = vmatpush1.bf16.msra.mxu0 0
        %2610 = vmatprep.subr.bf16.mxu0 0
        %2611 = vmatpush1.bf16.msra.mxu0 0
        %2612 = vmatprep.subr.bf16.mxu0 0
        %2613 = vmatpush1.bf16.msra.mxu0 0
        %2614 = vmatprep.subr.bf16.mxu0 0
        %2615 = vmatpush1.bf16.msra.mxu0 0
        %2616 = vmatprep.subr.bf16.mxu0 0
        %2617 = vmatpush1.bf16.msra.mxu0 0
        %2618 = vmatprep.subr.bf16.mxu0 0
        %2619 = vmatpush1.bf16.msra.mxu0 0
        %2620 = vmatprep.subr.bf16.mxu0 0
        %2621 = vmatpush1.bf16.msra.mxu0 0
        %2622 = vmatprep.subr.bf16.mxu0 0
        %2623 = vmatpush1.bf16.msra.mxu0 0
        %2624 = vmatprep.subr.bf16.mxu0 0
        %2625 = vmatpush1.bf16.msra.mxu0 0
        %2626 = vmatprep.subr.bf16.mxu0 0
        %2627 = vmatpush1.bf16.msra.mxu0 0
        %2628 = vmatprep.subr.bf16.mxu0 0
        %2629 = vmatpush1.bf16.msra.mxu0 0
        %2630 = vmatprep.subr.bf16.mxu0 0
        %2631 = vmatpush1.bf16.msra.mxu0 0
        %2632 = vmatprep.subr.bf16.mxu0 0
        %2633 = vmatpush1.bf16.msra.mxu0 0
        %2634 = vmatprep.subr.bf16.mxu0 0
        %2635 = vmatpush1.bf16.msra.mxu0 0
        %2636 = vmatprep.mubr.bf16.mxu0 0
        %2637 = vmatmul.mubr.bf16.gmra.mrb[0].mxu0 %v2599
        %v2638 = vpop.f32.mrb[0].mxu0
        %v2639 = vadd.f32 0.0, %v2638
        %v2640 = vpop.f32.mrb[0].mxu0
        %v2641 = vpop.f32.mrb[0].mxu0
        %v2642 = vpop.f32.mrb[0].mxu0
        %2643 = vdwg.mxu0
        %v2645 = vsel %vm2008, %v2492, 0
        %v2648 = vsel %vm2508, %v2500, 0
        %2650 = vmatprep.subr.bf16.mxu0 0
        %2651 = vmatpush1.bf16.msra.mxu0 %v2648
        %2652 = vmatprep.subr.bf16.mxu0 0
        %2653 = vmatpush1.bf16.msra.mxu0 0
        %2654 = vmatprep.subr.bf16.mxu0 0
        %2655 = vmatpush1.bf16.msra.mxu0 0
        %2656 = vmatprep.subr.bf16.mxu0 0
        %2657 = vmatpush1.bf16.msra.mxu0 0
        %2658 = vmatprep.subr.bf16.mxu0 0
        %2659 = vmatpush1.bf16.msra.mxu0 0
        %2660 = vmatprep.subr.bf16.mxu0 0
        %2661 = vmatpush1.bf16.msra.mxu0 0
        %2662 = vmatprep.subr.bf16.mxu0 0
        %2663 = vmatpush1.bf16.msra.mxu0 0
        %2664 = vmatprep.subr.bf16.mxu0 0
        %2665 = vmatpush1.bf16.msra.mxu0 0
        %2666 = vmatprep.subr.bf16.mxu0 0
        %2667 = vmatpush1.bf16.msra.mxu0 0
        %2668 = vmatprep.subr.bf16.mxu0 0
        %2669 = vmatpush1.bf16.msra.mxu0 0
        %2670 = vmatprep.subr.bf16.mxu0 0
        %2671 = vmatpush1.bf16.msra.mxu0 0
        %2672 = vmatprep.subr.bf16.mxu0 0
        %2673 = vmatpush1.bf16.msra.mxu0 0
        %2674 = vmatprep.subr.bf16.mxu0 0
        %2675 = vmatpush1.bf16.msra.mxu0 0
        %2676 = vmatprep.subr.bf16.mxu0 0
        %2677 = vmatpush1.bf16.msra.mxu0 0
        %2678 = vmatprep.subr.bf16.mxu0 0
        %2679 = vmatpush1.bf16.msra.mxu0 0
        %2680 = vmatprep.subr.bf16.mxu0 0
        %2681 = vmatpush1.bf16.msra.mxu0 0
        %2682 = vmatprep.mubr.bf16.mxu0 0
        %2683 = vmatmul.mubr.bf16.gmra.mrb[0].mxu0 %v2645
        %v2684 = vpop.f32.mrb[0].mxu0
        %v2685 = vadd.f32 0.0, %v2684
        %v2686 = vpop.f32.mrb[0].mxu0
        %v2687 = vpop.f32.mrb[0].mxu0
        %v2688 = vpop.f32.mrb[0].mxu0
        %2689 = vdwg.mxu0
        %v2691 = vsel %vm2008, %v2493, 0
        %v2694 = vsel %vm2508, %v2501, 0
        %2696 = vmatprep.subr.bf16.mxu0 0
        %2697 = vmatpush1.bf16.msra.mxu0 %v2694
        %2698 = vmatprep.subr.bf16.mxu0 0
        %2699 = vmatpush1.bf16.msra.mxu0 0
        %2700 = vmatprep.subr.bf16.mxu0 0
        %2701 = vmatpush1.bf16.msra.mxu0 0
        %2702 = vmatprep.subr.bf16.mxu0 0
        %2703 = vmatpush1.bf16.msra.mxu0 0
        %2704 = vmatprep.subr.bf16.mxu0 0
        %2705 = vmatpush1.bf16.msra.mxu0 0
        %2706 = vmatprep.subr.bf16.mxu0 0
        %2707 = vmatpush1.bf16.msra.mxu0 0
        %2708 = vmatprep.subr.bf16.mxu0 0
        %2709 = vmatpush1.bf16.msra.mxu0 0
        %2710 = vmatprep.subr.bf16.mxu0 0
        %2711 = vmatpush1.bf16.msra.mxu0 0
        %2712 = vmatprep.subr.bf16.mxu0 0
        %2713 = vmatpush1.bf16.msra.mxu0 0
        %2714 = vmatprep.subr.bf16.mxu0 0
        %2715 = vmatpush1.bf16.msra.mxu0 0
        %2716 = vmatprep.subr.bf16.mxu0 0
        %2717 = vmatpush1.bf16.msra.mxu0 0
        %2718 = vmatprep.subr.bf16.mxu0 0
        %2719 = vmatpush1.bf16.msra.mxu0 0
        %2720 = vmatprep.subr.bf16.mxu0 0
        %2721 = vmatpush1.bf16.msra.mxu0 0
        %2722 = vmatprep.subr.bf16.mxu0 0
        %2723 = vmatpush1.bf16.msra.mxu0 0
        %2724 = vmatprep.subr.bf16.mxu0 0
        %2725 = vmatpush1.bf16.msra.mxu0 0
        %2726 = vmatprep.subr.bf16.mxu0 0
        %2727 = vmatpush1.bf16.msra.mxu0 0
        %2728 = vmatprep.mubr.bf16.mxu0 0
        %2729 = vmatmul.mubr.bf16.gmra.mrb[0].mxu0 %v2691
        %v2730 = vpop.f32.mrb[0].mxu0
        %v2731 = vadd.f32 0.0, %v2730
        %v2732 = vpop.f32.mrb[0].mxu0
        %v2733 = vpop.f32.mrb[0].mxu0
        %v2734 = vpop.f32.mrb[0].mxu0
        %2735 = vdwg.mxu0
        %v2737 = vsel %vm2008, %v2494, 0
        %v2740 = vsel %vm2508, %v2502, 0
        %2742 = vmatprep.subr.bf16.mxu0 0
        %2743 = vmatpush1.bf16.msra.mxu0 %v2740
        %2744 = vmatprep.subr.bf16.mxu0 0
        %2745 = vmatpush1.bf16.msra.mxu0 0
        %2746 = vmatprep.subr.bf16.mxu0 0
        %2747 = vmatpush1.bf16.msra.mxu0 0
        %2748 = vmatprep.subr.bf16.mxu0 0
        %2749 = vmatpush1.bf16.msra.mxu0 0
        %2750 = vmatprep.subr.bf16.mxu0 0
        %2751 = vmatpush1.bf16.msra.mxu0 0
        %2752 = vmatprep.subr.bf16.mxu0 0
        %2753 = vmatpush1.bf16.msra.mxu0 0
        %2754 = vmatprep.subr.bf16.mxu0 0
        %2755 = vmatpush1.bf16.msra.mxu0 0
        %2756 = vmatprep.subr.bf16.mxu0 0
        %2757 = vmatpush1.bf16.msra.mxu0 0
        %2758 = vmatprep.subr.bf16.mxu0 0
        %2759 = vmatpush1.bf16.msra.mxu0 0
        %2760 = vmatprep.subr.bf16.mxu0 0
        %2761 = vmatpush1.bf16.msra.mxu0 0
        %2762 = vmatprep.subr.bf16.mxu0 0
        %2763 = vmatpush1.bf16.msra.mxu0 0
        %2764 = vmatprep.subr.bf16.mxu0 0
        %2765 = vmatpush1.bf16.msra.mxu0 0
        %2766 = vmatprep.subr.bf16.mxu0 0
        %2767 = vmatpush1.bf16.msra.mxu0 0
        %2768 = vmatprep.subr.bf16.mxu0 0
        %2769 = vmatpush1.bf16.msra.mxu0 0
        %2770 = vmatprep.subr.bf16.mxu0 0
        %2771 = vmatpush1.bf16.msra.mxu0 0
        %2772 = vmatprep.subr.bf16.mxu0 0
        %2773 = vmatpush1.bf16.msra.mxu0 0
        %2774 = vmatprep.mubr.bf16.mxu0 0
        %2775 = vmatmul.mubr.bf16.gmra.mrb[0].mxu0 %v2737
        %v2776 = vpop.f32.mrb[0].mxu0
        %v2777 = vadd.f32 0.0, %v2776
        %v2778 = vpop.f32.mrb[0].mxu0
        %v2779 = vpop.f32.mrb[0].mxu0
        %v2780 = vpop.f32.mrb[0].mxu0
        %2781 = vdwg.mxu0
        %v2783 = vsel %vm2008, %v2495, 0
        %v2786 = vsel %vm2508, %v2503, 0
        %2788 = vmatprep.subr.bf16.mxu0 0
        %2789 = vmatpush1.bf16.msra.mxu0 %v2786
        %2790 = vmatprep.subr.bf16.mxu0 0
        %2791 = vmatpush1.bf16.msra.mxu0 0
        %2792 = vmatprep.subr.bf16.mxu0 0
        %2793 = vmatpush1.bf16.msra.mxu0 0
        %2794 = vmatprep.subr.bf16.mxu0 0
        %2795 = vmatpush1.bf16.msra.mxu0 0
        %2796 = vmatprep.subr.bf16.mxu0 0
        %2797 = vmatpush1.bf16.msra.mxu0 0
        %2798 = vmatprep.subr.bf16.mxu0 0
        %2799 = vmatpush1.bf16.msra.mxu0 0
        %2800 = vmatprep.subr.bf16.mxu0 0
        %2801 = vmatpush1.bf16.msra.mxu0 0
        %2802 = vmatprep.subr.bf16.mxu0 0
        %2803 = vmatpush1.bf16.msra.mxu0 0
        %2804 = vmatprep.subr.bf16.mxu0 0
        %2805 = vmatpush1.bf16.msra.mxu0 0
        %2806 = vmatprep.subr.bf16.mxu0 0
        %2807 = vmatpush1.bf16.msra.mxu0 0
        %2808 = vmatprep.subr.bf16.mxu0 0
        %2809 = vmatpush1.bf16.msra.mxu0 0
        %2810 = vmatprep.subr.bf16.mxu0 0
        %2811 = vmatpush1.bf16.msra.mxu0 0
        %2812 = vmatprep.subr.bf16.mxu0 0
        %2813 = vmatpush1.bf16.msra.mxu0 0
        %2814 = vmatprep.subr.bf16.mxu0 0
        %2815 = vmatpush1.bf16.msra.mxu0 0
        %2816 = vmatprep.subr.bf16.mxu0 0
        %2817 = vmatpush1.bf16.msra.mxu0 0
        %2818 = vmatprep.subr.bf16.mxu0 0
        %2819 = vmatpush1.bf16.msra.mxu0 0
        %2820 = vmatprep.mubr.bf16.mxu0 0
        %2821 = vmatmul.mubr.bf16.gmra.mrb[0].mxu0 %v2783
        %v2822 = vpop.f32.mrb[0].mxu0
        %v2823 = vadd.f32 0.0, %v2822
        %v2824 = vpop.f32.mrb[0].mxu0
        %v2825 = vpop.f32.mrb[0].mxu0
        %v2826 = vpop.f32.mrb[0].mxu0
        %2827 = vdwg.mxu0
        %v2829 = vsel %vm2008, %v2496, 0
        %v2832 = vsel %vm2508, %v2504, 0
        %2834 = vmatprep.subr.bf16.mxu0 0
        %2835 = vmatpush1.bf16.msra.mxu0 %v2832
        %2836 = vmatprep.subr.bf16.mxu0 0
        %2837 = vmatpush1.bf16.msra.mxu0 0
        %2838 = vmatprep.subr.bf16.mxu0 0
        %2839 = vmatpush1.bf16.msra.mxu0 0
        %2840 = vmatprep.subr.bf16.mxu0 0
        %2841 = vmatpush1.bf16.msra.mxu0 0
        %2842 = vmatprep.subr.bf16.mxu0 0
        %2843 = vmatpush1.bf16.msra.mxu0 0
        %2844 = vmatprep.subr.bf16.mxu0 0
        %2845 = vmatpush1.bf16.msra.mxu0 0
        %2846 = vmatprep.subr.bf16.mxu0 0
        %2847 = vmatpush1.bf16.msra.mxu0 0
        %2848 = vmatprep.subr.bf16.mxu0 0
        %2849 = vmatpush1.bf16.msra.mxu0 0
        %2850 = vmatprep.subr.bf16.mxu0 0
        %2851 = vmatpush1.bf16.msra.mxu0 0
        %2852 = vmatprep.subr.bf16.mxu0 0
        %2853 = vmatpush1.bf16.msra.mxu0 0
        %2854 = vmatprep.subr.bf16.mxu0 0
        %2855 = vmatpush1.bf16.msra.mxu0 0
        %2856 = vmatprep.subr.bf16.mxu0 0
        %2857 = vmatpush1.bf16.msra.mxu0 0
        %2858 = vmatprep.subr.bf16.mxu0 0
        %2859 = vmatpush1.bf16.msra.mxu0 0
        %2860 = vmatprep.subr.bf16.mxu0 0
        %2861 = vmatpush1.bf16.msra.mxu0 0
        %2862 = vmatprep.subr.bf16.mxu0 0
        %2863 = vmatpush1.bf16.msra.mxu0 0
        %2864 = vmatprep.subr.bf16.mxu0 0
        %2865 = vmatpush1.bf16.msra.mxu0 0
        %2866 = vmatprep.mubr.bf16.mxu0 0
        %2867 = vmatmul.mubr.bf16.gmra.mrb[0].mxu0 %v2829
        %v2868 = vpop.f32.mrb[0].mxu0
        %v2869 = vadd.f32 0.0, %v2868
        %v2870 = vpop.f32.mrb[0].mxu0
        %v2871 = vpop.f32.mrb[0].mxu0
        %v2872 = vpop.f32.mrb[0].mxu0
        %2873 = vdwg.mxu0
        %v2874 = vpack.c.bf16 %v2547, %v2547
        %v2875 = vpack.c.bf16 %v2593, %v2593
        %v2876 = vpack.c.bf16 %v2639, %v2639
        %v2877 = vpack.c.bf16 %v2685, %v2685
        %v2878 = vpack.c.bf16 %v2731, %v2731
        %v2879 = vpack.c.bf16 %v2777, %v2777
        %v2880 = vpack.c.bf16 %v2823, %v2823
        %v2881 = vpack.c.bf16 %v2869, %v2869
        %v2883 = vsel %vm2008, %v2874, 0
        %v2886 = vsel %vm2508, %v727, 0
        %2888 = vmatprep.subr.bf16.mxu0 0
        %2889 = vmatpush1.bf16.msra.mxu0 %v2886
        %2890 = vmatprep.subr.bf16.mxu0 0
        %2891 = vmatpush1.bf16.msra.mxu0 0
        %2892 = vmatprep.subr.bf16.mxu0 0
        %2893 = vmatpush1.bf16.msra.mxu0 0
        %2894 = vmatprep.subr.bf16.mxu0 0
        %2895 = vmatpush1.bf16.msra.mxu0 0
        %2896 = vmatprep.subr.bf16.mxu0 0
        %2897 = vmatpush1.bf16.msra.mxu0 0
        %2898 = vmatprep.subr.bf16.mxu0 0
        %2899 = vmatpush1.bf16.msra.mxu0 0
        %2900 = vmatprep.subr.bf16.mxu0 0
        %2901 = vmatpush1.bf16.msra.mxu0 0
        %2902 = vmatprep.subr.bf16.mxu0 0
        %2903 = vmatpush1.bf16.msra.mxu0 0
        %2904 = vmatprep.subr.bf16.mxu0 0
        %2905 = vmatpush1.bf16.msra.mxu0 0
        %2906 = vmatprep.subr.bf16.mxu0 0
        %2907 = vmatpush1.bf16.msra.mxu0 0
        %2908 = vmatprep.subr.bf16.mxu0 0
        %2909 = vmatpush1.bf16.msra.mxu0 0
        %2910 = vmatprep.subr.bf16.mxu0 0
        %2911 = vmatpush1.bf16.msra.mxu0 0
        %2912 = vmatprep.subr.bf16.mxu0 0
        %2913 = vmatpush1.bf16.msra.mxu0 0
        %2914 = vmatprep.subr.bf16.mxu0 0
        %2915 = vmatpush1.bf16.msra.mxu0 0
        %2916 = vmatprep.subr.bf16.mxu0 0
        %2917 = vmatpush1.bf16.msra.mxu0 0
        %2918 = vmatprep.subr.bf16.mxu0 0
        %2919 = vmatpush1.bf16.msra.mxu0 0
        %2920 = vmatprep.mubr.bf16.mxu0 0
        %2921 = vmatmul.mubr.bf16.gmra.mrb[0].mxu0 %v2883
        %v2922 = vpop.f32.mrb[0].mxu0
        %v2923 = vadd.f32 0.0, %v2922
        %v2924 = vpop.f32.mrb[0].mxu0
        %v2925 = vpop.f32.mrb[0].mxu0
        %v2926 = vpop.f32.mrb[0].mxu0
        %2927 = vdwg.mxu0
        %v2929 = vsel %vm2008, %v2875, 0
        %v2932 = vsel %vm2508, %v728, 0
        %2934 = vmatprep.subr.bf16.mxu0 0
        %2935 = vmatpush1.bf16.msra.mxu0 %v2932
        %2936 = vmatprep.subr.bf16.mxu0 0
        %2937 = vmatpush1.bf16.msra.mxu0 0
        %2938 = vmatprep.subr.bf16.mxu0 0
        %2939 = vmatpush1.bf16.msra.mxu0 0
        %2940 = vmatprep.subr.bf16.mxu0 0
        %2941 = vmatpush1.bf16.msra.mxu0 0
        %2942 = vmatprep.subr.bf16.mxu0 0
        %2943 = vmatpush1.bf16.msra.mxu0 0
        %2944 = vmatprep.subr.bf16.mxu0 0
        %2945 = vmatpush1.bf16.msra.mxu0 0
        %2946 = vmatprep.subr.bf16.mxu0 0
        %2947 = vmatpush1.bf16.msra.mxu0 0
        %2948 = vmatprep.subr.bf16.mxu0 0
        %2949 = vmatpush1.bf16.msra.mxu0 0
        %2950 = vmatprep.subr.bf16.mxu0 0
        %2951 = vmatpush1.bf16.msra.mxu0 0
        %2952 = vmatprep.subr.bf16.mxu0 0
        %2953 = vmatpush1.bf16.msra.mxu0 0
        %2954 = vmatprep.subr.bf16.mxu0 0
        %2955 = vmatpush1.bf16.msra.mxu0 0
        %2956 = vmatprep.subr.bf16.mxu0 0
        %2957 = vmatpush1.bf16.msra.mxu0 0
        %2958 = vmatprep.subr.bf16.mxu0 0
        %2959 = vmatpush1.bf16.msra.mxu0 0
        %2960 = vmatprep.subr.bf16.mxu0 0
        %2961 = vmatpush1.bf16.msra.mxu0 0
        %2962 = vmatprep.subr.bf16.mxu0 0
        %2963 = vmatpush1.bf16.msra.mxu0 0
        %2964 = vmatprep.subr.bf16.mxu0 0
        %2965 = vmatpush1.bf16.msra.mxu0 0
        %2966 = vmatprep.mubr.bf16.mxu0 0
        %2967 = vmatmul.mubr.bf16.gmra.mrb[0].mxu0 %v2929
        %v2968 = vpop.f32.mrb[0].mxu0
        %v2969 = vadd.f32 0.0, %v2968
        %v2970 = vpop.f32.mrb[0].mxu0
        %v2971 = vpop.f32.mrb[0].mxu0
        %v2972 = vpop.f32.mrb[0].mxu0
        %2973 = vdwg.mxu0
        %v2975 = vsel %vm2008, %v2876, 0
        %v2978 = vsel %vm2508, %v729, 0
        %2980 = vmatprep.subr.bf16.mxu0 0
        %2981 = vmatpush1.bf16.msra.mxu0 %v2978
        %2982 = vmatprep.subr.bf16.mxu0 0
        %2983 = vmatpush1.bf16.msra.mxu0 0
        %2984 = vmatprep.subr.bf16.mxu0 0
        %2985 = vmatpush1.bf16.msra.mxu0 0
        %2986 = vmatprep.subr.bf16.mxu0 0
        %2987 = vmatpush1.bf16.msra.mxu0 0
        %2988 = vmatprep.subr.bf16.mxu0 0
        %2989 = vmatpush1.bf16.msra.mxu0 0
        %2990 = vmatprep.subr.bf16.mxu0 0
        %2991 = vmatpush1.bf16.msra.mxu0 0
        %2992 = vmatprep.subr.bf16.mxu0 0
        %2993 = vmatpush1.bf16.msra.mxu0 0
        %2994 = vmatprep.subr.bf16.mxu0 0
        %2995 = vmatpush1.bf16.msra.mxu0 0
        %2996 = vmatprep.subr.bf16.mxu0 0
        %2997 = vmatpush1.bf16.msra.mxu0 0
        %2998 = vmatprep.subr.bf16.mxu0 0
        %2999 = vmatpush1.bf16.msra.mxu0 0
        %3000 = vmatprep.subr.bf16.mxu0 0
        %3001 = vmatpush1.bf16.msra.mxu0 0
        %3002 = vmatprep.subr.bf16.mxu0 0
        %3003 = vmatpush1.bf16.msra.mxu0 0
        %3004 = vmatprep.subr.bf16.mxu0 0
        %3005 = vmatpush1.bf16.msra.mxu0 0
        %3006 = vmatprep.subr.bf16.mxu0 0
        %3007 = vmatpush1.bf16.msra.mxu0 0
        %3008 = vmatprep.subr.bf16.mxu0 0
        %3009 = vmatpush1.bf16.msra.mxu0 0
        %3010 = vmatprep.subr.bf16.mxu0 0
        %3011 = vmatpush1.bf16.msra.mxu0 0
        %3012 = vmatprep.mubr.bf16.mxu0 0
        %3013 = vmatmul.mubr.bf16.gmra.mrb[0].mxu0 %v2975
        %v3014 = vpop.f32.mrb[0].mxu0
        %v3015 = vadd.f32 0.0, %v3014
        %v3016 = vpop.f32.mrb[0].mxu0
        %v3017 = vpop.f32.mrb[0].mxu0
        %v3018 = vpop.f32.mrb[0].mxu0
        %3019 = vdwg.mxu0
        %v3021 = vsel %vm2008, %v2877, 0
        %v3024 = vsel %vm2508, %v730, 0
        %3026 = vmatprep.subr.bf16.mxu0 0
        %3027 = vmatpush1.bf16.msra.mxu0 %v3024
        %3028 = vmatprep.subr.bf16.mxu0 0
        %3029 = vmatpush1.bf16.msra.mxu0 0
        %3030 = vmatprep.subr.bf16.mxu0 0
        %3031 = vmatpush1.bf16.msra.mxu0 0
        %3032 = vmatprep.subr.bf16.mxu0 0
        %3033 = vmatpush1.bf16.msra.mxu0 0
        %3034 = vmatprep.subr.bf16.mxu0 0
        %3035 = vmatpush1.bf16.msra.mxu0 0
        %3036 = vmatprep.subr.bf16.mxu0 0
        %3037 = vmatpush1.bf16.msra.mxu0 0
        %3038 = vmatprep.subr.bf16.mxu0 0
        %3039 = vmatpush1.bf16.msra.mxu0 0
        %3040 = vmatprep.subr.bf16.mxu0 0
        %3041 = vmatpush1.bf16.msra.mxu0 0
        %3042 = vmatprep.subr.bf16.mxu0 0
        %3043 = vmatpush1.bf16.msra.mxu0 0
        %3044 = vmatprep.subr.bf16.mxu0 0
        %3045 = vmatpush1.bf16.msra.mxu0 0
        %3046 = vmatprep.subr.bf16.mxu0 0
        %3047 = vmatpush1.bf16.msra.mxu0 0
        %3048 = vmatprep.subr.bf16.mxu0 0
        %3049 = vmatpush1.bf16.msra.mxu0 0
        %3050 = vmatprep.subr.bf16.mxu0 0
        %3051 = vmatpush1.bf16.msra.mxu0 0
        %3052 = vmatprep.subr.bf16.mxu0 0
        %3053 = vmatpush1.bf16.msra.mxu0 0
        %3054 = vmatprep.subr.bf16.mxu0 0
        %3055 = vmatpush1.bf16.msra.mxu0 0
        %3056 = vmatprep.subr.bf16.mxu0 0
        %3057 = vmatpush1.bf16.msra.mxu0 0
        %3058 = vmatprep.mubr.bf16.mxu0 0
        %3059 = vmatmul.mubr.bf16.gmra.mrb[0].mxu0 %v3021
        %v3060 = vpop.f32.mrb[0].mxu0
        %v3061 = vadd.f32 0.0, %v3060
        %v3062 = vpop.f32.mrb[0].mxu0
        %v3063 = vpop.f32.mrb[0].mxu0
        %v3064 = vpop.f32.mrb[0].mxu0
        %3065 = vdwg.mxu0
        %v3067 = vsel %vm2008, %v2878, 0
        %v3070 = vsel %vm2508, %v731, 0
        %3072 = vmatprep.subr.bf16.mxu0 0
        %3073 = vmatpush1.bf16.msra.mxu0 %v3070
        %3074 = vmatprep.subr.bf16.mxu0 0
        %3075 = vmatpush1.bf16.msra.mxu0 0
        %3076 = vmatprep.subr.bf16.mxu0 0
        %3077 = vmatpush1.bf16.msra.mxu0 0
        %3078 = vmatprep.subr.bf16.mxu0 0
        %3079 = vmatpush1.bf16.msra.mxu0 0
        %3080 = vmatprep.subr.bf16.mxu0 0
        %3081 = vmatpush1.bf16.msra.mxu0 0
        %3082 = vmatprep.subr.bf16.mxu0 0
        %3083 = vmatpush1.bf16.msra.mxu0 0
        %3084 = vmatprep.subr.bf16.mxu0 0
        %3085 = vmatpush1.bf16.msra.mxu0 0
        %3086 = vmatprep.subr.bf16.mxu0 0
        %3087 = vmatpush1.bf16.msra.mxu0 0
        %3088 = vmatprep.subr.bf16.mxu0 0
        %3089 = vmatpush1.bf16.msra.mxu0 0
        %3090 = vmatprep.subr.bf16.mxu0 0
        %3091 = vmatpush1.bf16.msra.mxu0 0
        %3092 = vmatprep.subr.bf16.mxu0 0
        %3093 = vmatpush1.bf16.msra.mxu0 0
        %3094 = vmatprep.subr.bf16.mxu0 0
        %3095 = vmatpush1.bf16.msra.mxu0 0
        %3096 = vmatprep.subr.bf16.mxu0 0
        %3097 = vmatpush1.bf16.msra.mxu0 0
        %3098 = vmatprep.subr.bf16.mxu0 0
        %3099 = vmatpush1.bf16.msra.mxu0 0
        %3100 = vmatprep.subr.bf16.mxu0 0
        %3101 = vmatpush1.bf16.msra.mxu0 0
        %3102 = vmatprep.subr.bf16.mxu0 0
        %3103 = vmatpush1.bf16.msra.mxu0 0
        %3104 = vmatprep.mubr.bf16.mxu0 0
        %3105 = vmatmul.mubr.bf16.gmra.mrb[0].mxu0 %v3067
        %v3106 = vpop.f32.mrb[0].mxu0
        %v3107 = vadd.f32 0.0, %v3106
        %v3108 = vpop.f32.mrb[0].mxu0
        %v3109 = vpop.f32.mrb[0].mxu0
        %v3110 = vpop.f32.mrb[0].mxu0
        %3111 = vdwg.mxu0
        %v3113 = vsel %vm2008, %v2879, 0
        %v3116 = vsel %vm2508, %v732, 0
        %3118 = vmatprep.subr.bf16.mxu0 0
        %3119 = vmatpush1.bf16.msra.mxu0 %v3116
        %3120 = vmatprep.subr.bf16.mxu0 0
        %3121 = vmatpush1.bf16.msra.mxu0 0
        %3122 = vmatprep.subr.bf16.mxu0 0
        %3123 = vmatpush1.bf16.msra.mxu0 0
        %3124 = vmatprep.subr.bf16.mxu0 0
        %3125 = vmatpush1.bf16.msra.mxu0 0
        %3126 = vmatprep.subr.bf16.mxu0 0
        %3127 = vmatpush1.bf16.msra.mxu0 0
        %3128 = vmatprep.subr.bf16.mxu0 0
        %3129 = vmatpush1.bf16.msra.mxu0 0
        %3130 = vmatprep.subr.bf16.mxu0 0
        %3131 = vmatpush1.bf16.msra.mxu0 0
        %3132 = vmatprep.subr.bf16.mxu0 0
        %3133 = vmatpush1.bf16.msra.mxu0 0
        %3134 = vmatprep.subr.bf16.mxu0 0
        %3135 = vmatpush1.bf16.msra.mxu0 0
        %3136 = vmatprep.subr.bf16.mxu0 0
        %3137 = vmatpush1.bf16.msra.mxu0 0
        %3138 = vmatprep.subr.bf16.mxu0 0
        %3139 = vmatpush1.bf16.msra.mxu0 0
        %3140 = vmatprep.subr.bf16.mxu0 0
        %3141 = vmatpush1.bf16.msra.mxu0 0
        %3142 = vmatprep.subr.bf16.mxu0 0
        %3143 = vmatpush1.bf16.msra.mxu0 0
        %3144 = vmatprep.subr.bf16.mxu0 0
        %3145 = vmatpush1.bf16.msra.mxu0 0
        %3146 = vmatprep.subr.bf16.mxu0 0
        %3147 = vmatpush1.bf16.msra.mxu0 0
        %3148 = vmatprep.subr.bf16.mxu0 0
        %3149 = vmatpush1.bf16.msra.mxu0 0
        %3150 = vmatprep.mubr.bf16.mxu0 0
        %3151 = vmatmul.mubr.bf16.gmra.mrb[0].mxu0 %v3113
        %v3152 = vpop.f32.mrb[0].mxu0
        %v3153 = vadd.f32 0.0, %v3152
        %v3154 = vpop.f32.mrb[0].mxu0
        %v3155 = vpop.f32.mrb[0].mxu0
        %v3156 = vpop.f32.mrb[0].mxu0
        %3157 = vdwg.mxu0
        %v3159 = vsel %vm2008, %v2880, 0
        %v3162 = vsel %vm2508, %v733, 0
        %3164 = vmatprep.subr.bf16.mxu0 0
        %3165 = vmatpush1.bf16.msra.mxu0 %v3162
        %3166 = vmatprep.subr.bf16.mxu0 0
        %3167 = vmatpush1.bf16.msra.mxu0 0
        %3168 = vmatprep.subr.bf16.mxu0 0
        %3169 = vmatpush1.bf16.msra.mxu0 0
        %3170 = vmatprep.subr.bf16.mxu0 0
        %3171 = vmatpush1.bf16.msra.mxu0 0
        %3172 = vmatprep.subr.bf16.mxu0 0
        %3173 = vmatpush1.bf16.msra.mxu0 0
        %3174 = vmatprep.subr.bf16.mxu0 0
        %3175 = vmatpush1.bf16.msra.mxu0 0
        %3176 = vmatprep.subr.bf16.mxu0 0
        %3177 = vmatpush1.bf16.msra.mxu0 0
        %3178 = vmatprep.subr.bf16.mxu0 0
        %3179 = vmatpush1.bf16.msra.mxu0 0
        %3180 = vmatprep.subr.bf16.mxu0 0
        %3181 = vmatpush1.bf16.msra.mxu0 0
        %3182 = vmatprep.subr.bf16.mxu0 0
        %3183 = vmatpush1.bf16.msra.mxu0 0
        %3184 = vmatprep.subr.bf16.mxu0 0
        %3185 = vmatpush1.bf16.msra.mxu0 0
        %3186 = vmatprep.subr.bf16.mxu0 0
        %3187 = vmatpush1.bf16.msra.mxu0 0
        %3188 = vmatprep.subr.bf16.mxu0 0
        %3189 = vmatpush1.bf16.msra.mxu0 0
        %3190 = vmatprep.subr.bf16.mxu0 0
        %3191 = vmatpush1.bf16.msra.mxu0 0
        %3192 = vmatprep.subr.bf16.mxu0 0
        %3193 = vmatpush1.bf16.msra.mxu0 0
        %3194 = vmatprep.subr.bf16.mxu0 0
        %3195 = vmatpush1.bf16.msra.mxu0 0
        %3196 = vmatprep.mubr.bf16.mxu0 0
        %3197 = vmatmul.mubr.bf16.gmra.mrb[0].mxu0 %v3159
        %v3198 = vpop.f32.mrb[0].mxu0
        %v3199 = vadd.f32 0.0, %v3198
        %v3200 = vpop.f32.mrb[0].mxu0
        %v3201 = vpop.f32.mrb[0].mxu0
        %v3202 = vpop.f32.mrb[0].mxu0
        %3203 = vdwg.mxu0
        %v3205 = vsel %vm2008, %v2881, 0
        %v3208 = vsel %vm2508, %v734, 0
        %3210 = vmatprep.subr.bf16.mxu0 0
        %3211 = vmatpush1.bf16.msra.mxu0 %v3208
        %3212 = vmatprep.subr.bf16.mxu0 0
        %3213 = vmatpush1.bf16.msra.mxu0 0
        %3214 = vmatprep.subr.bf16.mxu0 0
        %3215 = vmatpush1.bf16.msra.mxu0 0
        %3216 = vmatprep.subr.bf16.mxu0 0
        %3217 = vmatpush1.bf16.msra.mxu0 0
        %3218 = vmatprep.subr.bf16.mxu0 0
        %3219 = vmatpush1.bf16.msra.mxu0 0
        %3220 = vmatprep.subr.bf16.mxu0 0
        %3221 = vmatpush1.bf16.msra.mxu0 0
        %3222 = vmatprep.subr.bf16.mxu0 0
        %3223 = vmatpush1.bf16.msra.mxu0 0
        %3224 = vmatprep.subr.bf16.mxu0 0
        %3225 = vmatpush1.bf16.msra.mxu0 0
        %3226 = vmatprep.subr.bf16.mxu0 0
        %3227 = vmatpush1.bf16.msra.mxu0 0
        %3228 = vmatprep.subr.bf16.mxu0 0
        %3229 = vmatpush1.bf16.msra.mxu0 0
        %3230 = vmatprep.subr.bf16.mxu0 0
        %3231 = vmatpush1.bf16.msra.mxu0 0
        %3232 = vmatprep.subr.bf16.mxu0 0
        %3233 = vmatpush1.bf16.msra.mxu0 0
        %3234 = vmatprep.subr.bf16.mxu0 0
        %3235 = vmatpush1.bf16.msra.mxu0 0
        %3236 = vmatprep.subr.bf16.mxu0 0
        %3237 = vmatpush1.bf16.msra.mxu0 0
        %3238 = vmatprep.subr.bf16.mxu0 0
        %3239 = vmatpush1.bf16.msra.mxu0 0
        %3240 = vmatprep.subr.bf16.mxu0 0
        %3241 = vmatpush1.bf16.msra.mxu0 0
        %3242 = vmatprep.mubr.bf16.mxu0 0
        %3243 = vmatmul.mubr.bf16.gmra.mrb[0].mxu0 %v3205
        %v3244 = vpop.f32.mrb[0].mxu0
        %v3245 = vadd.f32 0.0, %v3244
        %v3246 = vpop.f32.mrb[0].mxu0
        %v3247 = vpop.f32.mrb[0].mxu0
        %v3248 = vpop.f32.mrb[0].mxu0
        %3249 = vdwg.mxu0
        %v3250 = vsel %vm749, %v2923, 0.0
        %v3251 = vsel %vm749, %v2969, 0.0
        %v3252 = vadd.f32 %v3250, %v3251
        %v3253 = vsel %vm749, %v3015, 0.0
        %v3254 = vadd.f32 %v3252, %v3253
        %v3255 = vsel %vm749, %v3061, 0.0
        %v3256 = vadd.f32 %v3254, %v3255
        %v3257 = vsel %vm749, %v3107, 0.0
        %v3258 = vadd.f32 %v3256, %v3257
        %v3259 = vsel %vm749, %v3153, 0.0
        %v3260 = vadd.f32 %v3258, %v3259
        %v3261 = vsel %vm749, %v3199, 0.0
        %v3262 = vadd.f32 %v3260, %v3261
        %v3263 = vsel %vm749, %v3245, 0.0
        %v3264 = vadd.f32 %v3262, %v3263
        %v3265 = vadd.f32 %v612, %v3264
        %v3266 = vsel %vm749, %v3265, 0.0
        %3267 = vadd.xlane.f32.xlu0 %v3266
        %v3268 = vpop.xlane.xlu0 %3267
        %v3269 = vrcp.pop 32.0
        %v3270 = vmul.f32 %v3268, %v3269
        %v3271 = vsub.f32 %v3265, %v3270
        %v3272 = vmul.f32 %v3271, %v3271
        %v3273 = vsel %vm749, %v3272, 0.0
        %3274 = vadd.xlane.f32.xlu0 %v3273
        %v3275 = vpop.xlane.xlu0 %3274
        %v3276 = vmul.f32 %v3275, %v3269
        %v3277 = vadd.f32 %v3276, 1e-05
        %v3278 = vrsqrt.pop %v3277
        %v3279 = vmul.f32 %v3271, %v3278
        %v3280 = vld [vmem:[%s9] sm:$0xf]
        %v3281 = vld [vmem:[%s9 + $0x4] sm:$0xf]
        %v3282 = vld [vmem:[%s9 + $0x8] sm:$0xf]
        %v3283 = vld [vmem:[%s9 + $0xc] sm:$0xf]
        %v3284 = vld [vmem:[%s9 + $0x10] sm:$0xf]
        %v3285 = vld [vmem:[%s9 + $0x14] sm:$0xf]
        %v3286 = vld [vmem:[%s9 + $0x18] sm:$0xf]
        %v3287 = vld [vmem:[%s9 + $0x1c] sm:$0xf]
        %v3288 = vld [vmem:[%s9 + $0x20] sm:$0xf]
        %v3289 = vld [vmem:[%s9 + $0x24] sm:$0xf]
        %v3290 = vld [vmem:[%s9 + $0x28] sm:$0xf]
        %v3291 = vld [vmem:[%s9 + $0x2c] sm:$0xf]
        %v3292 = vld [vmem:[%s9 + $0x30] sm:$0xf]
        %v3293 = vld [vmem:[%s9 + $0x34] sm:$0xf]
        %v3294 = vld [vmem:[%s9 + $0x38] sm:$0xf]
        %v3295 = vld [vmem:[%s9 + $0x3c] sm:$0xf]
        %v3296 = vld [vmem:[%s9 + $0x40] sm:$0xf]
        %v3297 = vld [vmem:[%s9 + $0x44] sm:$0xf]
        %v3298 = vld [vmem:[%s9 + $0x48] sm:$0xf]
        %v3299 = vld [vmem:[%s9 + $0x4c] sm:$0xf]
        %v3300 = vld [vmem:[%s9 + $0x50] sm:$0xf]
        %v3301 = vld [vmem:[%s9 + $0x54] sm:$0xf]
        %v3302 = vld [vmem:[%s9 + $0x58] sm:$0xf]
        %v3303 = vld [vmem:[%s9 + $0x5c] sm:$0xf]
        %v3304 = vld [vmem:[%s9 + $0x60] sm:$0xf]
        %v3305 = vld [vmem:[%s9 + $0x64] sm:$0xf]
        %v3306 = vld [vmem:[%s9 + $0x68] sm:$0xf]
        %v3307 = vld [vmem:[%s9 + $0x6c] sm:$0xf]
        %v3308 = vld [vmem:[%s9 + $0x70] sm:$0xf]
        %v3309 = vld [vmem:[%s9 + $0x74] sm:$0xf]
        %v3310 = vld [vmem:[%s9 + $0x78] sm:$0xf]
        %v3311 = vld [vmem:[%s9 + $0x7c] sm:$0xf]
        %v3312 = vld [vmem:[%s10] sm:$0xf]
        %v3313 = vld [vmem:[%s10 + $0x4] sm:$0xf]
        %v3314 = vld [vmem:[%s10 + $0x8] sm:$0xf]
        %v3315 = vld [vmem:[%s10 + $0xc] sm:$0xf]
        %v3316 = vld [vmem:[%s10 + $0x10] sm:$0xf]
        %v3317 = vld [vmem:[%s10 + $0x14] sm:$0xf]
        %v3318 = vld [vmem:[%s10 + $0x18] sm:$0xf]
        %v3319 = vld [vmem:[%s10 + $0x1c] sm:$0xf]
        %v3320 = vld [vmem:[%s10 + $0x20] sm:$0xf]
        %v3321 = vld [vmem:[%s10 + $0x24] sm:$0xf]
        %v3322 = vld [vmem:[%s10 + $0x28] sm:$0xf]
        %v3323 = vld [vmem:[%s10 + $0x2c] sm:$0xf]
        %v3324 = vld [vmem:[%s10 + $0x30] sm:$0xf]
        %v3325 = vld [vmem:[%s10 + $0x34] sm:$0xf]
        %v3326 = vld [vmem:[%s10 + $0x38] sm:$0xf]
        %v3327 = vld [vmem:[%s10 + $0x3c] sm:$0xf]
        %v3328 = vld [vmem:[%s10 + $0x40] sm:$0xf]
        %v3329 = vld [vmem:[%s10 + $0x44] sm:$0xf]
        %v3330 = vld [vmem:[%s10 + $0x48] sm:$0xf]
        %v3331 = vld [vmem:[%s10 + $0x4c] sm:$0xf]
        %v3332 = vld [vmem:[%s10 + $0x50] sm:$0xf]
        %v3333 = vld [vmem:[%s10 + $0x54] sm:$0xf]
        %v3334 = vld [vmem:[%s10 + $0x58] sm:$0xf]
        %v3335 = vld [vmem:[%s10 + $0x5c] sm:$0xf]
        %v3336 = vld [vmem:[%s10 + $0x60] sm:$0xf]
        %v3337 = vld [vmem:[%s10 + $0x64] sm:$0xf]
        %v3338 = vld [vmem:[%s10 + $0x68] sm:$0xf]
        %v3339 = vld [vmem:[%s10 + $0x6c] sm:$0xf]
        %v3340 = vld [vmem:[%s10 + $0x70] sm:$0xf]
        %v3341 = vld [vmem:[%s10 + $0x74] sm:$0xf]
        %v3342 = vld [vmem:[%s10 + $0x78] sm:$0xf]
        %v3343 = vld [vmem:[%s10 + $0x7c] sm:$0xf]
        %v3344 = vld [vmem:[%s11] sm:$0xf]
        %v3345 = vld [vmem:[%s11 + $0x4] sm:$0xf]
        %v3346 = vld [vmem:[%s11 + $0x8] sm:$0xf]
        %v3347 = vld [vmem:[%s11 + $0xc] sm:$0xf]
        %v3348 = vld [vmem:[%s11 + $0x10] sm:$0xf]
        %v3349 = vld [vmem:[%s11 + $0x14] sm:$0xf]
        %v3350 = vld [vmem:[%s11 + $0x18] sm:$0xf]
        %v3351 = vld [vmem:[%s11 + $0x1c] sm:$0xf]
        %v3352 = vld [vmem:[%s11 + $0x20] sm:$0xf]
        %v3353 = vld [vmem:[%s11 + $0x24] sm:$0xf]
        %v3354 = vld [vmem:[%s11 + $0x28] sm:$0xf]
        %v3355 = vld [vmem:[%s11 + $0x2c] sm:$0xf]
        %v3356 = vld [vmem:[%s11 + $0x30] sm:$0xf]
        %v3357 = vld [vmem:[%s11 + $0x34] sm:$0xf]
        %v3358 = vld [vmem:[%s11 + $0x38] sm:$0xf]
        %v3359 = vld [vmem:[%s11 + $0x3c] sm:$0xf]
        %v3360 = vld [vmem:[%s11 + $0x40] sm:$0xf]
        %v3361 = vld [vmem:[%s11 + $0x44] sm:$0xf]
        %v3362 = vld [vmem:[%s11 + $0x48] sm:$0xf]
        %v3363 = vld [vmem:[%s11 + $0x4c] sm:$0xf]
        %v3364 = vld [vmem:[%s11 + $0x50] sm:$0xf]
        %v3365 = vld [vmem:[%s11 + $0x54] sm:$0xf]
        %v3366 = vld [vmem:[%s11 + $0x58] sm:$0xf]
        %v3367 = vld [vmem:[%s11 + $0x5c] sm:$0xf]
        %v3368 = vld [vmem:[%s11 + $0x60] sm:$0xf]
        %v3369 = vld [vmem:[%s11 + $0x64] sm:$0xf]
        %v3370 = vld [vmem:[%s11 + $0x68] sm:$0xf]
        %v3371 = vld [vmem:[%s11 + $0x6c] sm:$0xf]
        %v3372 = vld [vmem:[%s11 + $0x70] sm:$0xf]
        %v3373 = vld [vmem:[%s11 + $0x74] sm:$0xf]
        %v3374 = vld [vmem:[%s11 + $0x78] sm:$0xf]
        %v3375 = vld [vmem:[%s11 + $0x7c] sm:$0xf]
        %v3376 = vld [vmem:[%s12] sm:$0xf]
        %v3377 = vld [vmem:[%s12 + $0x4] sm:$0xf]
        %v3378 = vld [vmem:[%s12 + $0x8] sm:$0xf]
        %v3379 = vld [vmem:[%s12 + $0xc] sm:$0xf]
        %v3380 = vld [vmem:[%s12 + $0x10] sm:$0xf]
        %v3381 = vld [vmem:[%s12 + $0x14] sm:$0xf]
        %v3382 = vld [vmem:[%s12 + $0x18] sm:$0xf]
        %v3383 = vld [vmem:[%s12 + $0x1c] sm:$0xf]
        %v3384 = vpack.c.bf16 %v3279, %v3279
        %v3385 = vpack.c.bf16 %v614, %v614
        %v3390 = vunpack.c.l.b16 %v3280
        %v3391 = vunpack.c.l.b16 %v3281
        %v3392 = vunpack.c.l.b16 %v3282
        %v3393 = vunpack.c.l.b16 %v3283
        %v3394 = vpack.c.b16 %v3391, %v3390
        %v3395 = vpack.c.b16 %v3393, %v3392
        %v3399 = vsel %vm749, %v3384, 0
        %3401 = vmatprep.subr.bf16.mxu0 0
        %3402 = vmatpush1.bf16.msra.mxu0 %v3394
        %3403 = vmatprep.subr.bf16.mxu0 0
        %3404 = vmatpush1.bf16.msra.mxu0 %v3395
        %3405 = vmatprep.subr.bf16.mxu0 0
        %3406 = vmatpush1.bf16.msra.mxu0 0
        %3407 = vmatprep.subr.bf16.mxu0 0
        %3408 = vmatpush1.bf16.msra.mxu0 0
        %3409 = vmatprep.subr.bf16.mxu0 0
        %3410 = vmatpush1.bf16.msra.mxu0 0
        %3411 = vmatprep.subr.bf16.mxu0 0
        %3412 = vmatpush1.bf16.msra.mxu0 0
        %3413 = vmatprep.subr.bf16.mxu0 0
        %3414 = vmatpush1.bf16.msra.mxu0 0
        %3415 = vmatprep.subr.bf16.mxu0 0
        %3416 = vmatpush1.bf16.msra.mxu0 0
        %3417 = vmatprep.subr.bf16.mxu0 0
        %3418 = vmatpush1.bf16.msra.mxu0 0
        %3419 = vmatprep.subr.bf16.mxu0 0
        %3420 = vmatpush1.bf16.msra.mxu0 0
        %3421 = vmatprep.subr.bf16.mxu0 0
        %3422 = vmatpush1.bf16.msra.mxu0 0
        %3423 = vmatprep.subr.bf16.mxu0 0
        %3424 = vmatpush1.bf16.msra.mxu0 0
        %3425 = vmatprep.subr.bf16.mxu0 0
        %3426 = vmatpush1.bf16.msra.mxu0 0
        %3427 = vmatprep.subr.bf16.mxu0 0
        %3428 = vmatpush1.bf16.msra.mxu0 0
        %3429 = vmatprep.subr.bf16.mxu0 0
        %3430 = vmatpush1.bf16.msra.mxu0 0
        %3431 = vmatprep.subr.bf16.mxu0 0
        %3432 = vmatpush1.bf16.msra.mxu0 0
        %3433 = vmatprep.mubr.bf16.mxu0 0
        %3434 = vmatmul.mubr.bf16.gmra.mrb[0].mxu0 %v3399
        %v3435 = vpop.f32.mrb[0].mxu0
        %v3436 = vadd.f32 0.0, %v3435
        %v3437 = vpop.f32.mrb[0].mxu0
        %v3438 = vpop.f32.mrb[0].mxu0
        %v3439 = vpop.f32.mrb[0].mxu0
        %3440 = vdwg.mxu0
        %v3445 = vunpack.c.l.b16 %v3284
        %v3446 = vunpack.c.l.b16 %v3285
        %v3447 = vunpack.c.l.b16 %v3286
        %v3448 = vunpack.c.l.b16 %v3287
        %v3449 = vpack.c.b16 %v3446, %v3445
        %v3450 = vpack.c.b16 %v3448, %v3447
        %3453 = vmatprep.subr.bf16.mxu0 0
        %3454 = vmatpush1.bf16.msra.mxu0 %v3449
        %3455 = vmatprep.subr.bf16.mxu0 0
        %3456 = vmatpush1.bf16.msra.mxu0 %v3450
        %3457 = vmatprep.subr.bf16.mxu0 0
        %3458 = vmatpush1.bf16.msra.mxu0 0
        %3459 = vmatprep.subr.bf16.mxu0 0
        %3460 = vmatpush1.bf16.msra.mxu0 0
        %3461 = vmatprep.subr.bf16.mxu0 0
        %3462 = vmatpush1.bf16.msra.mxu0 0
        %3463 = vmatprep.subr.bf16.mxu0 0
        %3464 = vmatpush1.bf16.msra.mxu0 0
        %3465 = vmatprep.subr.bf16.mxu0 0
        %3466 = vmatpush1.bf16.msra.mxu0 0
        %3467 = vmatprep.subr.bf16.mxu0 0
        %3468 = vmatpush1.bf16.msra.mxu0 0
        %3469 = vmatprep.subr.bf16.mxu0 0
        %3470 = vmatpush1.bf16.msra.mxu0 0
        %3471 = vmatprep.subr.bf16.mxu0 0
        %3472 = vmatpush1.bf16.msra.mxu0 0
        %3473 = vmatprep.subr.bf16.mxu0 0
        %3474 = vmatpush1.bf16.msra.mxu0 0
        %3475 = vmatprep.subr.bf16.mxu0 0
        %3476 = vmatpush1.bf16.msra.mxu0 0
        %3477 = vmatprep.subr.bf16.mxu0 0
        %3478 = vmatpush1.bf16.msra.mxu0 0
        %3479 = vmatprep.subr.bf16.mxu0 0
        %3480 = vmatpush1.bf16.msra.mxu0 0
        %3481 = vmatprep.subr.bf16.mxu0 0
        %3482 = vmatpush1.bf16.msra.mxu0 0
        %3483 = vmatprep.subr.bf16.mxu0 0
        %3484 = vmatpush1.bf16.msra.mxu0 0
        %3485 = vmatprep.mubr.bf16.mxu0 0
        %3486 = vmatmul.mubr.bf16.gmra.mrb[0].mxu0 %v3399
        %v3487 = vpop.f32.mrb[0].mxu0
        %v3488 = vadd.f32 0.0, %v3487
        %v3489 = vpop.f32.mrb[0].mxu0
        %v3490 = vpop.f32.mrb[0].mxu0
        %v3491 = vpop.f32.mrb[0].mxu0
        %3492 = vdwg.mxu0
        %v3497 = vunpack.c.l.b16 %v3288
        %v3498 = vunpack.c.l.b16 %v3289
        %v3499 = vunpack.c.l.b16 %v3290
        %v3500 = vunpack.c.l.b16 %v3291
        %v3501 = vpack.c.b16 %v3498, %v3497
        %v3502 = vpack.c.b16 %v3500, %v3499
        %3505 = vmatprep.subr.bf16.mxu0 0
        %3506 = vmatpush1.bf16.msra.mxu0 %v3501
        %3507 = vmatprep.subr.bf16.mxu0 0
        %3508 = vmatpush1.bf16.msra.mxu0 %v3502
        %3509 = vmatprep.subr.bf16.mxu0 0
        %3510 = vmatpush1.bf16.msra.mxu0 0
        %3511 = vmatprep.subr.bf16.mxu0 0
        %3512 = vmatpush1.bf16.msra.mxu0 0
        %3513 = vmatprep.subr.bf16.mxu0 0
        %3514 = vmatpush1.bf16.msra.mxu0 0
        %3515 = vmatprep.subr.bf16.mxu0 0
        %3516 = vmatpush1.bf16.msra.mxu0 0
        %3517 = vmatprep.subr.bf16.mxu0 0
        %3518 = vmatpush1.bf16.msra.mxu0 0
        %3519 = vmatprep.subr.bf16.mxu0 0
        %3520 = vmatpush1.bf16.msra.mxu0 0
        %3521 = vmatprep.subr.bf16.mxu0 0
        %3522 = vmatpush1.bf16.msra.mxu0 0
        %3523 = vmatprep.subr.bf16.mxu0 0
        %3524 = vmatpush1.bf16.msra.mxu0 0
        %3525 = vmatprep.subr.bf16.mxu0 0
        %3526 = vmatpush1.bf16.msra.mxu0 0
        %3527 = vmatprep.subr.bf16.mxu0 0
        %3528 = vmatpush1.bf16.msra.mxu0 0
        %3529 = vmatprep.subr.bf16.mxu0 0
        %3530 = vmatpush1.bf16.msra.mxu0 0
        %3531 = vmatprep.subr.bf16.mxu0 0
        %3532 = vmatpush1.bf16.msra.mxu0 0
        %3533 = vmatprep.subr.bf16.mxu0 0
        %3534 = vmatpush1.bf16.msra.mxu0 0
        %3535 = vmatprep.subr.bf16.mxu0 0
        %3536 = vmatpush1.bf16.msra.mxu0 0
        %3537 = vmatprep.mubr.bf16.mxu0 0
        %3538 = vmatmul.mubr.bf16.gmra.mrb[0].mxu0 %v3399
        %v3539 = vpop.f32.mrb[0].mxu0
        %v3540 = vadd.f32 0.0, %v3539
        %v3541 = vpop.f32.mrb[0].mxu0
        %v3542 = vpop.f32.mrb[0].mxu0
        %v3543 = vpop.f32.mrb[0].mxu0
        %3544 = vdwg.mxu0
        %v3549 = vunpack.c.l.b16 %v3292
        %v3550 = vunpack.c.l.b16 %v3293
        %v3551 = vunpack.c.l.b16 %v3294
        %v3552 = vunpack.c.l.b16 %v3295
        %v3553 = vpack.c.b16 %v3550, %v3549
        %v3554 = vpack.c.b16 %v3552, %v3551
        %3557 = vmatprep.subr.bf16.mxu0 0
        %3558 = vmatpush1.bf16.msra.mxu0 %v3553
        %3559 = vmatprep.subr.bf16.mxu0 0
        %3560 = vmatpush1.bf16.msra.mxu0 %v3554
        %3561 = vmatprep.subr.bf16.mxu0 0
        %3562 = vmatpush1.bf16.msra.mxu0 0
        %3563 = vmatprep.subr.bf16.mxu0 0
        %3564 = vmatpush1.bf16.msra.mxu0 0
        %3565 = vmatprep.subr.bf16.mxu0 0
        %3566 = vmatpush1.bf16.msra.mxu0 0
        %3567 = vmatprep.subr.bf16.mxu0 0
        %3568 = vmatpush1.bf16.msra.mxu0 0
        %3569 = vmatprep.subr.bf16.mxu0 0
        %3570 = vmatpush1.bf16.msra.mxu0 0
        %3571 = vmatprep.subr.bf16.mxu0 0
        %3572 = vmatpush1.bf16.msra.mxu0 0
        %3573 = vmatprep.subr.bf16.mxu0 0
        %3574 = vmatpush1.bf16.msra.mxu0 0
        %3575 = vmatprep.subr.bf16.mxu0 0
        %3576 = vmatpush1.bf16.msra.mxu0 0
        %3577 = vmatprep.subr.bf16.mxu0 0
        %3578 = vmatpush1.bf16.msra.mxu0 0
        %3579 = vmatprep.subr.bf16.mxu0 0
        %3580 = vmatpush1.bf16.msra.mxu0 0
        %3581 = vmatprep.subr.bf16.mxu0 0
        %3582 = vmatpush1.bf16.msra.mxu0 0
        %3583 = vmatprep.subr.bf16.mxu0 0
        %3584 = vmatpush1.bf16.msra.mxu0 0
        %3585 = vmatprep.subr.bf16.mxu0 0
        %3586 = vmatpush1.bf16.msra.mxu0 0
        %3587 = vmatprep.subr.bf16.mxu0 0
        %3588 = vmatpush1.bf16.msra.mxu0 0
        %3589 = vmatprep.mubr.bf16.mxu0 0
        %3590 = vmatmul.mubr.bf16.gmra.mrb[0].mxu0 %v3399
        %v3591 = vpop.f32.mrb[0].mxu0
        %v3592 = vadd.f32 0.0, %v3591
        %v3593 = vpop.f32.mrb[0].mxu0
        %v3594 = vpop.f32.mrb[0].mxu0
        %v3595 = vpop.f32.mrb[0].mxu0
        %3596 = vdwg.mxu0
        %v3601 = vunpack.c.l.b16 %v3296
        %v3602 = vunpack.c.l.b16 %v3297
        %v3603 = vunpack.c.l.b16 %v3298
        %v3604 = vunpack.c.l.b16 %v3299
        %v3605 = vpack.c.b16 %v3602, %v3601
        %v3606 = vpack.c.b16 %v3604, %v3603
        %3609 = vmatprep.subr.bf16.mxu0 0
        %3610 = vmatpush1.bf16.msra.mxu0 %v3605
        %3611 = vmatprep.subr.bf16.mxu0 0
        %3612 = vmatpush1.bf16.msra.mxu0 %v3606
        %3613 = vmatprep.subr.bf16.mxu0 0
        %3614 = vmatpush1.bf16.msra.mxu0 0
        %3615 = vmatprep.subr.bf16.mxu0 0
        %3616 = vmatpush1.bf16.msra.mxu0 0
        %3617 = vmatprep.subr.bf16.mxu0 0
        %3618 = vmatpush1.bf16.msra.mxu0 0
        %3619 = vmatprep.subr.bf16.mxu0 0
        %3620 = vmatpush1.bf16.msra.mxu0 0
        %3621 = vmatprep.subr.bf16.mxu0 0
        %3622 = vmatpush1.bf16.msra.mxu0 0
        %3623 = vmatprep.subr.bf16.mxu0 0
        %3624 = vmatpush1.bf16.msra.mxu0 0
        %3625 = vmatprep.subr.bf16.mxu0 0
        %3626 = vmatpush1.bf16.msra.mxu0 0
        %3627 = vmatprep.subr.bf16.mxu0 0
        %3628 = vmatpush1.bf16.msra.mxu0 0
        %3629 = vmatprep.subr.bf16.mxu0 0
        %3630 = vmatpush1.bf16.msra.mxu0 0
        %3631 = vmatprep.subr.bf16.mxu0 0
        %3632 = vmatpush1.bf16.msra.mxu0 0
        %3633 = vmatprep.subr.bf16.mxu0 0
        %3634 = vmatpush1.bf16.msra.mxu0 0
        %3635 = vmatprep.subr.bf16.mxu0 0
        %3636 = vmatpush1.bf16.msra.mxu0 0
        %3637 = vmatprep.subr.bf16.mxu0 0
        %3638 = vmatpush1.bf16.msra.mxu0 0
        %3639 = vmatprep.subr.bf16.mxu0 0
        %3640 = vmatpush1.bf16.msra.mxu0 0
        %3641 = vmatprep.mubr.bf16.mxu0 0
        %3642 = vmatmul.mubr.bf16.gmra.mrb[0].mxu0 %v3399
        %v3643 = vpop.f32.mrb[0].mxu0
        %v3644 = vadd.f32 0.0, %v3643
        %v3645 = vpop.f32.mrb[0].mxu0
        %v3646 = vpop.f32.mrb[0].mxu0
        %v3647 = vpop.f32.mrb[0].mxu0
        %3648 = vdwg.mxu0
        %v3653 = vunpack.c.l.b16 %v3300
        %v3654 = vunpack.c.l.b16 %v3301
        %v3655 = vunpack.c.l.b16 %v3302
        %v3656 = vunpack.c.l.b16 %v3303
        %v3657 = vpack.c.b16 %v3654, %v3653
        %v3658 = vpack.c.b16 %v3656, %v3655
        %3661 = vmatprep.subr.bf16.mxu0 0
        %3662 = vmatpush1.bf16.msra.mxu0 %v3657
        %3663 = vmatprep.subr.bf16.mxu0 0
        %3664 = vmatpush1.bf16.msra.mxu0 %v3658
        %3665 = vmatprep.subr.bf16.mxu0 0
        %3666 = vmatpush1.bf16.msra.mxu0 0
        %3667 = vmatprep.subr.bf16.mxu0 0
        %3668 = vmatpush1.bf16.msra.mxu0 0
        %3669 = vmatprep.subr.bf16.mxu0 0
        %3670 = vmatpush1.bf16.msra.mxu0 0
        %3671 = vmatprep.subr.bf16.mxu0 0
        %3672 = vmatpush1.bf16.msra.mxu0 0
        %3673 = vmatprep.subr.bf16.mxu0 0
        %3674 = vmatpush1.bf16.msra.mxu0 0
        %3675 = vmatprep.subr.bf16.mxu0 0
        %3676 = vmatpush1.bf16.msra.mxu0 0
        %3677 = vmatprep.subr.bf16.mxu0 0
        %3678 = vmatpush1.bf16.msra.mxu0 0
        %3679 = vmatprep.subr.bf16.mxu0 0
        %3680 = vmatpush1.bf16.msra.mxu0 0
        %3681 = vmatprep.subr.bf16.mxu0 0
        %3682 = vmatpush1.bf16.msra.mxu0 0
        %3683 = vmatprep.subr.bf16.mxu0 0
        %3684 = vmatpush1.bf16.msra.mxu0 0
        %3685 = vmatprep.subr.bf16.mxu0 0
        %3686 = vmatpush1.bf16.msra.mxu0 0
        %3687 = vmatprep.subr.bf16.mxu0 0
        %3688 = vmatpush1.bf16.msra.mxu0 0
        %3689 = vmatprep.subr.bf16.mxu0 0
        %3690 = vmatpush1.bf16.msra.mxu0 0
        %3691 = vmatprep.subr.bf16.mxu0 0
        %3692 = vmatpush1.bf16.msra.mxu0 0
        %3693 = vmatprep.mubr.bf16.mxu0 0
        %3694 = vmatmul.mubr.bf16.gmra.mrb[0].mxu0 %v3399
        %v3695 = vpop.f32.mrb[0].mxu0
        %v3696 = vadd.f32 0.0, %v3695
        %v3697 = vpop.f32.mrb[0].mxu0
        %v3698 = vpop.f32.mrb[0].mxu0
        %v3699 = vpop.f32.mrb[0].mxu0
        %3700 = vdwg.mxu0
        %v3705 = vunpack.c.l.b16 %v3304
        %v3706 = vunpack.c.l.b16 %v3305
        %v3707 = vunpack.c.l.b16 %v3306
        %v3708 = vunpack.c.l.b16 %v3307
        %v3709 = vpack.c.b16 %v3706, %v3705
        %v3710 = vpack.c.b16 %v3708, %v3707
        %3713 = vmatprep.subr.bf16.mxu0 0
        %3714 = vmatpush1.bf16.msra.mxu0 %v3709
        %3715 = vmatprep.subr.bf16.mxu0 0
        %3716 = vmatpush1.bf16.msra.mxu0 %v3710
        %3717 = vmatprep.subr.bf16.mxu0 0
        %3718 = vmatpush1.bf16.msra.mxu0 0
        %3719 = vmatprep.subr.bf16.mxu0 0
        %3720 = vmatpush1.bf16.msra.mxu0 0
        %3721 = vmatprep.subr.bf16.mxu0 0
        %3722 = vmatpush1.bf16.msra.mxu0 0
        %3723 = vmatprep.subr.bf16.mxu0 0
        %3724 = vmatpush1.bf16.msra.mxu0 0
        %3725 = vmatprep.subr.bf16.mxu0 0
        %3726 = vmatpush1.bf16.msra.mxu0 0
        %3727 = vmatprep.subr.bf16.mxu0 0
        %3728 = vmatpush1.bf16.msra.mxu0 0
        %3729 = vmatprep.subr.bf16.mxu0 0
        %3730 = vmatpush1.bf16.msra.mxu0 0
        %3731 = vmatprep.subr.bf16.mxu0 0
        %3732 = vmatpush1.bf16.msra.mxu0 0
        %3733 = vmatprep.subr.bf16.mxu0 0
        %3734 = vmatpush1.bf16.msra.mxu0 0
        %3735 = vmatprep.subr.bf16.mxu0 0
        %3736 = vmatpush1.bf16.msra.mxu0 0
        %3737 = vmatprep.subr.bf16.mxu0 0
        %3738 = vmatpush1.bf16.msra.mxu0 0
        %3739 = vmatprep.subr.bf16.mxu0 0
        %3740 = vmatpush1.bf16.msra.mxu0 0
        %3741 = vmatprep.subr.bf16.mxu0 0
        %3742 = vmatpush1.bf16.msra.mxu0 0
        %3743 = vmatprep.subr.bf16.mxu0 0
        %3744 = vmatpush1.bf16.msra.mxu0 0
        %3745 = vmatprep.mubr.bf16.mxu0 0
        %3746 = vmatmul.mubr.bf16.gmra.mrb[0].mxu0 %v3399
        %v3747 = vpop.f32.mrb[0].mxu0
        %v3748 = vadd.f32 0.0, %v3747
        %v3749 = vpop.f32.mrb[0].mxu0
        %v3750 = vpop.f32.mrb[0].mxu0
        %v3751 = vpop.f32.mrb[0].mxu0
        %3752 = vdwg.mxu0
        %v3757 = vunpack.c.l.b16 %v3308
        %v3758 = vunpack.c.l.b16 %v3309
        %v3759 = vunpack.c.l.b16 %v3310
        %v3760 = vunpack.c.l.b16 %v3311
        %v3761 = vpack.c.b16 %v3758, %v3757
        %v3762 = vpack.c.b16 %v3760, %v3759
        %3765 = vmatprep.subr.bf16.mxu0 0
        %3766 = vmatpush1.bf16.msra.mxu0 %v3761
        %3767 = vmatprep.subr.bf16.mxu0 0
        %3768 = vmatpush1.bf16.msra.mxu0 %v3762
        %3769 = vmatprep.subr.bf16.mxu0 0
        %3770 = vmatpush1.bf16.msra.mxu0 0
        %3771 = vmatprep.subr.bf16.mxu0 0
        %3772 = vmatpush1.bf16.msra.mxu0 0
        %3773 = vmatprep.subr.bf16.mxu0 0
        %3774 = vmatpush1.bf16.msra.mxu0 0
        %3775 = vmatprep.subr.bf16.mxu0 0
        %3776 = vmatpush1.bf16.msra.mxu0 0
        %3777 = vmatprep.subr.bf16.mxu0 0
        %3778 = vmatpush1.bf16.msra.mxu0 0
        %3779 = vmatprep.subr.bf16.mxu0 0
        %3780 = vmatpush1.bf16.msra.mxu0 0
        %3781 = vmatprep.subr.bf16.mxu0 0
        %3782 = vmatpush1.bf16.msra.mxu0 0
        %3783 = vmatprep.subr.bf16.mxu0 0
        %3784 = vmatpush1.bf16.msra.mxu0 0
        %3785 = vmatprep.subr.bf16.mxu0 0
        %3786 = vmatpush1.bf16.msra.mxu0 0
        %3787 = vmatprep.subr.bf16.mxu0 0
        %3788 = vmatpush1.bf16.msra.mxu0 0
        %3789 = vmatprep.subr.bf16.mxu0 0
        %3790 = vmatpush1.bf16.msra.mxu0 0
        %3791 = vmatprep.subr.bf16.mxu0 0
        %3792 = vmatpush1.bf16.msra.mxu0 0
        %3793 = vmatprep.subr.bf16.mxu0 0
        %3794 = vmatpush1.bf16.msra.mxu0 0
        %3795 = vmatprep.subr.bf16.mxu0 0
        %3796 = vmatpush1.bf16.msra.mxu0 0
        %3797 = vmatprep.mubr.bf16.mxu0 0
        %3798 = vmatmul.mubr.bf16.gmra.mrb[0].mxu0 %v3399
        %v3799 = vpop.f32.mrb[0].mxu0
        %v3800 = vadd.f32 0.0, %v3799
        %v3801 = vpop.f32.mrb[0].mxu0
        %v3802 = vpop.f32.mrb[0].mxu0
        %v3803 = vpop.f32.mrb[0].mxu0
        %3804 = vdwg.mxu0
        %v3809 = vunpack.c.l.b16 %v3312
        %v3810 = vunpack.c.l.b16 %v3313
        %v3811 = vunpack.c.l.b16 %v3314
        %v3812 = vunpack.c.l.b16 %v3315
        %v3813 = vpack.c.b16 %v3810, %v3809
        %v3814 = vpack.c.b16 %v3812, %v3811
        %v3818 = vsel %vm749, %v3385, 0
        %3820 = vmatprep.subr.bf16.mxu0 0
        %3821 = vmatpush1.bf16.msra.mxu0 %v3813
        %3822 = vmatprep.subr.bf16.mxu0 0
        %3823 = vmatpush1.bf16.msra.mxu0 %v3814
        %3824 = vmatprep.subr.bf16.mxu0 0
        %3825 = vmatpush1.bf16.msra.mxu0 0
        %3826 = vmatprep.subr.bf16.mxu0 0
        %3827 = vmatpush1.bf16.msra.mxu0 0
        %3828 = vmatprep.subr.bf16.mxu0 0
        %3829 = vmatpush1.bf16.msra.mxu0 0
        %3830 = vmatprep.subr.bf16.mxu0 0
        %3831 = vmatpush1.bf16.msra.mxu0 0
        %3832 = vmatprep.subr.bf16.mxu0 0
        %3833 = vmatpush1.bf16.msra.mxu0 0
        %3834 = vmatprep.subr.bf16.mxu0 0
        %3835 = vmatpush1.bf16.msra.mxu0 0
        %3836 = vmatprep.subr.bf16.mxu0 0
        %3837 = vmatpush1.bf16.msra.mxu0 0
        %3838 = vmatprep.subr.bf16.mxu0 0
        %3839 = vmatpush1.bf16.msra.mxu0 0
        %3840 = vmatprep.subr.bf16.mxu0 0
        %3841 = vmatpush1.bf16.msra.mxu0 0
        %3842 = vmatprep.subr.bf16.mxu0 0
        %3843 = vmatpush1.bf16.msra.mxu0 0
        %3844 = vmatprep.subr.bf16.mxu0 0
        %3845 = vmatpush1.bf16.msra.mxu0 0
        %3846 = vmatprep.subr.bf16.mxu0 0
        %3847 = vmatpush1.bf16.msra.mxu0 0
        %3848 = vmatprep.subr.bf16.mxu0 0
        %3849 = vmatpush1.bf16.msra.mxu0 0
        %3850 = vmatprep.subr.bf16.mxu0 0
        %3851 = vmatpush1.bf16.msra.mxu0 0
        %3852 = vmatprep.mubr.bf16.mxu0 0
        %3853 = vmatmul.mubr.bf16.gmra.mrb[0].mxu0 %v3818
        %v3854 = vpop.f32.mrb[0].mxu0
        %v3855 = vadd.f32 0.0, %v3854
        %v3856 = vpop.f32.mrb[0].mxu0
        %v3857 = vpop.f32.mrb[0].mxu0
        %v3858 = vpop.f32.mrb[0].mxu0
        %3859 = vdwg.mxu0
        %v3864 = vunpack.c.l.b16 %v3316
        %v3865 = vunpack.c.l.b16 %v3317
        %v3866 = vunpack.c.l.b16 %v3318
        %v3867 = vunpack.c.l.b16 %v3319
        %v3868 = vpack.c.b16 %v3865, %v3864
        %v3869 = vpack.c.b16 %v3867, %v3866
        %3872 = vmatprep.subr.bf16.mxu0 0
        %3873 = vmatpush1.bf16.msra.mxu0 %v3868
        %3874 = vmatprep.subr.bf16.mxu0 0
        %3875 = vmatpush1.bf16.msra.mxu0 %v3869
        %3876 = vmatprep.subr.bf16.mxu0 0
        %3877 = vmatpush1.bf16.msra.mxu0 0
        %3878 = vmatprep.subr.bf16.mxu0 0
        %3879 = vmatpush1.bf16.msra.mxu0 0
        %3880 = vmatprep.subr.bf16.mxu0 0
        %3881 = vmatpush1.bf16.msra.mxu0 0
        %3882 = vmatprep.subr.bf16.mxu0 0
        %3883 = vmatpush1.bf16.msra.mxu0 0
        %3884 = vmatprep.subr.bf16.mxu0 0
        %3885 = vmatpush1.bf16.msra.mxu0 0
        %3886 = vmatprep.subr.bf16.mxu0 0
        %3887 = vmatpush1.bf16.msra.mxu0 0
        %3888 = vmatprep.subr.bf16.mxu0 0
        %3889 = vmatpush1.bf16.msra.mxu0 0
        %3890 = vmatprep.subr.bf16.mxu0 0
        %3891 = vmatpush1.bf16.msra.mxu0 0
        %3892 = vmatprep.subr.bf16.mxu0 0
        %3893 = vmatpush1.bf16.msra.mxu0 0
        %3894 = vmatprep.subr.bf16.mxu0 0
        %3895 = vmatpush1.bf16.msra.mxu0 0
        %3896 = vmatprep.subr.bf16.mxu0 0
        %3897 = vmatpush1.bf16.msra.mxu0 0
        %3898 = vmatprep.subr.bf16.mxu0 0
        %3899 = vmatpush1.bf16.msra.mxu0 0
        %3900 = vmatprep.subr.bf16.mxu0 0
        %3901 = vmatpush1.bf16.msra.mxu0 0
        %3902 = vmatprep.subr.bf16.mxu0 0
        %3903 = vmatpush1.bf16.msra.mxu0 0
        %3904 = vmatprep.mubr.bf16.mxu0 0
        %3905 = vmatmul.mubr.bf16.gmra.mrb[0].mxu0 %v3818
        %v3906 = vpop.f32.mrb[0].mxu0
        %v3907 = vadd.f32 0.0, %v3906
        %v3908 = vpop.f32.mrb[0].mxu0
        %v3909 = vpop.f32.mrb[0].mxu0
        %v3910 = vpop.f32.mrb[0].mxu0
        %3911 = vdwg.mxu0
        %v3916 = vunpack.c.l.b16 %v3320
        %v3917 = vunpack.c.l.b16 %v3321
        %v3918 = vunpack.c.l.b16 %v3322
        %v3919 = vunpack.c.l.b16 %v3323
        %v3920 = vpack.c.b16 %v3917, %v3916
        %v3921 = vpack.c.b16 %v3919, %v3918
        %3924 = vmatprep.subr.bf16.mxu0 0
        %3925 = vmatpush1.bf16.msra.mxu0 %v3920
        %3926 = vmatprep.subr.bf16.mxu0 0
        %3927 = vmatpush1.bf16.msra.mxu0 %v3921
        %3928 = vmatprep.subr.bf16.mxu0 0
        %3929 = vmatpush1.bf16.msra.mxu0 0
        %3930 = vmatprep.subr.bf16.mxu0 0
        %3931 = vmatpush1.bf16.msra.mxu0 0
        %3932 = vmatprep.subr.bf16.mxu0 0
        %3933 = vmatpush1.bf16.msra.mxu0 0
        %3934 = vmatprep.subr.bf16.mxu0 0
        %3935 = vmatpush1.bf16.msra.mxu0 0
        %3936 = vmatprep.subr.bf16.mxu0 0
        %3937 = vmatpush1.bf16.msra.mxu0 0
        %3938 = vmatprep.subr.bf16.mxu0 0
        %3939 = vmatpush1.bf16.msra.mxu0 0
        %3940 = vmatprep.subr.bf16.mxu0 0
        %3941 = vmatpush1.bf16.msra.mxu0 0
        %3942 = vmatprep.subr.bf16.mxu0 0
        %3943 = vmatpush1.bf16.msra.mxu0 0
        %3944 = vmatprep.subr.bf16.mxu0 0
        %3945 = vmatpush1.bf16.msra.mxu0 0
        %3946 = vmatprep.subr.bf16.mxu0 0
        %3947 = vmatpush1.bf16.msra.mxu0 0
        %3948 = vmatprep.subr.bf16.mxu0 0
        %3949 = vmatpush1.bf16.msra.mxu0 0
        %3950 = vmatprep.subr.bf16.mxu0 0
        %3951 = vmatpush1.bf16.msra.mxu0 0
        %3952 = vmatprep.subr.bf16.mxu0 0
        %3953 = vmatpush1.bf16.msra.mxu0 0
        %3954 = vmatprep.subr.bf16.mxu0 0
        %3955 = vmatpush1.bf16.msra.mxu0 0
        %3956 = vmatprep.mubr.bf16.mxu0 0
        %3957 = vmatmul.mubr.bf16.gmra.mrb[0].mxu0 %v3818
        %v3958 = vpop.f32.mrb[0].mxu0
        %v3959 = vadd.f32 0.0, %v3958
        %v3960 = vpop.f32.mrb[0].mxu0
        %v3961 = vpop.f32.mrb[0].mxu0
        %v3962 = vpop.f32.mrb[0].mxu0
        %3963 = vdwg.mxu0
        %v3968 = vunpack.c.l.b16 %v3324
        %v3969 = vunpack.c.l.b16 %v3325
        %v3970 = vunpack.c.l.b16 %v3326
        %v3971 = vunpack.c.l.b16 %v3327
        %v3972 = vpack.c.b16 %v3969, %v3968
        %v3973 = vpack.c.b16 %v3971, %v3970
        %3976 = vmatprep.subr.bf16.mxu0 0
        %3977 = vmatpush1.bf16.msra.mxu0 %v3972
        %3978 = vmatprep.subr.bf16.mxu0 0
        %3979 = vmatpush1.bf16.msra.mxu0 %v3973
        %3980 = vmatprep.subr.bf16.mxu0 0
        %3981 = vmatpush1.bf16.msra.mxu0 0
        %3982 = vmatprep.subr.bf16.mxu0 0
        %3983 = vmatpush1.bf16.msra.mxu0 0
        %3984 = vmatprep.subr.bf16.mxu0 0
        %3985 = vmatpush1.bf16.msra.mxu0 0
        %3986 = vmatprep.subr.bf16.mxu0 0
        %3987 = vmatpush1.bf16.msra.mxu0 0
        %3988 = vmatprep.subr.bf16.mxu0 0
        %3989 = vmatpush1.bf16.msra.mxu0 0
        %3990 = vmatprep.subr.bf16.mxu0 0
        %3991 = vmatpush1.bf16.msra.mxu0 0
        %3992 = vmatprep.subr.bf16.mxu0 0
        %3993 = vmatpush1.bf16.msra.mxu0 0
        %3994 = vmatprep.subr.bf16.mxu0 0
        %3995 = vmatpush1.bf16.msra.mxu0 0
        %3996 = vmatprep.subr.bf16.mxu0 0
        %3997 = vmatpush1.bf16.msra.mxu0 0
        %3998 = vmatprep.subr.bf16.mxu0 0
        %3999 = vmatpush1.bf16.msra.mxu0 0
        %4000 = vmatprep.subr.bf16.mxu0 0
        %4001 = vmatpush1.bf16.msra.mxu0 0
        %4002 = vmatprep.subr.bf16.mxu0 0
        %4003 = vmatpush1.bf16.msra.mxu0 0
        %4004 = vmatprep.subr.bf16.mxu0 0
        %4005 = vmatpush1.bf16.msra.mxu0 0
        %4006 = vmatprep.subr.bf16.mxu0 0
        %4007 = vmatpush1.bf16.msra.mxu0 0
        %4008 = vmatprep.mubr.bf16.mxu0 0
        %4009 = vmatmul.mubr.bf16.gmra.mrb[0].mxu0 %v3818
        %v4010 = vpop.f32.mrb[0].mxu0
        %v4011 = vadd.f32 0.0, %v4010
        %v4012 = vpop.f32.mrb[0].mxu0
        %v4013 = vpop.f32.mrb[0].mxu0
        %v4014 = vpop.f32.mrb[0].mxu0
        %4015 = vdwg.mxu0
        %v4020 = vunpack.c.l.b16 %v3328
        %v4021 = vunpack.c.l.b16 %v3329
        %v4022 = vunpack.c.l.b16 %v3330
        %v4023 = vunpack.c.l.b16 %v3331
        %v4024 = vpack.c.b16 %v4021, %v4020
        %v4025 = vpack.c.b16 %v4023, %v4022
        %4028 = vmatprep.subr.bf16.mxu0 0
        %4029 = vmatpush1.bf16.msra.mxu0 %v4024
        %4030 = vmatprep.subr.bf16.mxu0 0
        %4031 = vmatpush1.bf16.msra.mxu0 %v4025
        %4032 = vmatprep.subr.bf16.mxu0 0
        %4033 = vmatpush1.bf16.msra.mxu0 0
        %4034 = vmatprep.subr.bf16.mxu0 0
        %4035 = vmatpush1.bf16.msra.mxu0 0
        %4036 = vmatprep.subr.bf16.mxu0 0
        %4037 = vmatpush1.bf16.msra.mxu0 0
        %4038 = vmatprep.subr.bf16.mxu0 0
        %4039 = vmatpush1.bf16.msra.mxu0 0
        %4040 = vmatprep.subr.bf16.mxu0 0
        %4041 = vmatpush1.bf16.msra.mxu0 0
        %4042 = vmatprep.subr.bf16.mxu0 0
        %4043 = vmatpush1.bf16.msra.mxu0 0
        %4044 = vmatprep.subr.bf16.mxu0 0
        %4045 = vmatpush1.bf16.msra.mxu0 0
        %4046 = vmatprep.subr.bf16.mxu0 0
        %4047 = vmatpush1.bf16.msra.mxu0 0
        %4048 = vmatprep.subr.bf16.mxu0 0
        %4049 = vmatpush1.bf16.msra.mxu0 0
        %4050 = vmatprep.subr.bf16.mxu0 0
        %4051 = vmatpush1.bf16.msra.mxu0 0
        %4052 = vmatprep.subr.bf16.mxu0 0
        %4053 = vmatpush1.bf16.msra.mxu0 0
        %4054 = vmatprep.subr.bf16.mxu0 0
        %4055 = vmatpush1.bf16.msra.mxu0 0
        %4056 = vmatprep.subr.bf16.mxu0 0
        %4057 = vmatpush1.bf16.msra.mxu0 0
        %4058 = vmatprep.subr.bf16.mxu0 0
        %4059 = vmatpush1.bf16.msra.mxu0 0
        %4060 = vmatprep.mubr.bf16.mxu0 0
        %4061 = vmatmul.mubr.bf16.gmra.mrb[0].mxu0 %v3818
        %v4062 = vpop.f32.mrb[0].mxu0
        %v4063 = vadd.f32 0.0, %v4062
        %v4064 = vpop.f32.mrb[0].mxu0
        %v4065 = vpop.f32.mrb[0].mxu0
        %v4066 = vpop.f32.mrb[0].mxu0
        %4067 = vdwg.mxu0
        %v4072 = vunpack.c.l.b16 %v3332
        %v4073 = vunpack.c.l.b16 %v3333
        %v4074 = vunpack.c.l.b16 %v3334
        %v4075 = vunpack.c.l.b16 %v3335
        %v4076 = vpack.c.b16 %v4073, %v4072
        %v4077 = vpack.c.b16 %v4075, %v4074
        %4080 = vmatprep.subr.bf16.mxu0 0
        %4081 = vmatpush1.bf16.msra.mxu0 %v4076
        %4082 = vmatprep.subr.bf16.mxu0 0
        %4083 = vmatpush1.bf16.msra.mxu0 %v4077
        %4084 = vmatprep.subr.bf16.mxu0 0
        %4085 = vmatpush1.bf16.msra.mxu0 0
        %4086 = vmatprep.subr.bf16.mxu0 0
        %4087 = vmatpush1.bf16.msra.mxu0 0
        %4088 = vmatprep.subr.bf16.mxu0 0
        %4089 = vmatpush1.bf16.msra.mxu0 0
        %4090 = vmatprep.subr.bf16.mxu0 0
        %4091 = vmatpush1.bf16.msra.mxu0 0
        %4092 = vmatprep.subr.bf16.mxu0 0
        %4093 = vmatpush1.bf16.msra.mxu0 0
        %4094 = vmatprep.subr.bf16.mxu0 0
        %4095 = vmatpush1.bf16.msra.mxu0 0
        %4096 = vmatprep.subr.bf16.mxu0 0
        %4097 = vmatpush1.bf16.msra.mxu0 0
        %4098 = vmatprep.subr.bf16.mxu0 0
        %4099 = vmatpush1.bf16.msra.mxu0 0
        %4100 = vmatprep.subr.bf16.mxu0 0
        %4101 = vmatpush1.bf16.msra.mxu0 0
        %4102 = vmatprep.subr.bf16.mxu0 0
        %4103 = vmatpush1.bf16.msra.mxu0 0
        %4104 = vmatprep.subr.bf16.mxu0 0
        %4105 = vmatpush1.bf16.msra.mxu0 0
        %4106 = vmatprep.subr.bf16.mxu0 0
        %4107 = vmatpush1.bf16.msra.mxu0 0
        %4108 = vmatprep.subr.bf16.mxu0 0
        %4109 = vmatpush1.bf16.msra.mxu0 0
        %4110 = vmatprep.subr.bf16.mxu0 0
        %4111 = vmatpush1.bf16.msra.mxu0 0
        %4112 = vmatprep.mubr.bf16.mxu0 0
        %4113 = vmatmul.mubr.bf16.gmra.mrb[0].mxu0 %v3818
        %v4114 = vpop.f32.mrb[0].mxu0
        %v4115 = vadd.f32 0.0, %v4114
        %v4116 = vpop.f32.mrb[0].mxu0
        %v4117 = vpop.f32.mrb[0].mxu0
        %v4118 = vpop.f32.mrb[0].mxu0
        %4119 = vdwg.mxu0
        %v4124 = vunpack.c.l.b16 %v3336
        %v4125 = vunpack.c.l.b16 %v3337
        %v4126 = vunpack.c.l.b16 %v3338
        %v4127 = vunpack.c.l.b16 %v3339
        %v4128 = vpack.c.b16 %v4125, %v4124
        %v4129 = vpack.c.b16 %v4127, %v4126
        %4132 = vmatprep.subr.bf16.mxu0 0
        %4133 = vmatpush1.bf16.msra.mxu0 %v4128
        %4134 = vmatprep.subr.bf16.mxu0 0
        %4135 = vmatpush1.bf16.msra.mxu0 %v4129
        %4136 = vmatprep.subr.bf16.mxu0 0
        %4137 = vmatpush1.bf16.msra.mxu0 0
        %4138 = vmatprep.subr.bf16.mxu0 0
        %4139 = vmatpush1.bf16.msra.mxu0 0
        %4140 = vmatprep.subr.bf16.mxu0 0
        %4141 = vmatpush1.bf16.msra.mxu0 0
        %4142 = vmatprep.subr.bf16.mxu0 0
        %4143 = vmatpush1.bf16.msra.mxu0 0
        %4144 = vmatprep.subr.bf16.mxu0 0
        %4145 = vmatpush1.bf16.msra.mxu0 0
        %4146 = vmatprep.subr.bf16.mxu0 0
        %4147 = vmatpush1.bf16.msra.mxu0 0
        %4148 = vmatprep.subr.bf16.mxu0 0
        %4149 = vmatpush1.bf16.msra.mxu0 0
        %4150 = vmatprep.subr.bf16.mxu0 0
        %4151 = vmatpush1.bf16.msra.mxu0 0
        %4152 = vmatprep.subr.bf16.mxu0 0
        %4153 = vmatpush1.bf16.msra.mxu0 0
        %4154 = vmatprep.subr.bf16.mxu0 0
        %4155 = vmatpush1.bf16.msra.mxu0 0
        %4156 = vmatprep.subr.bf16.mxu0 0
        %4157 = vmatpush1.bf16.msra.mxu0 0
        %4158 = vmatprep.subr.bf16.mxu0 0
        %4159 = vmatpush1.bf16.msra.mxu0 0
        %4160 = vmatprep.subr.bf16.mxu0 0
        %4161 = vmatpush1.bf16.msra.mxu0 0
        %4162 = vmatprep.subr.bf16.mxu0 0
        %4163 = vmatpush1.bf16.msra.mxu0 0
        %4164 = vmatprep.mubr.bf16.mxu0 0
        %4165 = vmatmul.mubr.bf16.gmra.mrb[0].mxu0 %v3818
        %v4166 = vpop.f32.mrb[0].mxu0
        %v4167 = vadd.f32 0.0, %v4166
        %v4168 = vpop.f32.mrb[0].mxu0
        %v4169 = vpop.f32.mrb[0].mxu0
        %v4170 = vpop.f32.mrb[0].mxu0
        %4171 = vdwg.mxu0
        %v4176 = vunpack.c.l.b16 %v3340
        %v4177 = vunpack.c.l.b16 %v3341
        %v4178 = vunpack.c.l.b16 %v3342
        %v4179 = vunpack.c.l.b16 %v3343
        %v4180 = vpack.c.b16 %v4177, %v4176
        %v4181 = vpack.c.b16 %v4179, %v4178
        %4184 = vmatprep.subr.bf16.mxu0 0
        %4185 = vmatpush1.bf16.msra.mxu0 %v4180
        %4186 = vmatprep.subr.bf16.mxu0 0
        %4187 = vmatpush1.bf16.msra.mxu0 %v4181
        %4188 = vmatprep.subr.bf16.mxu0 0
        %4189 = vmatpush1.bf16.msra.mxu0 0
        %4190 = vmatprep.subr.bf16.mxu0 0
        %4191 = vmatpush1.bf16.msra.mxu0 0
        %4192 = vmatprep.subr.bf16.mxu0 0
        %4193 = vmatpush1.bf16.msra.mxu0 0
        %4194 = vmatprep.subr.bf16.mxu0 0
        %4195 = vmatpush1.bf16.msra.mxu0 0
        %4196 = vmatprep.subr.bf16.mxu0 0
        %4197 = vmatpush1.bf16.msra.mxu0 0
        %4198 = vmatprep.subr.bf16.mxu0 0
        %4199 = vmatpush1.bf16.msra.mxu0 0
        %4200 = vmatprep.subr.bf16.mxu0 0
        %4201 = vmatpush1.bf16.msra.mxu0 0
        %4202 = vmatprep.subr.bf16.mxu0 0
        %4203 = vmatpush1.bf16.msra.mxu0 0
        %4204 = vmatprep.subr.bf16.mxu0 0
        %4205 = vmatpush1.bf16.msra.mxu0 0
        %4206 = vmatprep.subr.bf16.mxu0 0
        %4207 = vmatpush1.bf16.msra.mxu0 0
        %4208 = vmatprep.subr.bf16.mxu0 0
        %4209 = vmatpush1.bf16.msra.mxu0 0
        %4210 = vmatprep.subr.bf16.mxu0 0
        %4211 = vmatpush1.bf16.msra.mxu0 0
        %4212 = vmatprep.subr.bf16.mxu0 0
        %4213 = vmatpush1.bf16.msra.mxu0 0
        %4214 = vmatprep.subr.bf16.mxu0 0
        %4215 = vmatpush1.bf16.msra.mxu0 0
        %4216 = vmatprep.mubr.bf16.mxu0 0
        %4217 = vmatmul.mubr.bf16.gmra.mrb[0].mxu0 %v3818
        %v4218 = vpop.f32.mrb[0].mxu0
        %v4219 = vadd.f32 0.0, %v4218
        %v4220 = vpop.f32.mrb[0].mxu0
        %v4221 = vpop.f32.mrb[0].mxu0
        %v4222 = vpop.f32.mrb[0].mxu0
        %4223 = vdwg.mxu0
        %v4228 = vunpack.c.l.b16 %v3344
        %v4229 = vunpack.c.l.b16 %v3345
        %v4230 = vunpack.c.l.b16 %v3346
        %v4231 = vunpack.c.l.b16 %v3347
        %v4232 = vpack.c.b16 %v4229, %v4228
        %v4233 = vpack.c.b16 %v4231, %v4230
        %4236 = vmatprep.subr.bf16.mxu0 0
        %4237 = vmatpush1.bf16.msra.mxu0 %v4232
        %4238 = vmatprep.subr.bf16.mxu0 0
        %4239 = vmatpush1.bf16.msra.mxu0 %v4233
        %4240 = vmatprep.subr.bf16.mxu0 0
        %4241 = vmatpush1.bf16.msra.mxu0 0
        %4242 = vmatprep.subr.bf16.mxu0 0
        %4243 = vmatpush1.bf16.msra.mxu0 0
        %4244 = vmatprep.subr.bf16.mxu0 0
        %4245 = vmatpush1.bf16.msra.mxu0 0
        %4246 = vmatprep.subr.bf16.mxu0 0
        %4247 = vmatpush1.bf16.msra.mxu0 0
        %4248 = vmatprep.subr.bf16.mxu0 0
        %4249 = vmatpush1.bf16.msra.mxu0 0
        %4250 = vmatprep.subr.bf16.mxu0 0
        %4251 = vmatpush1.bf16.msra.mxu0 0
        %4252 = vmatprep.subr.bf16.mxu0 0
        %4253 = vmatpush1.bf16.msra.mxu0 0
        %4254 = vmatprep.subr.bf16.mxu0 0
        %4255 = vmatpush1.bf16.msra.mxu0 0
        %4256 = vmatprep.subr.bf16.mxu0 0
        %4257 = vmatpush1.bf16.msra.mxu0 0
        %4258 = vmatprep.subr.bf16.mxu0 0
        %4259 = vmatpush1.bf16.msra.mxu0 0
        %4260 = vmatprep.subr.bf16.mxu0 0
        %4261 = vmatpush1.bf16.msra.mxu0 0
        %4262 = vmatprep.subr.bf16.mxu0 0
        %4263 = vmatpush1.bf16.msra.mxu0 0
        %4264 = vmatprep.subr.bf16.mxu0 0
        %4265 = vmatpush1.bf16.msra.mxu0 0
        %4266 = vmatprep.subr.bf16.mxu0 0
        %4267 = vmatpush1.bf16.msra.mxu0 0
        %4268 = vmatprep.mubr.bf16.mxu0 0
        %4269 = vmatmul.mubr.bf16.gmra.mrb[0].mxu0 %v3818
        %v4270 = vpop.f32.mrb[0].mxu0
        %v4271 = vadd.f32 0.0, %v4270
        %v4272 = vpop.f32.mrb[0].mxu0
        %v4273 = vpop.f32.mrb[0].mxu0
        %v4274 = vpop.f32.mrb[0].mxu0
        %4275 = vdwg.mxu0
        %v4280 = vunpack.c.l.b16 %v3348
        %v4281 = vunpack.c.l.b16 %v3349
        %v4282 = vunpack.c.l.b16 %v3350
        %v4283 = vunpack.c.l.b16 %v3351
        %v4284 = vpack.c.b16 %v4281, %v4280
        %v4285 = vpack.c.b16 %v4283, %v4282
        %4288 = vmatprep.subr.bf16.mxu0 0
        %4289 = vmatpush1.bf16.msra.mxu0 %v4284
        %4290 = vmatprep.subr.bf16.mxu0 0
        %4291 = vmatpush1.bf16.msra.mxu0 %v4285
        %4292 = vmatprep.subr.bf16.mxu0 0
        %4293 = vmatpush1.bf16.msra.mxu0 0
        %4294 = vmatprep.subr.bf16.mxu0 0
        %4295 = vmatpush1.bf16.msra.mxu0 0
        %4296 = vmatprep.subr.bf16.mxu0 0
        %4297 = vmatpush1.bf16.msra.mxu0 0
        %4298 = vmatprep.subr.bf16.mxu0 0
        %4299 = vmatpush1.bf16.msra.mxu0 0
        %4300 = vmatprep.subr.bf16.mxu0 0
        %4301 = vmatpush1.bf16.msra.mxu0 0
        %4302 = vmatprep.subr.bf16.mxu0 0
        %4303 = vmatpush1.bf16.msra.mxu0 0
        %4304 = vmatprep.subr.bf16.mxu0 0
        %4305 = vmatpush1.bf16.msra.mxu0 0
        %4306 = vmatprep.subr.bf16.mxu0 0
        %4307 = vmatpush1.bf16.msra.mxu0 0
        %4308 = vmatprep.subr.bf16.mxu0 0
        %4309 = vmatpush1.bf16.msra.mxu0 0
        %4310 = vmatprep.subr.bf16.mxu0 0
        %4311 = vmatpush1.bf16.msra.mxu0 0
        %4312 = vmatprep.subr.bf16.mxu0 0
        %4313 = vmatpush1.bf16.msra.mxu0 0
        %4314 = vmatprep.subr.bf16.mxu0 0
        %4315 = vmatpush1.bf16.msra.mxu0 0
        %4316 = vmatprep.subr.bf16.mxu0 0
        %4317 = vmatpush1.bf16.msra.mxu0 0
        %4318 = vmatprep.subr.bf16.mxu0 0
        %4319 = vmatpush1.bf16.msra.mxu0 0
        %4320 = vmatprep.mubr.bf16.mxu0 0
        %4321 = vmatmul.mubr.bf16.gmra.mrb[0].mxu0 %v3818
        %v4322 = vpop.f32.mrb[0].mxu0
        %v4323 = vadd.f32 0.0, %v4322
        %v4324 = vpop.f32.mrb[0].mxu0
        %v4325 = vpop.f32.mrb[0].mxu0
        %v4326 = vpop.f32.mrb[0].mxu0
        %4327 = vdwg.mxu0
        %v4332 = vunpack.c.l.b16 %v3352
        %v4333 = vunpack.c.l.b16 %v3353
        %v4334 = vunpack.c.l.b16 %v3354
        %v4335 = vunpack.c.l.b16 %v3355
        %v4336 = vpack.c.b16 %v4333, %v4332
        %v4337 = vpack.c.b16 %v4335, %v4334
        %4340 = vmatprep.subr.bf16.mxu0 0
        %4341 = vmatpush1.bf16.msra.mxu0 %v4336
        %4342 = vmatprep.subr.bf16.mxu0 0
        %4343 = vmatpush1.bf16.msra.mxu0 %v4337
        %4344 = vmatprep.subr.bf16.mxu0 0
        %4345 = vmatpush1.bf16.msra.mxu0 0
        %4346 = vmatprep.subr.bf16.mxu0 0
        %4347 = vmatpush1.bf16.msra.mxu0 0
        %4348 = vmatprep.subr.bf16.mxu0 0
        %4349 = vmatpush1.bf16.msra.mxu0 0
        %4350 = vmatprep.subr.bf16.mxu0 0
        %4351 = vmatpush1.bf16.msra.mxu0 0
        %4352 = vmatprep.subr.bf16.mxu0 0
        %4353 = vmatpush1.bf16.msra.mxu0 0
        %4354 = vmatprep.subr.bf16.mxu0 0
        %4355 = vmatpush1.bf16.msra.mxu0 0
        %4356 = vmatprep.subr.bf16.mxu0 0
        %4357 = vmatpush1.bf16.msra.mxu0 0
        %4358 = vmatprep.subr.bf16.mxu0 0
        %4359 = vmatpush1.bf16.msra.mxu0 0
        %4360 = vmatprep.subr.bf16.mxu0 0
        %4361 = vmatpush1.bf16.msra.mxu0 0
        %4362 = vmatprep.subr.bf16.mxu0 0
        %4363 = vmatpush1.bf16.msra.mxu0 0
        %4364 = vmatprep.subr.bf16.mxu0 0
        %4365 = vmatpush1.bf16.msra.mxu0 0
        %4366 = vmatprep.subr.bf16.mxu0 0
        %4367 = vmatpush1.bf16.msra.mxu0 0
        %4368 = vmatprep.subr.bf16.mxu0 0
        %4369 = vmatpush1.bf16.msra.mxu0 0
        %4370 = vmatprep.subr.bf16.mxu0 0
        %4371 = vmatpush1.bf16.msra.mxu0 0
        %4372 = vmatprep.mubr.bf16.mxu0 0
        %4373 = vmatmul.mubr.bf16.gmra.mrb[0].mxu0 %v3818
        %v4374 = vpop.f32.mrb[0].mxu0
        %v4375 = vadd.f32 0.0, %v4374
        %v4376 = vpop.f32.mrb[0].mxu0
        %v4377 = vpop.f32.mrb[0].mxu0
        %v4378 = vpop.f32.mrb[0].mxu0
        %4379 = vdwg.mxu0
        %v4384 = vunpack.c.l.b16 %v3356
        %v4385 = vunpack.c.l.b16 %v3357
        %v4386 = vunpack.c.l.b16 %v3358
        %v4387 = vunpack.c.l.b16 %v3359
        %v4388 = vpack.c.b16 %v4385, %v4384
        %v4389 = vpack.c.b16 %v4387, %v4386
        %4392 = vmatprep.subr.bf16.mxu0 0
        %4393 = vmatpush1.bf16.msra.mxu0 %v4388
        %4394 = vmatprep.subr.bf16.mxu0 0
        %4395 = vmatpush1.bf16.msra.mxu0 %v4389
        %4396 = vmatprep.subr.bf16.mxu0 0
        %4397 = vmatpush1.bf16.msra.mxu0 0
        %4398 = vmatprep.subr.bf16.mxu0 0
        %4399 = vmatpush1.bf16.msra.mxu0 0
        %4400 = vmatprep.subr.bf16.mxu0 0
        %4401 = vmatpush1.bf16.msra.mxu0 0
        %4402 = vmatprep.subr.bf16.mxu0 0
        %4403 = vmatpush1.bf16.msra.mxu0 0
        %4404 = vmatprep.subr.bf16.mxu0 0
        %4405 = vmatpush1.bf16.msra.mxu0 0
        %4406 = vmatprep.subr.bf16.mxu0 0
        %4407 = vmatpush1.bf16.msra.mxu0 0
        %4408 = vmatprep.subr.bf16.mxu0 0
        %4409 = vmatpush1.bf16.msra.mxu0 0
        %4410 = vmatprep.subr.bf16.mxu0 0
        %4411 = vmatpush1.bf16.msra.mxu0 0
        %4412 = vmatprep.subr.bf16.mxu0 0
        %4413 = vmatpush1.bf16.msra.mxu0 0
        %4414 = vmatprep.subr.bf16.mxu0 0
        %4415 = vmatpush1.bf16.msra.mxu0 0
        %4416 = vmatprep.subr.bf16.mxu0 0
        %4417 = vmatpush1.bf16.msra.mxu0 0
        %4418 = vmatprep.subr.bf16.mxu0 0
        %4419 = vmatpush1.bf16.msra.mxu0 0
        %4420 = vmatprep.subr.bf16.mxu0 0
        %4421 = vmatpush1.bf16.msra.mxu0 0
        %4422 = vmatprep.subr.bf16.mxu0 0
        %4423 = vmatpush1.bf16.msra.mxu0 0
        %4424 = vmatprep.mubr.bf16.mxu0 0
        %4425 = vmatmul.mubr.bf16.gmra.mrb[0].mxu0 %v3818
        %v4426 = vpop.f32.mrb[0].mxu0
        %v4427 = vadd.f32 0.0, %v4426
        %v4428 = vpop.f32.mrb[0].mxu0
        %v4429 = vpop.f32.mrb[0].mxu0
        %v4430 = vpop.f32.mrb[0].mxu0
        %4431 = vdwg.mxu0
        %v4436 = vunpack.c.l.b16 %v3360
        %v4437 = vunpack.c.l.b16 %v3361
        %v4438 = vunpack.c.l.b16 %v3362
        %v4439 = vunpack.c.l.b16 %v3363
        %v4440 = vpack.c.b16 %v4437, %v4436
        %v4441 = vpack.c.b16 %v4439, %v4438
        %4444 = vmatprep.subr.bf16.mxu0 0
        %4445 = vmatpush1.bf16.msra.mxu0 %v4440
        %4446 = vmatprep.subr.bf16.mxu0 0
        %4447 = vmatpush1.bf16.msra.mxu0 %v4441
        %4448 = vmatprep.subr.bf16.mxu0 0
        %4449 = vmatpush1.bf16.msra.mxu0 0
        %4450 = vmatprep.subr.bf16.mxu0 0
        %4451 = vmatpush1.bf16.msra.mxu0 0
        %4452 = vmatprep.subr.bf16.mxu0 0
        %4453 = vmatpush1.bf16.msra.mxu0 0
        %4454 = vmatprep.subr.bf16.mxu0 0
        %4455 = vmatpush1.bf16.msra.mxu0 0
        %4456 = vmatprep.subr.bf16.mxu0 0
        %4457 = vmatpush1.bf16.msra.mxu0 0
        %4458 = vmatprep.subr.bf16.mxu0 0
        %4459 = vmatpush1.bf16.msra.mxu0 0
        %4460 = vmatprep.subr.bf16.mxu0 0
        %4461 = vmatpush1.bf16.msra.mxu0 0
        %4462 = vmatprep.subr.bf16.mxu0 0
        %4463 = vmatpush1.bf16.msra.mxu0 0
        %4464 = vmatprep.subr.bf16.mxu0 0
        %4465 = vmatpush1.bf16.msra.mxu0 0
        %4466 = vmatprep.subr.bf16.mxu0 0
        %4467 = vmatpush1.bf16.msra.mxu0 0
        %4468 = vmatprep.subr.bf16.mxu0 0
        %4469 = vmatpush1.bf16.msra.mxu0 0
        %4470 = vmatprep.subr.bf16.mxu0 0
        %4471 = vmatpush1.bf16.msra.mxu0 0
        %4472 = vmatprep.subr.bf16.mxu0 0
        %4473 = vmatpush1.bf16.msra.mxu0 0
        %4474 = vmatprep.subr.bf16.mxu0 0
        %4475 = vmatpush1.bf16.msra.mxu0 0
        %4476 = vmatprep.mubr.bf16.mxu0 0
        %4477 = vmatmul.mubr.bf16.gmra.mrb[0].mxu0 %v3818
        %v4478 = vpop.f32.mrb[0].mxu0
        %v4479 = vadd.f32 0.0, %v4478
        %v4480 = vpop.f32.mrb[0].mxu0
        %v4481 = vpop.f32.mrb[0].mxu0
        %v4482 = vpop.f32.mrb[0].mxu0
        %4483 = vdwg.mxu0
        %v4488 = vunpack.c.l.b16 %v3364
        %v4489 = vunpack.c.l.b16 %v3365
        %v4490 = vunpack.c.l.b16 %v3366
        %v4491 = vunpack.c.l.b16 %v3367
        %v4492 = vpack.c.b16 %v4489, %v4488
        %v4493 = vpack.c.b16 %v4491, %v4490
        %4496 = vmatprep.subr.bf16.mxu0 0
        %4497 = vmatpush1.bf16.msra.mxu0 %v4492
        %4498 = vmatprep.subr.bf16.mxu0 0
        %4499 = vmatpush1.bf16.msra.mxu0 %v4493
        %4500 = vmatprep.subr.bf16.mxu0 0
        %4501 = vmatpush1.bf16.msra.mxu0 0
        %4502 = vmatprep.subr.bf16.mxu0 0
        %4503 = vmatpush1.bf16.msra.mxu0 0
        %4504 = vmatprep.subr.bf16.mxu0 0
        %4505 = vmatpush1.bf16.msra.mxu0 0
        %4506 = vmatprep.subr.bf16.mxu0 0
        %4507 = vmatpush1.bf16.msra.mxu0 0
        %4508 = vmatprep.subr.bf16.mxu0 0
        %4509 = vmatpush1.bf16.msra.mxu0 0
        %4510 = vmatprep.subr.bf16.mxu0 0
        %4511 = vmatpush1.bf16.msra.mxu0 0
        %4512 = vmatprep.subr.bf16.mxu0 0
        %4513 = vmatpush1.bf16.msra.mxu0 0
        %4514 = vmatprep.subr.bf16.mxu0 0
        %4515 = vmatpush1.bf16.msra.mxu0 0
        %4516 = vmatprep.subr.bf16.mxu0 0
        %4517 = vmatpush1.bf16.msra.mxu0 0
        %4518 = vmatprep.subr.bf16.mxu0 0
        %4519 = vmatpush1.bf16.msra.mxu0 0
        %4520 = vmatprep.subr.bf16.mxu0 0
        %4521 = vmatpush1.bf16.msra.mxu0 0
        %4522 = vmatprep.subr.bf16.mxu0 0
        %4523 = vmatpush1.bf16.msra.mxu0 0
        %4524 = vmatprep.subr.bf16.mxu0 0
        %4525 = vmatpush1.bf16.msra.mxu0 0
        %4526 = vmatprep.subr.bf16.mxu0 0
        %4527 = vmatpush1.bf16.msra.mxu0 0
        %4528 = vmatprep.mubr.bf16.mxu0 0
        %4529 = vmatmul.mubr.bf16.gmra.mrb[0].mxu0 %v3818
        %v4530 = vpop.f32.mrb[0].mxu0
        %v4531 = vadd.f32 0.0, %v4530
        %v4532 = vpop.f32.mrb[0].mxu0
        %v4533 = vpop.f32.mrb[0].mxu0
        %v4534 = vpop.f32.mrb[0].mxu0
        %4535 = vdwg.mxu0
        %v4540 = vunpack.c.l.b16 %v3368
        %v4541 = vunpack.c.l.b16 %v3369
        %v4542 = vunpack.c.l.b16 %v3370
        %v4543 = vunpack.c.l.b16 %v3371
        %v4544 = vpack.c.b16 %v4541, %v4540
        %v4545 = vpack.c.b16 %v4543, %v4542
        %4548 = vmatprep.subr.bf16.mxu0 0
        %4549 = vmatpush1.bf16.msra.mxu0 %v4544
        %4550 = vmatprep.subr.bf16.mxu0 0
        %4551 = vmatpush1.bf16.msra.mxu0 %v4545
        %4552 = vmatprep.subr.bf16.mxu0 0
        %4553 = vmatpush1.bf16.msra.mxu0 0
        %4554 = vmatprep.subr.bf16.mxu0 0
        %4555 = vmatpush1.bf16.msra.mxu0 0
        %4556 = vmatprep.subr.bf16.mxu0 0
        %4557 = vmatpush1.bf16.msra.mxu0 0
        %4558 = vmatprep.subr.bf16.mxu0 0
        %4559 = vmatpush1.bf16.msra.mxu0 0
        %4560 = vmatprep.subr.bf16.mxu0 0
        %4561 = vmatpush1.bf16.msra.mxu0 0
        %4562 = vmatprep.subr.bf16.mxu0 0
        %4563 = vmatpush1.bf16.msra.mxu0 0
        %4564 = vmatprep.subr.bf16.mxu0 0
        %4565 = vmatpush1.bf16.msra.mxu0 0
        %4566 = vmatprep.subr.bf16.mxu0 0
        %4567 = vmatpush1.bf16.msra.mxu0 0
        %4568 = vmatprep.subr.bf16.mxu0 0
        %4569 = vmatpush1.bf16.msra.mxu0 0
        %4570 = vmatprep.subr.bf16.mxu0 0
        %4571 = vmatpush1.bf16.msra.mxu0 0
        %4572 = vmatprep.subr.bf16.mxu0 0
        %4573 = vmatpush1.bf16.msra.mxu0 0
        %4574 = vmatprep.subr.bf16.mxu0 0
        %4575 = vmatpush1.bf16.msra.mxu0 0
        %4576 = vmatprep.subr.bf16.mxu0 0
        %4577 = vmatpush1.bf16.msra.mxu0 0
        %4578 = vmatprep.subr.bf16.mxu0 0
        %4579 = vmatpush1.bf16.msra.mxu0 0
        %4580 = vmatprep.mubr.bf16.mxu0 0
        %4581 = vmatmul.mubr.bf16.gmra.mrb[0].mxu0 %v3818
        %v4582 = vpop.f32.mrb[0].mxu0
        %v4583 = vadd.f32 0.0, %v4582
        %v4584 = vpop.f32.mrb[0].mxu0
        %v4585 = vpop.f32.mrb[0].mxu0
        %v4586 = vpop.f32.mrb[0].mxu0
        %4587 = vdwg.mxu0
        %v4592 = vunpack.c.l.b16 %v3372
        %v4593 = vunpack.c.l.b16 %v3373
        %v4594 = vunpack.c.l.b16 %v3374
        %v4595 = vunpack.c.l.b16 %v3375
        %v4596 = vpack.c.b16 %v4593, %v4592
        %v4597 = vpack.c.b16 %v4595, %v4594
        %4600 = vmatprep.subr.bf16.mxu0 0
        %4601 = vmatpush1.bf16.msra.mxu0 %v4596
        %4602 = vmatprep.subr.bf16.mxu0 0
        %4603 = vmatpush1.bf16.msra.mxu0 %v4597
        %4604 = vmatprep.subr.bf16.mxu0 0
        %4605 = vmatpush1.bf16.msra.mxu0 0
        %4606 = vmatprep.subr.bf16.mxu0 0
        %4607 = vmatpush1.bf16.msra.mxu0 0
        %4608 = vmatprep.subr.bf16.mxu0 0
        %4609 = vmatpush1.bf16.msra.mxu0 0
        %4610 = vmatprep.subr.bf16.mxu0 0
        %4611 = vmatpush1.bf16.msra.mxu0 0
        %4612 = vmatprep.subr.bf16.mxu0 0
        %4613 = vmatpush1.bf16.msra.mxu0 0
        %4614 = vmatprep.subr.bf16.mxu0 0
        %4615 = vmatpush1.bf16.msra.mxu0 0
        %4616 = vmatprep.subr.bf16.mxu0 0
        %4617 = vmatpush1.bf16.msra.mxu0 0
        %4618 = vmatprep.subr.bf16.mxu0 0
        %4619 = vmatpush1.bf16.msra.mxu0 0
        %4620 = vmatprep.subr.bf16.mxu0 0
        %4621 = vmatpush1.bf16.msra.mxu0 0
        %4622 = vmatprep.subr.bf16.mxu0 0
        %4623 = vmatpush1.bf16.msra.mxu0 0
        %4624 = vmatprep.subr.bf16.mxu0 0
        %4625 = vmatpush1.bf16.msra.mxu0 0
        %4626 = vmatprep.subr.bf16.mxu0 0
        %4627 = vmatpush1.bf16.msra.mxu0 0
        %4628 = vmatprep.subr.bf16.mxu0 0
        %4629 = vmatpush1.bf16.msra.mxu0 0
        %4630 = vmatprep.subr.bf16.mxu0 0
        %4631 = vmatpush1.bf16.msra.mxu0 0
        %4632 = vmatprep.mubr.bf16.mxu0 0
        %4633 = vmatmul.mubr.bf16.gmra.mrb[0].mxu0 %v3818
        %v4634 = vpop.f32.mrb[0].mxu0
        %v4635 = vadd.f32 0.0, %v4634
        %v4636 = vpop.f32.mrb[0].mxu0
        %v4637 = vpop.f32.mrb[0].mxu0
        %v4638 = vpop.f32.mrb[0].mxu0
        %4639 = vdwg.mxu0
        %v4640 = vpack.c.bf16 %v3436, %v3436
        %v4641 = vpack.c.bf16 %v3488, %v3488
        %v4642 = vpack.c.bf16 %v3540, %v3540
        %v4643 = vpack.c.bf16 %v3592, %v3592
        %v4644 = vpack.c.bf16 %v3644, %v3644
        %v4645 = vpack.c.bf16 %v3696, %v3696
        %v4646 = vpack.c.bf16 %v3748, %v3748
        %v4647 = vpack.c.bf16 %v3800, %v3800
        %v4648 = vpack.c.bf16 %v3855, %v3855
        %v4649 = vpack.c.bf16 %v3907, %v3907
        %v4650 = vpack.c.bf16 %v3959, %v3959
        %v4651 = vpack.c.bf16 %v4011, %v4011
        %v4652 = vpack.c.bf16 %v4063, %v4063
        %v4653 = vpack.c.bf16 %v4115, %v4115
        %v4654 = vpack.c.bf16 %v4167, %v4167
        %v4655 = vpack.c.bf16 %v4219, %v4219
        %v4657 = vsel %vm2008, %v4640, 0
        %v4660 = vsel %vm2008, %v4648, 0
        %4662 = vmatprep.subr.bf16.mxu0 0
        %4663 = vmatpush1.bf16.xpose.msra.mxu0 %v4660
        %4664 = vmatprep.subr.bf16.mxu0 0
        %4665 = vmatpush1.bf16.xpose.msra.mxu0 0
        %4666 = vmatprep.subr.bf16.mxu0 0
        %4667 = vmatpush1.bf16.xpose.msra.mxu0 0
        %4668 = vmatprep.subr.bf16.mxu0 0
        %4669 = vmatpush1.bf16.xpose.msra.mxu0 0
        %4670 = vmatprep.subr.bf16.mxu0 0
        %4671 = vmatpush1.bf16.xpose.msra.mxu0 0
        %4672 = vmatprep.subr.bf16.mxu0 0
        %4673 = vmatpush1.bf16.xpose.msra.mxu0 0
        %4674 = vmatprep.subr.bf16.mxu0 0
        %4675 = vmatpush1.bf16.xpose.msra.mxu0 0
        %4676 = vmatprep.subr.bf16.mxu0 0
        %4677 = vmatpush1.bf16.xpose.msra.mxu0 0
        %4678 = vmatprep.subr.bf16.mxu0 0
        %4679 = vmatpush1.bf16.xpose.msra.mxu0 0
        %4680 = vmatprep.subr.bf16.mxu0 0
        %4681 = vmatpush1.bf16.xpose.msra.mxu0 0
        %4682 = vmatprep.subr.bf16.mxu0 0
        %4683 = vmatpush1.bf16.xpose.msra.mxu0 0
        %4684 = vmatprep.subr.bf16.mxu0 0
        %4685 = vmatpush1.bf16.xpose.msra.mxu0 0
        %4686 = vmatprep.subr.bf16.mxu0 0
        %4687 = vmatpush1.bf16.xpose.msra.mxu0 0
        %4688 = vmatprep.subr.bf16.mxu0 0
        %4689 = vmatpush1.bf16.xpose.msra.mxu0 0
        %4690 = vmatprep.subr.bf16.mxu0 0
        %4691 = vmatpush1.bf16.xpose.msra.mxu0 0
        %4692 = vmatprep.subr.bf16.mxu0 0
        %4693 = vmatpush1.bf16.xpose.msra.mxu0 0
        %4694 = vmatprep.mubr.bf16.mxu0 0
        %4695 = vmatmul.mubr.bf16.gmra.mrb[0].mxu0 %v4657
        %v4696 = vpop.f32.mrb[0].mxu0
        %v4697 = vadd.f32 0.0, %v4696
        %v4698 = vpop.f32.mrb[0].mxu0
        %v4699 = vpop.f32.mrb[0].mxu0
        %v4700 = vpop.f32.mrb[0].mxu0
        %4701 = vdwg.mxu0
        %v4703 = vsel %vm2008, %v4641, 0
        %v4706 = vsel %vm2008, %v4649, 0
        %4708 = vmatprep.subr.bf16.mxu0 0
        %4709 = vmatpush1.bf16.xpose.msra.mxu0 %v4706
        %4710 = vmatprep.subr.bf16.mxu0 0
        %4711 = vmatpush1.bf16.xpose.msra.mxu0 0
        %4712 = vmatprep.subr.bf16.mxu0 0
        %4713 = vmatpush1.bf16.xpose.msra.mxu0 0
        %4714 = vmatprep.subr.bf16.mxu0 0
        %4715 = vmatpush1.bf16.xpose.msra.mxu0 0
        %4716 = vmatprep.subr.bf16.mxu0 0
        %4717 = vmatpush1.bf16.xpose.msra.mxu0 0
        %4718 = vmatprep.subr.bf16.mxu0 0
        %4719 = vmatpush1.bf16.xpose.msra.mxu0 0
        %4720 = vmatprep.subr.bf16.mxu0 0
        %4721 = vmatpush1.bf16.xpose.msra.mxu0 0
        %4722 = vmatprep.subr.bf16.mxu0 0
        %4723 = vmatpush1.bf16.xpose.msra.mxu0 0
        %4724 = vmatprep.subr.bf16.mxu0 0
        %4725 = vmatpush1.bf16.xpose.msra.mxu0 0
        %4726 = vmatprep.subr.bf16.mxu0 0
        %4727 = vmatpush1.bf16.xpose.msra.mxu0 0
        %4728 = vmatprep.subr.bf16.mxu0 0
        %4729 = vmatpush1.bf16.xpose.msra.mxu0 0
        %4730 = vmatprep.subr.bf16.mxu0 0
        %4731 = vmatpush1.bf16.xpose.msra.mxu0 0
        %4732 = vmatprep.subr.bf16.mxu0 0
        %4733 = vmatpush1.bf16.xpose.msra.mxu0 0
        %4734 = vmatprep.subr.bf16.mxu0 0
        %4735 = vmatpush1.bf16.xpose.msra.mxu0 0
        %4736 = vmatprep.subr.bf16.mxu0 0
        %4737 = vmatpush1.bf16.xpose.msra.mxu0 0
        %4738 = vmatprep.subr.bf16.mxu0 0
        %4739 = vmatpush1.bf16.xpose.msra.mxu0 0
        %4740 = vmatprep.mubr.bf16.mxu0 0
        %4741 = vmatmul.mubr.bf16.gmra.mrb[0].mxu0 %v4703
        %v4742 = vpop.f32.mrb[0].mxu0
        %v4743 = vadd.f32 0.0, %v4742
        %v4744 = vpop.f32.mrb[0].mxu0
        %v4745 = vpop.f32.mrb[0].mxu0
        %v4746 = vpop.f32.mrb[0].mxu0
        %4747 = vdwg.mxu0
        %v4749 = vsel %vm2008, %v4642, 0
        %v4752 = vsel %vm2008, %v4650, 0
        %4754 = vmatprep.subr.bf16.mxu0 0
        %4755 = vmatpush1.bf16.xpose.msra.mxu0 %v4752
        %4756 = vmatprep.subr.bf16.mxu0 0
        %4757 = vmatpush1.bf16.xpose.msra.mxu0 0
        %4758 = vmatprep.subr.bf16.mxu0 0
        %4759 = vmatpush1.bf16.xpose.msra.mxu0 0
        %4760 = vmatprep.subr.bf16.mxu0 0
        %4761 = vmatpush1.bf16.xpose.msra.mxu0 0
        %4762 = vmatprep.subr.bf16.mxu0 0
        %4763 = vmatpush1.bf16.xpose.msra.mxu0 0
        %4764 = vmatprep.subr.bf16.mxu0 0
        %4765 = vmatpush1.bf16.xpose.msra.mxu0 0
        %4766 = vmatprep.subr.bf16.mxu0 0
        %4767 = vmatpush1.bf16.xpose.msra.mxu0 0
        %4768 = vmatprep.subr.bf16.mxu0 0
        %4769 = vmatpush1.bf16.xpose.msra.mxu0 0
        %4770 = vmatprep.subr.bf16.mxu0 0
        %4771 = vmatpush1.bf16.xpose.msra.mxu0 0
        %4772 = vmatprep.subr.bf16.mxu0 0
        %4773 = vmatpush1.bf16.xpose.msra.mxu0 0
        %4774 = vmatprep.subr.bf16.mxu0 0
        %4775 = vmatpush1.bf16.xpose.msra.mxu0 0
        %4776 = vmatprep.subr.bf16.mxu0 0
        %4777 = vmatpush1.bf16.xpose.msra.mxu0 0
        %4778 = vmatprep.subr.bf16.mxu0 0
        %4779 = vmatpush1.bf16.xpose.msra.mxu0 0
        %4780 = vmatprep.subr.bf16.mxu0 0
        %4781 = vmatpush1.bf16.xpose.msra.mxu0 0
        %4782 = vmatprep.subr.bf16.mxu0 0
        %4783 = vmatpush1.bf16.xpose.msra.mxu0 0
        %4784 = vmatprep.subr.bf16.mxu0 0
        %4785 = vmatpush1.bf16.xpose.msra.mxu0 0
        %4786 = vmatprep.mubr.bf16.mxu0 0
        %4787 = vmatmul.mubr.bf16.gmra.mrb[0].mxu0 %v4749
        %v4788 = vpop.f32.mrb[0].mxu0
        %v4789 = vadd.f32 0.0, %v4788
        %v4790 = vpop.f32.mrb[0].mxu0
        %v4791 = vpop.f32.mrb[0].mxu0
        %v4792 = vpop.f32.mrb[0].mxu0
        %4793 = vdwg.mxu0
        %v4795 = vsel %vm2008, %v4643, 0
        %v4798 = vsel %vm2008, %v4651, 0
        %4800 = vmatprep.subr.bf16.mxu0 0
        %4801 = vmatpush1.bf16.xpose.msra.mxu0 %v4798
        %4802 = vmatprep.subr.bf16.mxu0 0
        %4803 = vmatpush1.bf16.xpose.msra.mxu0 0
        %4804 = vmatprep.subr.bf16.mxu0 0
        %4805 = vmatpush1.bf16.xpose.msra.mxu0 0
        %4806 = vmatprep.subr.bf16.mxu0 0
        %4807 = vmatpush1.bf16.xpose.msra.mxu0 0
        %4808 = vmatprep.subr.bf16.mxu0 0
        %4809 = vmatpush1.bf16.xpose.msra.mxu0 0
        %4810 = vmatprep.subr.bf16.mxu0 0
        %4811 = vmatpush1.bf16.xpose.msra.mxu0 0
        %4812 = vmatprep.subr.bf16.mxu0 0
        %4813 = vmatpush1.bf16.xpose.msra.mxu0 0
        %4814 = vmatprep.subr.bf16.mxu0 0
        %4815 = vmatpush1.bf16.xpose.msra.mxu0 0
        %4816 = vmatprep.subr.bf16.mxu0 0
        %4817 = vmatpush1.bf16.xpose.msra.mxu0 0
        %4818 = vmatprep.subr.bf16.mxu0 0
        %4819 = vmatpush1.bf16.xpose.msra.mxu0 0
        %4820 = vmatprep.subr.bf16.mxu0 0
        %4821 = vmatpush1.bf16.xpose.msra.mxu0 0
        %4822 = vmatprep.subr.bf16.mxu0 0
        %4823 = vmatpush1.bf16.xpose.msra.mxu0 0
        %4824 = vmatprep.subr.bf16.mxu0 0
        %4825 = vmatpush1.bf16.xpose.msra.mxu0 0
        %4826 = vmatprep.subr.bf16.mxu0 0
        %4827 = vmatpush1.bf16.xpose.msra.mxu0 0
        %4828 = vmatprep.subr.bf16.mxu0 0
        %4829 = vmatpush1.bf16.xpose.msra.mxu0 0
        %4830 = vmatprep.subr.bf16.mxu0 0
        %4831 = vmatpush1.bf16.xpose.msra.mxu0 0
        %4832 = vmatprep.mubr.bf16.mxu0 0
        %4833 = vmatmul.mubr.bf16.gmra.mrb[0].mxu0 %v4795
        %v4834 = vpop.f32.mrb[0].mxu0
        %v4835 = vadd.f32 0.0, %v4834
        %v4836 = vpop.f32.mrb[0].mxu0
        %v4837 = vpop.f32.mrb[0].mxu0
        %v4838 = vpop.f32.mrb[0].mxu0
        %4839 = vdwg.mxu0
        %v4841 = vsel %vm2008, %v4644, 0
        %v4844 = vsel %vm2008, %v4652, 0
        %4846 = vmatprep.subr.bf16.mxu0 0
        %4847 = vmatpush1.bf16.xpose.msra.mxu0 %v4844
        %4848 = vmatprep.subr.bf16.mxu0 0
        %4849 = vmatpush1.bf16.xpose.msra.mxu0 0
        %4850 = vmatprep.subr.bf16.mxu0 0
        %4851 = vmatpush1.bf16.xpose.msra.mxu0 0
        %4852 = vmatprep.subr.bf16.mxu0 0
        %4853 = vmatpush1.bf16.xpose.msra.mxu0 0
        %4854 = vmatprep.subr.bf16.mxu0 0
        %4855 = vmatpush1.bf16.xpose.msra.mxu0 0
        %4856 = vmatprep.subr.bf16.mxu0 0
        %4857 = vmatpush1.bf16.xpose.msra.mxu0 0
        %4858 = vmatprep.subr.bf16.mxu0 0
        %4859 = vmatpush1.bf16.xpose.msra.mxu0 0
        %4860 = vmatprep.subr.bf16.mxu0 0
        %4861 = vmatpush1.bf16.xpose.msra.mxu0 0
        %4862 = vmatprep.subr.bf16.mxu0 0
        %4863 = vmatpush1.bf16.xpose.msra.mxu0 0
        %4864 = vmatprep.subr.bf16.mxu0 0
        %4865 = vmatpush1.bf16.xpose.msra.mxu0 0
        %4866 = vmatprep.subr.bf16.mxu0 0
        %4867 = vmatpush1.bf16.xpose.msra.mxu0 0
        %4868 = vmatprep.subr.bf16.mxu0 0
        %4869 = vmatpush1.bf16.xpose.msra.mxu0 0
        %4870 = vmatprep.subr.bf16.mxu0 0
        %4871 = vmatpush1.bf16.xpose.msra.mxu0 0
        %4872 = vmatprep.subr.bf16.mxu0 0
        %4873 = vmatpush1.bf16.xpose.msra.mxu0 0
        %4874 = vmatprep.subr.bf16.mxu0 0
        %4875 = vmatpush1.bf16.xpose.msra.mxu0 0
        %4876 = vmatprep.subr.bf16.mxu0 0
        %4877 = vmatpush1.bf16.xpose.msra.mxu0 0
        %4878 = vmatprep.mubr.bf16.mxu0 0
        %4879 = vmatmul.mubr.bf16.gmra.mrb[0].mxu0 %v4841
        %v4880 = vpop.f32.mrb[0].mxu0
        %v4881 = vadd.f32 0.0, %v4880
        %v4882 = vpop.f32.mrb[0].mxu0
        %v4883 = vpop.f32.mrb[0].mxu0
        %v4884 = vpop.f32.mrb[0].mxu0
        %4885 = vdwg.mxu0
        %v4887 = vsel %vm2008, %v4645, 0
        %v4890 = vsel %vm2008, %v4653, 0
        %4892 = vmatprep.subr.bf16.mxu0 0
        %4893 = vmatpush1.bf16.xpose.msra.mxu0 %v4890
        %4894 = vmatprep.subr.bf16.mxu0 0
        %4895 = vmatpush1.bf16.xpose.msra.mxu0 0
        %4896 = vmatprep.subr.bf16.mxu0 0
        %4897 = vmatpush1.bf16.xpose.msra.mxu0 0
        %4898 = vmatprep.subr.bf16.mxu0 0
        %4899 = vmatpush1.bf16.xpose.msra.mxu0 0
        %4900 = vmatprep.subr.bf16.mxu0 0
        %4901 = vmatpush1.bf16.xpose.msra.mxu0 0
        %4902 = vmatprep.subr.bf16.mxu0 0
        %4903 = vmatpush1.bf16.xpose.msra.mxu0 0
        %4904 = vmatprep.subr.bf16.mxu0 0
        %4905 = vmatpush1.bf16.xpose.msra.mxu0 0
        %4906 = vmatprep.subr.bf16.mxu0 0
        %4907 = vmatpush1.bf16.xpose.msra.mxu0 0
        %4908 = vmatprep.subr.bf16.mxu0 0
        %4909 = vmatpush1.bf16.xpose.msra.mxu0 0
        %4910 = vmatprep.subr.bf16.mxu0 0
        %4911 = vmatpush1.bf16.xpose.msra.mxu0 0
        %4912 = vmatprep.subr.bf16.mxu0 0
        %4913 = vmatpush1.bf16.xpose.msra.mxu0 0
        %4914 = vmatprep.subr.bf16.mxu0 0
        %4915 = vmatpush1.bf16.xpose.msra.mxu0 0
        %4916 = vmatprep.subr.bf16.mxu0 0
        %4917 = vmatpush1.bf16.xpose.msra.mxu0 0
        %4918 = vmatprep.subr.bf16.mxu0 0
        %4919 = vmatpush1.bf16.xpose.msra.mxu0 0
        %4920 = vmatprep.subr.bf16.mxu0 0
        %4921 = vmatpush1.bf16.xpose.msra.mxu0 0
        %4922 = vmatprep.subr.bf16.mxu0 0
        %4923 = vmatpush1.bf16.xpose.msra.mxu0 0
        %4924 = vmatprep.mubr.bf16.mxu0 0
        %4925 = vmatmul.mubr.bf16.gmra.mrb[0].mxu0 %v4887
        %v4926 = vpop.f32.mrb[0].mxu0
        %v4927 = vadd.f32 0.0, %v4926
        %v4928 = vpop.f32.mrb[0].mxu0
        %v4929 = vpop.f32.mrb[0].mxu0
        %v4930 = vpop.f32.mrb[0].mxu0
        %4931 = vdwg.mxu0
        %v4933 = vsel %vm2008, %v4646, 0
        %v4936 = vsel %vm2008, %v4654, 0
        %4938 = vmatprep.subr.bf16.mxu0 0
        %4939 = vmatpush1.bf16.xpose.msra.mxu0 %v4936
        %4940 = vmatprep.subr.bf16.mxu0 0
        %4941 = vmatpush1.bf16.xpose.msra.mxu0 0
        %4942 = vmatprep.subr.bf16.mxu0 0
        %4943 = vmatpush1.bf16.xpose.msra.mxu0 0
        %4944 = vmatprep.subr.bf16.mxu0 0
        %4945 = vmatpush1.bf16.xpose.msra.mxu0 0
        %4946 = vmatprep.subr.bf16.mxu0 0
        %4947 = vmatpush1.bf16.xpose.msra.mxu0 0
        %4948 = vmatprep.subr.bf16.mxu0 0
        %4949 = vmatpush1.bf16.xpose.msra.mxu0 0
        %4950 = vmatprep.subr.bf16.mxu0 0
        %4951 = vmatpush1.bf16.xpose.msra.mxu0 0
        %4952 = vmatprep.subr.bf16.mxu0 0
        %4953 = vmatpush1.bf16.xpose.msra.mxu0 0
        %4954 = vmatprep.subr.bf16.mxu0 0
        %4955 = vmatpush1.bf16.xpose.msra.mxu0 0
        %4956 = vmatprep.subr.bf16.mxu0 0
        %4957 = vmatpush1.bf16.xpose.msra.mxu0 0
        %4958 = vmatprep.subr.bf16.mxu0 0
        %4959 = vmatpush1.bf16.xpose.msra.mxu0 0
        %4960 = vmatprep.subr.bf16.mxu0 0
        %4961 = vmatpush1.bf16.xpose.msra.mxu0 0
        %4962 = vmatprep.subr.bf16.mxu0 0
        %4963 = vmatpush1.bf16.xpose.msra.mxu0 0
        %4964 = vmatprep.subr.bf16.mxu0 0
        %4965 = vmatpush1.bf16.xpose.msra.mxu0 0
        %4966 = vmatprep.subr.bf16.mxu0 0
        %4967 = vmatpush1.bf16.xpose.msra.mxu0 0
        %4968 = vmatprep.subr.bf16.mxu0 0
        %4969 = vmatpush1.bf16.xpose.msra.mxu0 0
        %4970 = vmatprep.mubr.bf16.mxu0 0
        %4971 = vmatmul.mubr.bf16.gmra.mrb[0].mxu0 %v4933
        %v4972 = vpop.f32.mrb[0].mxu0
        %v4973 = vadd.f32 0.0, %v4972
        %v4974 = vpop.f32.mrb[0].mxu0
        %v4975 = vpop.f32.mrb[0].mxu0
        %v4976 = vpop.f32.mrb[0].mxu0
        %4977 = vdwg.mxu0
        %v4979 = vsel %vm2008, %v4647, 0
        %v4982 = vsel %vm2008, %v4655, 0
        %4984 = vmatprep.subr.bf16.mxu0 0
        %4985 = vmatpush1.bf16.xpose.msra.mxu0 %v4982
        %4986 = vmatprep.subr.bf16.mxu0 0
        %4987 = vmatpush1.bf16.xpose.msra.mxu0 0
        %4988 = vmatprep.subr.bf16.mxu0 0
        %4989 = vmatpush1.bf16.xpose.msra.mxu0 0
        %4990 = vmatprep.subr.bf16.mxu0 0
        %4991 = vmatpush1.bf16.xpose.msra.mxu0 0
        %4992 = vmatprep.subr.bf16.mxu0 0
        %4993 = vmatpush1.bf16.xpose.msra.mxu0 0
        %4994 = vmatprep.subr.bf16.mxu0 0
        %4995 = vmatpush1.bf16.xpose.msra.mxu0 0
        %4996 = vmatprep.subr.bf16.mxu0 0
        %4997 = vmatpush1.bf16.xpose.msra.mxu0 0
        %4998 = vmatprep.subr.bf16.mxu0 0
        %4999 = vmatpush1.bf16.xpose.msra.mxu0 0
        %5000 = vmatprep.subr.bf16.mxu0 0
        %5001 = vmatpush1.bf16.xpose.msra.mxu0 0
        %5002 = vmatprep.subr.bf16.mxu0 0
        %5003 = vmatpush1.bf16.xpose.msra.mxu0 0
        %5004 = vmatprep.subr.bf16.mxu0 0
        %5005 = vmatpush1.bf16.xpose.msra.mxu0 0
        %5006 = vmatprep.subr.bf16.mxu0 0
        %5007 = vmatpush1.bf16.xpose.msra.mxu0 0
        %5008 = vmatprep.subr.bf16.mxu0 0
        %5009 = vmatpush1.bf16.xpose.msra.mxu0 0
        %5010 = vmatprep.subr.bf16.mxu0 0
        %5011 = vmatpush1.bf16.xpose.msra.mxu0 0
        %5012 = vmatprep.subr.bf16.mxu0 0
        %5013 = vmatpush1.bf16.xpose.msra.mxu0 0
        %5014 = vmatprep.subr.bf16.mxu0 0
        %5015 = vmatpush1.bf16.xpose.msra.mxu0 0
        %5016 = vmatprep.mubr.bf16.mxu0 0
        %5017 = vmatmul.mubr.bf16.gmra.mrb[0].mxu0 %v4979
        %v5018 = vpop.f32.mrb[0].mxu0
        %v5019 = vadd.f32 0.0, %v5018
        %v5020 = vpop.f32.mrb[0].mxu0
        %v5021 = vpop.f32.mrb[0].mxu0
        %v5022 = vpop.f32.mrb[0].mxu0
        %5023 = vdwg.mxu0
        %v5024 = vmul.f32 %v4697, 0.35355338
        %v5025 = vmul.f32 %v4743, 0.35355338
        %v5026 = vmul.f32 %v4789, 0.35355338
        %v5027 = vmul.f32 %v4835, 0.35355338
        %v5028 = vmul.f32 %v4881, 0.35355338
        %v5029 = vmul.f32 %v4927, 0.35355338
        %v5030 = vmul.f32 %v4973, 0.35355338
        %v5031 = vmul.f32 %v5019, 0.35355338
        %vm5032 = vcmp.ne.f32.partialorder %v623, 0.0
        %vm5033 = vcmp.ne.f32.partialorder %v624, 0.0
        %vm5034 = vcmp.ne.f32.partialorder %v625, 0.0
        %vm5035 = vcmp.ne.f32.partialorder %v626, 0.0
        %vm5036 = vcmp.ne.f32.partialorder %v627, 0.0
        %vm5037 = vcmp.ne.f32.partialorder %v628, 0.0
        %vm5038 = vcmp.ne.f32.partialorder %v629, 0.0
        %vm5039 = vcmp.ne.f32.partialorder %v630, 0.0
        %v5040 = vsel %vm5032, -1e+09, %v5024
        %v5041 = vsel %vm5033, -1e+09, %v5025
        %v5042 = vsel %vm5034, -1e+09, %v5026
        %v5043 = vsel %vm5035, -1e+09, %v5027
        %v5044 = vsel %vm5036, -1e+09, %v5028
        %v5045 = vsel %vm5037, -1e+09, %v5029
        %v5046 = vsel %vm5038, -1e+09, %v5030
        %v5047 = vsel %vm5039, -1e+09, %v5031
        %v5048 = vsel %vm2008, %v5040, -inf
        %5049 = vmax.xlane.f32.xlu0 %v5048
        %v5050 = vpop.xlane.xlu0 %5049
        %v5051 = vsel %vm2008, %v5041, -inf
        %5052 = vmax.xlane.f32.xlu0 %v5051
        %v5053 = vpop.xlane.xlu0 %5052
        %v5054 = vsel %vm2008, %v5042, -inf
        %5055 = vmax.xlane.f32.xlu0 %v5054
        %v5056 = vpop.xlane.xlu0 %5055
        %v5057 = vsel %vm2008, %v5043, -inf
        %5058 = vmax.xlane.f32.xlu0 %v5057
        %v5059 = vpop.xlane.xlu0 %5058
        %v5060 = vsel %vm2008, %v5044, -inf
        %5061 = vmax.xlane.f32.xlu0 %v5060
        %v5062 = vpop.xlane.xlu0 %5061
        %v5063 = vsel %vm2008, %v5045, -inf
        %5064 = vmax.xlane.f32.xlu0 %v5063
        %v5065 = vpop.xlane.xlu0 %5064
        %v5066 = vsel %vm2008, %v5046, -inf
        %5067 = vmax.xlane.f32.xlu0 %v5066
        %v5068 = vpop.xlane.xlu0 %5067
        %v5069 = vsel %vm2008, %v5047, -inf
        %5070 = vmax.xlane.f32.xlu0 %v5069
        %v5071 = vpop.xlane.xlu0 %5070
        %v5072 = vsub.f32 %v5040, %v5050
        %v5073 = vsub.f32 %v5041, %v5053
        %v5074 = vsub.f32 %v5042, %v5056
        %v5075 = vsub.f32 %v5043, %v5059
        %v5076 = vsub.f32 %v5044, %v5062
        %v5077 = vsub.f32 %v5045, %v5065
        %v5078 = vsub.f32 %v5046, %v5068
        %v5079 = vsub.f32 %v5047, %v5071
        %v5080 = vmul.f32 %v5072, 1.442695
        %v5081 = vpow.pop %v5080
        %v5082 = vmul.f32 %v5073, 1.442695
        %v5083 = vpow.pop %v5082
        %v5084 = vmul.f32 %v5074, 1.442695
        %v5085 = vpow.pop %v5084
        %v5086 = vmul.f32 %v5075, 1.442695
        %v5087 = vpow.pop %v5086
        %v5088 = vmul.f32 %v5076, 1.442695
        %v5089 = vpow.pop %v5088
        %v5090 = vmul.f32 %v5077, 1.442695
        %v5091 = vpow.pop %v5090
        %v5092 = vmul.f32 %v5078, 1.442695
        %v5093 = vpow.pop %v5092
        %v5094 = vmul.f32 %v5079, 1.442695
        %v5095 = vpow.pop %v5094
        %v5096 = vsel %vm2008, %v5081, 0.0
        %5097 = vadd.xlane.f32.xlu0 %v5096
        %v5098 = vpop.xlane.xlu0 %5097
        %v5099 = vsel %vm2008, %v5083, 0.0
        %5100 = vadd.xlane.f32.xlu0 %v5099
        %v5101 = vpop.xlane.xlu0 %5100
        %v5102 = vsel %vm2008, %v5085, 0.0
        %5103 = vadd.xlane.f32.xlu0 %v5102
        %v5104 = vpop.xlane.xlu0 %5103
        %v5105 = vsel %vm2008, %v5087, 0.0
        %5106 = vadd.xlane.f32.xlu0 %v5105
        %v5107 = vpop.xlane.xlu0 %5106
        %v5108 = vsel %vm2008, %v5089, 0.0
        %5109 = vadd.xlane.f32.xlu0 %v5108
        %v5110 = vpop.xlane.xlu0 %5109
        %v5111 = vsel %vm2008, %v5091, 0.0
        %5112 = vadd.xlane.f32.xlu0 %v5111
        %v5113 = vpop.xlane.xlu0 %5112
        %v5114 = vsel %vm2008, %v5093, 0.0
        %5115 = vadd.xlane.f32.xlu0 %v5114
        %v5116 = vpop.xlane.xlu0 %5115
        %v5117 = vsel %vm2008, %v5095, 0.0
        %5118 = vadd.xlane.f32.xlu0 %v5117
        %v5119 = vpop.xlane.xlu0 %5118
        %v5120 = vrcp.pop %v5098
        %v5121 = vrcp.pop %v5101
        %v5122 = vrcp.pop %v5104
        %v5123 = vrcp.pop %v5107
        %v5124 = vrcp.pop %v5110
        %v5125 = vrcp.pop %v5113
        %v5126 = vrcp.pop %v5116
        %v5127 = vrcp.pop %v5119
        %v5128 = vmul.f32 %v5081, %v5120
        %v5129 = vmul.f32 %v5083, %v5121
        %v5130 = vmul.f32 %v5085, %v5122
        %v5131 = vmul.f32 %v5087, %v5123
        %v5132 = vmul.f32 %v5089, %v5124
        %v5133 = vmul.f32 %v5091, %v5125
        %v5134 = vmul.f32 %v5093, %v5126
        %v5135 = vmul.f32 %v5095, %v5127
        %v5136 = vpack.c.bf16 %v5128, %v5128
        %v5137 = vpack.c.bf16 %v5129, %v5129
        %v5138 = vpack.c.bf16 %v5130, %v5130
        %v5139 = vpack.c.bf16 %v5131, %v5131
        %v5140 = vpack.c.bf16 %v5132, %v5132
        %v5141 = vpack.c.bf16 %v5133, %v5133
        %v5142 = vpack.c.bf16 %v5134, %v5134
        %v5143 = vpack.c.bf16 %v5135, %v5135
        %v5144 = vpack.c.bf16 %v4271, %v4271
        %v5145 = vpack.c.bf16 %v4323, %v4323
        %v5146 = vpack.c.bf16 %v4375, %v4375
        %v5147 = vpack.c.bf16 %v4427, %v4427
        %v5148 = vpack.c.bf16 %v4479, %v4479
        %v5149 = vpack.c.bf16 %v4531, %v4531
        %v5150 = vpack.c.bf16 %v4583, %v4583
        %v5151 = vpack.c.bf16 %v4635, %v4635
        %v5153 = vsel %vm2008, %v5136, 0
        %v5156 = vsel %vm2508, %v5144, 0
        %5158 = vmatprep.subr.bf16.mxu0 0
        %5159 = vmatpush1.bf16.msra.mxu0 %v5156
        %5160 = vmatprep.subr.bf16.mxu0 0
        %5161 = vmatpush1.bf16.msra.mxu0 0
        %5162 = vmatprep.subr.bf16.mxu0 0
        %5163 = vmatpush1.bf16.msra.mxu0 0
        %5164 = vmatprep.subr.bf16.mxu0 0
        %5165 = vmatpush1.bf16.msra.mxu0 0
        %5166 = vmatprep.subr.bf16.mxu0 0
        %5167 = vmatpush1.bf16.msra.mxu0 0
        %5168 = vmatprep.subr.bf16.mxu0 0
        %5169 = vmatpush1.bf16.msra.mxu0 0
        %5170 = vmatprep.subr.bf16.mxu0 0
        %5171 = vmatpush1.bf16.msra.mxu0 0
        %5172 = vmatprep.subr.bf16.mxu0 0
        %5173 = vmatpush1.bf16.msra.mxu0 0
        %5174 = vmatprep.subr.bf16.mxu0 0
        %5175 = vmatpush1.bf16.msra.mxu0 0
        %5176 = vmatprep.subr.bf16.mxu0 0
        %5177 = vmatpush1.bf16.msra.mxu0 0
        %5178 = vmatprep.subr.bf16.mxu0 0
        %5179 = vmatpush1.bf16.msra.mxu0 0
        %5180 = vmatprep.subr.bf16.mxu0 0
        %5181 = vmatpush1.bf16.msra.mxu0 0
        %5182 = vmatprep.subr.bf16.mxu0 0
        %5183 = vmatpush1.bf16.msra.mxu0 0
        %5184 = vmatprep.subr.bf16.mxu0 0
        %5185 = vmatpush1.bf16.msra.mxu0 0
        %5186 = vmatprep.subr.bf16.mxu0 0
        %5187 = vmatpush1.bf16.msra.mxu0 0
        %5188 = vmatprep.subr.bf16.mxu0 0
        %5189 = vmatpush1.bf16.msra.mxu0 0
        %5190 = vmatprep.mubr.bf16.mxu0 0
        %5191 = vmatmul.mubr.bf16.gmra.mrb[0].mxu0 %v5153
        %v5192 = vpop.f32.mrb[0].mxu0
        %v5193 = vadd.f32 0.0, %v5192
        %v5194 = vpop.f32.mrb[0].mxu0
        %v5195 = vpop.f32.mrb[0].mxu0
        %v5196 = vpop.f32.mrb[0].mxu0
        %5197 = vdwg.mxu0
        %v5199 = vsel %vm2008, %v5137, 0
        %v5202 = vsel %vm2508, %v5145, 0
        %5204 = vmatprep.subr.bf16.mxu0 0
        %5205 = vmatpush1.bf16.msra.mxu0 %v5202
        %5206 = vmatprep.subr.bf16.mxu0 0
        %5207 = vmatpush1.bf16.msra.mxu0 0
        %5208 = vmatprep.subr.bf16.mxu0 0
        %5209 = vmatpush1.bf16.msra.mxu0 0
        %5210 = vmatprep.subr.bf16.mxu0 0
        %5211 = vmatpush1.bf16.msra.mxu0 0
        %5212 = vmatprep.subr.bf16.mxu0 0
        %5213 = vmatpush1.bf16.msra.mxu0 0
        %5214 = vmatprep.subr.bf16.mxu0 0
        %5215 = vmatpush1.bf16.msra.mxu0 0
        %5216 = vmatprep.subr.bf16.mxu0 0
        %5217 = vmatpush1.bf16.msra.mxu0 0
        %5218 = vmatprep.subr.bf16.mxu0 0
        %5219 = vmatpush1.bf16.msra.mxu0 0
        %5220 = vmatprep.subr.bf16.mxu0 0
        %5221 = vmatpush1.bf16.msra.mxu0 0
        %5222 = vmatprep.subr.bf16.mxu0 0
        %5223 = vmatpush1.bf16.msra.mxu0 0
        %5224 = vmatprep.subr.bf16.mxu0 0
        %5225 = vmatpush1.bf16.msra.mxu0 0
        %5226 = vmatprep.subr.bf16.mxu0 0
        %5227 = vmatpush1.bf16.msra.mxu0 0
        %5228 = vmatprep.subr.bf16.mxu0 0
        %5229 = vmatpush1.bf16.msra.mxu0 0
        %5230 = vmatprep.subr.bf16.mxu0 0
        %5231 = vmatpush1.bf16.msra.mxu0 0
        %5232 = vmatprep.subr.bf16.mxu0 0
        %5233 = vmatpush1.bf16.msra.mxu0 0
        %5234 = vmatprep.subr.bf16.mxu0 0
        %5235 = vmatpush1.bf16.msra.mxu0 0
        %5236 = vmatprep.mubr.bf16.mxu0 0
        %5237 = vmatmul.mubr.bf16.gmra.mrb[0].mxu0 %v5199
        %v5238 = vpop.f32.mrb[0].mxu0
        %v5239 = vadd.f32 0.0, %v5238
        %v5240 = vpop.f32.mrb[0].mxu0
        %v5241 = vpop.f32.mrb[0].mxu0
        %v5242 = vpop.f32.mrb[0].mxu0
        %5243 = vdwg.mxu0
        %v5245 = vsel %vm2008, %v5138, 0
        %v5248 = vsel %vm2508, %v5146, 0
        %5250 = vmatprep.subr.bf16.mxu0 0
        %5251 = vmatpush1.bf16.msra.mxu0 %v5248
        %5252 = vmatprep.subr.bf16.mxu0 0
        %5253 = vmatpush1.bf16.msra.mxu0 0
        %5254 = vmatprep.subr.bf16.mxu0 0
        %5255 = vmatpush1.bf16.msra.mxu0 0
        %5256 = vmatprep.subr.bf16.mxu0 0
        %5257 = vmatpush1.bf16.msra.mxu0 0
        %5258 = vmatprep.subr.bf16.mxu0 0
        %5259 = vmatpush1.bf16.msra.mxu0 0
        %5260 = vmatprep.subr.bf16.mxu0 0
        %5261 = vmatpush1.bf16.msra.mxu0 0
        %5262 = vmatprep.subr.bf16.mxu0 0
        %5263 = vmatpush1.bf16.msra.mxu0 0
        %5264 = vmatprep.subr.bf16.mxu0 0
        %5265 = vmatpush1.bf16.msra.mxu0 0
        %5266 = vmatprep.subr.bf16.mxu0 0
        %5267 = vmatpush1.bf16.msra.mxu0 0
        %5268 = vmatprep.subr.bf16.mxu0 0
        %5269 = vmatpush1.bf16.msra.mxu0 0
        %5270 = vmatprep.subr.bf16.mxu0 0
        %5271 = vmatpush1.bf16.msra.mxu0 0
        %5272 = vmatprep.subr.bf16.mxu0 0
        %5273 = vmatpush1.bf16.msra.mxu0 0
        %5274 = vmatprep.subr.bf16.mxu0 0
        %5275 = vmatpush1.bf16.msra.mxu0 0
        %5276 = vmatprep.subr.bf16.mxu0 0
        %5277 = vmatpush1.bf16.msra.mxu0 0
        %5278 = vmatprep.subr.bf16.mxu0 0
        %5279 = vmatpush1.bf16.msra.mxu0 0
        %5280 = vmatprep.subr.bf16.mxu0 0
        %5281 = vmatpush1.bf16.msra.mxu0 0
        %5282 = vmatprep.mubr.bf16.mxu0 0
        %5283 = vmatmul.mubr.bf16.gmra.mrb[0].mxu0 %v5245
        %v5284 = vpop.f32.mrb[0].mxu0
        %v5285 = vadd.f32 0.0, %v5284
        %v5286 = vpop.f32.mrb[0].mxu0
        %v5287 = vpop.f32.mrb[0].mxu0
        %v5288 = vpop.f32.mrb[0].mxu0
        %5289 = vdwg.mxu0
        %v5291 = vsel %vm2008, %v5139, 0
        %v5294 = vsel %vm2508, %v5147, 0
        %5296 = vmatprep.subr.bf16.mxu0 0
        %5297 = vmatpush1.bf16.msra.mxu0 %v5294
        %5298 = vmatprep.subr.bf16.mxu0 0
        %5299 = vmatpush1.bf16.msra.mxu0 0
        %5300 = vmatprep.subr.bf16.mxu0 0
        %5301 = vmatpush1.bf16.msra.mxu0 0
        %5302 = vmatprep.subr.bf16.mxu0 0
        %5303 = vmatpush1.bf16.msra.mxu0 0
        %5304 = vmatprep.subr.bf16.mxu0 0
        %5305 = vmatpush1.bf16.msra.mxu0 0
        %5306 = vmatprep.subr.bf16.mxu0 0
        %5307 = vmatpush1.bf16.msra.mxu0 0
        %5308 = vmatprep.subr.bf16.mxu0 0
        %5309 = vmatpush1.bf16.msra.mxu0 0
        %5310 = vmatprep.subr.bf16.mxu0 0
        %5311 = vmatpush1.bf16.msra.mxu0 0
        %5312 = vmatprep.subr.bf16.mxu0 0
        %5313 = vmatpush1.bf16.msra.mxu0 0
        %5314 = vmatprep.subr.bf16.mxu0 0
        %5315 = vmatpush1.bf16.msra.mxu0 0
        %5316 = vmatprep.subr.bf16.mxu0 0
        %5317 = vmatpush1.bf16.msra.mxu0 0
        %5318 = vmatprep.subr.bf16.mxu0 0
        %5319 = vmatpush1.bf16.msra.mxu0 0
        %5320 = vmatprep.subr.bf16.mxu0 0
        %5321 = vmatpush1.bf16.msra.mxu0 0
        %5322 = vmatprep.subr.bf16.mxu0 0
        %5323 = vmatpush1.bf16.msra.mxu0 0
        %5324 = vmatprep.subr.bf16.mxu0 0
        %5325 = vmatpush1.bf16.msra.mxu0 0
        %5326 = vmatprep.subr.bf16.mxu0 0
        %5327 = vmatpush1.bf16.msra.mxu0 0
        %5328 = vmatprep.mubr.bf16.mxu0 0
        %5329 = vmatmul.mubr.bf16.gmra.mrb[0].mxu0 %v5291
        %v5330 = vpop.f32.mrb[0].mxu0
        %v5331 = vadd.f32 0.0, %v5330
        %v5332 = vpop.f32.mrb[0].mxu0
        %v5333 = vpop.f32.mrb[0].mxu0
        %v5334 = vpop.f32.mrb[0].mxu0
        %5335 = vdwg.mxu0
        %v5337 = vsel %vm2008, %v5140, 0
        %v5340 = vsel %vm2508, %v5148, 0
        %5342 = vmatprep.subr.bf16.mxu0 0
        %5343 = vmatpush1.bf16.msra.mxu0 %v5340
        %5344 = vmatprep.subr.bf16.mxu0 0
        %5345 = vmatpush1.bf16.msra.mxu0 0
        %5346 = vmatprep.subr.bf16.mxu0 0
        %5347 = vmatpush1.bf16.msra.mxu0 0
        %5348 = vmatprep.subr.bf16.mxu0 0
        %5349 = vmatpush1.bf16.msra.mxu0 0
        %5350 = vmatprep.subr.bf16.mxu0 0
        %5351 = vmatpush1.bf16.msra.mxu0 0
        %5352 = vmatprep.subr.bf16.mxu0 0
        %5353 = vmatpush1.bf16.msra.mxu0 0
        %5354 = vmatprep.subr.bf16.mxu0 0
        %5355 = vmatpush1.bf16.msra.mxu0 0
        %5356 = vmatprep.subr.bf16.mxu0 0
        %5357 = vmatpush1.bf16.msra.mxu0 0
        %5358 = vmatprep.subr.bf16.mxu0 0
        %5359 = vmatpush1.bf16.msra.mxu0 0
        %5360 = vmatprep.subr.bf16.mxu0 0
        %5361 = vmatpush1.bf16.msra.mxu0 0
        %5362 = vmatprep.subr.bf16.mxu0 0
        %5363 = vmatpush1.bf16.msra.mxu0 0
        %5364 = vmatprep.subr.bf16.mxu0 0
        %5365 = vmatpush1.bf16.msra.mxu0 0
        %5366 = vmatprep.subr.bf16.mxu0 0
        %5367 = vmatpush1.bf16.msra.mxu0 0
        %5368 = vmatprep.subr.bf16.mxu0 0
        %5369 = vmatpush1.bf16.msra.mxu0 0
        %5370 = vmatprep.subr.bf16.mxu0 0
        %5371 = vmatpush1.bf16.msra.mxu0 0
        %5372 = vmatprep.subr.bf16.mxu0 0
        %5373 = vmatpush1.bf16.msra.mxu0 0
        %5374 = vmatprep.mubr.bf16.mxu0 0
        %5375 = vmatmul.mubr.bf16.gmra.mrb[0].mxu0 %v5337
        %v5376 = vpop.f32.mrb[0].mxu0
        %v5377 = vadd.f32 0.0, %v5376
        %v5378 = vpop.f32.mrb[0].mxu0
        %v5379 = vpop.f32.mrb[0].mxu0
        %v5380 = vpop.f32.mrb[0].mxu0
        %5381 = vdwg.mxu0
        %v5383 = vsel %vm2008, %v5141, 0
        %v5386 = vsel %vm2508, %v5149, 0
        %5388 = vmatprep.subr.bf16.mxu0 0
        %5389 = vmatpush1.bf16.msra.mxu0 %v5386
        %5390 = vmatprep.subr.bf16.mxu0 0
        %5391 = vmatpush1.bf16.msra.mxu0 0
        %5392 = vmatprep.subr.bf16.mxu0 0
        %5393 = vmatpush1.bf16.msra.mxu0 0
        %5394 = vmatprep.subr.bf16.mxu0 0
        %5395 = vmatpush1.bf16.msra.mxu0 0
        %5396 = vmatprep.subr.bf16.mxu0 0
        %5397 = vmatpush1.bf16.msra.mxu0 0
        %5398 = vmatprep.subr.bf16.mxu0 0
        %5399 = vmatpush1.bf16.msra.mxu0 0
        %5400 = vmatprep.subr.bf16.mxu0 0
        %5401 = vmatpush1.bf16.msra.mxu0 0
        %5402 = vmatprep.subr.bf16.mxu0 0
        %5403 = vmatpush1.bf16.msra.mxu0 0
        %5404 = vmatprep.subr.bf16.mxu0 0
        %5405 = vmatpush1.bf16.msra.mxu0 0
        %5406 = vmatprep.subr.bf16.mxu0 0
        %5407 = vmatpush1.bf16.msra.mxu0 0
        %5408 = vmatprep.subr.bf16.mxu0 0
        %5409 = vmatpush1.bf16.msra.mxu0 0
        %5410 = vmatprep.subr.bf16.mxu0 0
        %5411 = vmatpush1.bf16.msra.mxu0 0
        %5412 = vmatprep.subr.bf16.mxu0 0
        %5413 = vmatpush1.bf16.msra.mxu0 0
        %5414 = vmatprep.subr.bf16.mxu0 0
        %5415 = vmatpush1.bf16.msra.mxu0 0
        %5416 = vmatprep.subr.bf16.mxu0 0
        %5417 = vmatpush1.bf16.msra.mxu0 0
        %5418 = vmatprep.subr.bf16.mxu0 0
        %5419 = vmatpush1.bf16.msra.mxu0 0
        %5420 = vmatprep.mubr.bf16.mxu0 0
        %5421 = vmatmul.mubr.bf16.gmra.mrb[0].mxu0 %v5383
        %v5422 = vpop.f32.mrb[0].mxu0
        %v5423 = vadd.f32 0.0, %v5422
        %v5424 = vpop.f32.mrb[0].mxu0
        %v5425 = vpop.f32.mrb[0].mxu0
        %v5426 = vpop.f32.mrb[0].mxu0
        %5427 = vdwg.mxu0
        %v5429 = vsel %vm2008, %v5142, 0
        %v5432 = vsel %vm2508, %v5150, 0
        %5434 = vmatprep.subr.bf16.mxu0 0
        %5435 = vmatpush1.bf16.msra.mxu0 %v5432
        %5436 = vmatprep.subr.bf16.mxu0 0
        %5437 = vmatpush1.bf16.msra.mxu0 0
        %5438 = vmatprep.subr.bf16.mxu0 0
        %5439 = vmatpush1.bf16.msra.mxu0 0
        %5440 = vmatprep.subr.bf16.mxu0 0
        %5441 = vmatpush1.bf16.msra.mxu0 0
        %5442 = vmatprep.subr.bf16.mxu0 0
        %5443 = vmatpush1.bf16.msra.mxu0 0
        %5444 = vmatprep.subr.bf16.mxu0 0
        %5445 = vmatpush1.bf16.msra.mxu0 0
        %5446 = vmatprep.subr.bf16.mxu0 0
        %5447 = vmatpush1.bf16.msra.mxu0 0
        %5448 = vmatprep.subr.bf16.mxu0 0
        %5449 = vmatpush1.bf16.msra.mxu0 0
        %5450 = vmatprep.subr.bf16.mxu0 0
        %5451 = vmatpush1.bf16.msra.mxu0 0
        %5452 = vmatprep.subr.bf16.mxu0 0
        %5453 = vmatpush1.bf16.msra.mxu0 0
        %5454 = vmatprep.subr.bf16.mxu0 0
        %5455 = vmatpush1.bf16.msra.mxu0 0
        %5456 = vmatprep.subr.bf16.mxu0 0
        %5457 = vmatpush1.bf16.msra.mxu0 0
        %5458 = vmatprep.subr.bf16.mxu0 0
        %5459 = vmatpush1.bf16.msra.mxu0 0
        %5460 = vmatprep.subr.bf16.mxu0 0
        %5461 = vmatpush1.bf16.msra.mxu0 0
        %5462 = vmatprep.subr.bf16.mxu0 0
        %5463 = vmatpush1.bf16.msra.mxu0 0
        %5464 = vmatprep.subr.bf16.mxu0 0
        %5465 = vmatpush1.bf16.msra.mxu0 0
        %5466 = vmatprep.mubr.bf16.mxu0 0
        %5467 = vmatmul.mubr.bf16.gmra.mrb[0].mxu0 %v5429
        %v5468 = vpop.f32.mrb[0].mxu0
        %v5469 = vadd.f32 0.0, %v5468
        %v5470 = vpop.f32.mrb[0].mxu0
        %v5471 = vpop.f32.mrb[0].mxu0
        %v5472 = vpop.f32.mrb[0].mxu0
        %5473 = vdwg.mxu0
        %v5475 = vsel %vm2008, %v5143, 0
        %v5478 = vsel %vm2508, %v5151, 0
        %5480 = vmatprep.subr.bf16.mxu0 0
        %5481 = vmatpush1.bf16.msra.mxu0 %v5478
        %5482 = vmatprep.subr.bf16.mxu0 0
        %5483 = vmatpush1.bf16.msra.mxu0 0
        %5484 = vmatprep.subr.bf16.mxu0 0
        %5485 = vmatpush1.bf16.msra.mxu0 0
        %5486 = vmatprep.subr.bf16.mxu0 0
        %5487 = vmatpush1.bf16.msra.mxu0 0
        %5488 = vmatprep.subr.bf16.mxu0 0
        %5489 = vmatpush1.bf16.msra.mxu0 0
        %5490 = vmatprep.subr.bf16.mxu0 0
        %5491 = vmatpush1.bf16.msra.mxu0 0
        %5492 = vmatprep.subr.bf16.mxu0 0
        %5493 = vmatpush1.bf16.msra.mxu0 0
        %5494 = vmatprep.subr.bf16.mxu0 0
        %5495 = vmatpush1.bf16.msra.mxu0 0
        %5496 = vmatprep.subr.bf16.mxu0 0
        %5497 = vmatpush1.bf16.msra.mxu0 0
        %5498 = vmatprep.subr.bf16.mxu0 0
        %5499 = vmatpush1.bf16.msra.mxu0 0
        %5500 = vmatprep.subr.bf16.mxu0 0
        %5501 = vmatpush1.bf16.msra.mxu0 0
        %5502 = vmatprep.subr.bf16.mxu0 0
        %5503 = vmatpush1.bf16.msra.mxu0 0
        %5504 = vmatprep.subr.bf16.mxu0 0
        %5505 = vmatpush1.bf16.msra.mxu0 0
        %5506 = vmatprep.subr.bf16.mxu0 0
        %5507 = vmatpush1.bf16.msra.mxu0 0
        %5508 = vmatprep.subr.bf16.mxu0 0
        %5509 = vmatpush1.bf16.msra.mxu0 0
        %5510 = vmatprep.subr.bf16.mxu0 0
        %5511 = vmatpush1.bf16.msra.mxu0 0
        %5512 = vmatprep.mubr.bf16.mxu0 0
        %5513 = vmatmul.mubr.bf16.gmra.mrb[0].mxu0 %v5475
        %v5514 = vpop.f32.mrb[0].mxu0
        %v5515 = vadd.f32 0.0, %v5514
        %v5516 = vpop.f32.mrb[0].mxu0
        %v5517 = vpop.f32.mrb[0].mxu0
        %v5518 = vpop.f32.mrb[0].mxu0
        %5519 = vdwg.mxu0
        %v5520 = vpack.c.bf16 %v5193, %v5193
        %v5521 = vpack.c.bf16 %v5239, %v5239
        %v5522 = vpack.c.bf16 %v5285, %v5285
        %v5523 = vpack.c.bf16 %v5331, %v5331
        %v5524 = vpack.c.bf16 %v5377, %v5377
        %v5525 = vpack.c.bf16 %v5423, %v5423
        %v5526 = vpack.c.bf16 %v5469, %v5469
        %v5527 = vpack.c.bf16 %v5515, %v5515
        %v5529 = vsel %vm2008, %v5520, 0
        %v5532 = vsel %vm2508, %v3376, 0
        %5534 = vmatprep.subr.bf16.mxu0 0
        %5535 = vmatpush1.bf16.msra.mxu0 %v5532
        %5536 = vmatprep.subr.bf16.mxu0 0
        %5537 = vmatpush1.bf16.msra.mxu0 0
        %5538 = vmatprep.subr.bf16.mxu0 0
        %5539 = vmatpush1.bf16.msra.mxu0 0
        %5540 = vmatprep.subr.bf16.mxu0 0
        %5541 = vmatpush1.bf16.msra.mxu0 0
        %5542 = vmatprep.subr.bf16.mxu0 0
        %5543 = vmatpush1.bf16.msra.mxu0 0
        %5544 = vmatprep.subr.bf16.mxu0 0
        %5545 = vmatpush1.bf16.msra.mxu0 0
        %5546 = vmatprep.subr.bf16.mxu0 0
        %5547 = vmatpush1.bf16.msra.mxu0 0
        %5548 = vmatprep.subr.bf16.mxu0 0
        %5549 = vmatpush1.bf16.msra.mxu0 0
        %5550 = vmatprep.subr.bf16.mxu0 0
        %5551 = vmatpush1.bf16.msra.mxu0 0
        %5552 = vmatprep.subr.bf16.mxu0 0
        %5553 = vmatpush1.bf16.msra.mxu0 0
        %5554 = vmatprep.subr.bf16.mxu0 0
        %5555 = vmatpush1.bf16.msra.mxu0 0
        %5556 = vmatprep.subr.bf16.mxu0 0
        %5557 = vmatpush1.bf16.msra.mxu0 0
        %5558 = vmatprep.subr.bf16.mxu0 0
        %5559 = vmatpush1.bf16.msra.mxu0 0
        %5560 = vmatprep.subr.bf16.mxu0 0
        %5561 = vmatpush1.bf16.msra.mxu0 0
        %5562 = vmatprep.subr.bf16.mxu0 0
        %5563 = vmatpush1.bf16.msra.mxu0 0
        %5564 = vmatprep.subr.bf16.mxu0 0
        %5565 = vmatpush1.bf16.msra.mxu0 0
        %5566 = vmatprep.mubr.bf16.mxu0 0
        %5567 = vmatmul.mubr.bf16.gmra.mrb[0].mxu0 %v5529
        %v5568 = vpop.f32.mrb[0].mxu0
        %v5569 = vadd.f32 0.0, %v5568
        %v5570 = vpop.f32.mrb[0].mxu0
        %v5571 = vpop.f32.mrb[0].mxu0
        %v5572 = vpop.f32.mrb[0].mxu0
        %5573 = vdwg.mxu0
        %v5575 = vsel %vm2008, %v5521, 0
        %v5578 = vsel %vm2508, %v3377, 0
        %5580 = vmatprep.subr.bf16.mxu0 0
        %5581 = vmatpush1.bf16.msra.mxu0 %v5578
        %5582 = vmatprep.subr.bf16.mxu0 0
        %5583 = vmatpush1.bf16.msra.mxu0 0
        %5584 = vmatprep.subr.bf16.mxu0 0
        %5585 = vmatpush1.bf16.msra.mxu0 0
        %5586 = vmatprep.subr.bf16.mxu0 0
        %5587 = vmatpush1.bf16.msra.mxu0 0
        %5588 = vmatprep.subr.bf16.mxu0 0
        %5589 = vmatpush1.bf16.msra.mxu0 0
        %5590 = vmatprep.subr.bf16.mxu0 0
        %5591 = vmatpush1.bf16.msra.mxu0 0
        %5592 = vmatprep.subr.bf16.mxu0 0
        %5593 = vmatpush1.bf16.msra.mxu0 0
        %5594 = vmatprep.subr.bf16.mxu0 0
        %5595 = vmatpush1.bf16.msra.mxu0 0
        %5596 = vmatprep.subr.bf16.mxu0 0
        %5597 = vmatpush1.bf16.msra.mxu0 0
        %5598 = vmatprep.subr.bf16.mxu0 0
        %5599 = vmatpush1.bf16.msra.mxu0 0
        %5600 = vmatprep.subr.bf16.mxu0 0
        %5601 = vmatpush1.bf16.msra.mxu0 0
        %5602 = vmatprep.subr.bf16.mxu0 0
        %5603 = vmatpush1.bf16.msra.mxu0 0
        %5604 = vmatprep.subr.bf16.mxu0 0
        %5605 = vmatpush1.bf16.msra.mxu0 0
        %5606 = vmatprep.subr.bf16.mxu0 0
        %5607 = vmatpush1.bf16.msra.mxu0 0
        %5608 = vmatprep.subr.bf16.mxu0 0
        %5609 = vmatpush1.bf16.msra.mxu0 0
        %5610 = vmatprep.subr.bf16.mxu0 0
        %5611 = vmatpush1.bf16.msra.mxu0 0
        %5612 = vmatprep.mubr.bf16.mxu0 0
        %5613 = vmatmul.mubr.bf16.gmra.mrb[0].mxu0 %v5575
        %v5614 = vpop.f32.mrb[0].mxu0
        %v5615 = vadd.f32 0.0, %v5614
        %v5616 = vpop.f32.mrb[0].mxu0
        %v5617 = vpop.f32.mrb[0].mxu0
        %v5618 = vpop.f32.mrb[0].mxu0
        %5619 = vdwg.mxu0
        %v5621 = vsel %vm2008, %v5522, 0
        %v5624 = vsel %vm2508, %v3378, 0
        %5626 = vmatprep.subr.bf16.mxu0 0
        %5627 = vmatpush1.bf16.msra.mxu0 %v5624
        %5628 = vmatprep.subr.bf16.mxu0 0
        %5629 = vmatpush1.bf16.msra.mxu0 0
        %5630 = vmatprep.subr.bf16.mxu0 0
        %5631 = vmatpush1.bf16.msra.mxu0 0
        %5632 = vmatprep.subr.bf16.mxu0 0
        %5633 = vmatpush1.bf16.msra.mxu0 0
        %5634 = vmatprep.subr.bf16.mxu0 0
        %5635 = vmatpush1.bf16.msra.mxu0 0
        %5636 = vmatprep.subr.bf16.mxu0 0
        %5637 = vmatpush1.bf16.msra.mxu0 0
        %5638 = vmatprep.subr.bf16.mxu0 0
        %5639 = vmatpush1.bf16.msra.mxu0 0
        %5640 = vmatprep.subr.bf16.mxu0 0
        %5641 = vmatpush1.bf16.msra.mxu0 0
        %5642 = vmatprep.subr.bf16.mxu0 0
        %5643 = vmatpush1.bf16.msra.mxu0 0
        %5644 = vmatprep.subr.bf16.mxu0 0
        %5645 = vmatpush1.bf16.msra.mxu0 0
        %5646 = vmatprep.subr.bf16.mxu0 0
        %5647 = vmatpush1.bf16.msra.mxu0 0
        %5648 = vmatprep.subr.bf16.mxu0 0
        %5649 = vmatpush1.bf16.msra.mxu0 0
        %5650 = vmatprep.subr.bf16.mxu0 0
        %5651 = vmatpush1.bf16.msra.mxu0 0
        %5652 = vmatprep.subr.bf16.mxu0 0
        %5653 = vmatpush1.bf16.msra.mxu0 0
        %5654 = vmatprep.subr.bf16.mxu0 0
        %5655 = vmatpush1.bf16.msra.mxu0 0
        %5656 = vmatprep.subr.bf16.mxu0 0
        %5657 = vmatpush1.bf16.msra.mxu0 0
        %5658 = vmatprep.mubr.bf16.mxu0 0
        %5659 = vmatmul.mubr.bf16.gmra.mrb[0].mxu0 %v5621
        %v5660 = vpop.f32.mrb[0].mxu0
        %v5661 = vadd.f32 0.0, %v5660
        %v5662 = vpop.f32.mrb[0].mxu0
        %v5663 = vpop.f32.mrb[0].mxu0
        %v5664 = vpop.f32.mrb[0].mxu0
        %5665 = vdwg.mxu0
        %v5667 = vsel %vm2008, %v5523, 0
        %v5670 = vsel %vm2508, %v3379, 0
        %5672 = vmatprep.subr.bf16.mxu0 0
        %5673 = vmatpush1.bf16.msra.mxu0 %v5670
        %5674 = vmatprep.subr.bf16.mxu0 0
        %5675 = vmatpush1.bf16.msra.mxu0 0
        %5676 = vmatprep.subr.bf16.mxu0 0
        %5677 = vmatpush1.bf16.msra.mxu0 0
        %5678 = vmatprep.subr.bf16.mxu0 0
        %5679 = vmatpush1.bf16.msra.mxu0 0
        %5680 = vmatprep.subr.bf16.mxu0 0
        %5681 = vmatpush1.bf16.msra.mxu0 0
        %5682 = vmatprep.subr.bf16.mxu0 0
        %5683 = vmatpush1.bf16.msra.mxu0 0
        %5684 = vmatprep.subr.bf16.mxu0 0
        %5685 = vmatpush1.bf16.msra.mxu0 0
        %5686 = vmatprep.subr.bf16.mxu0 0
        %5687 = vmatpush1.bf16.msra.mxu0 0
        %5688 = vmatprep.subr.bf16.mxu0 0
        %5689 = vmatpush1.bf16.msra.mxu0 0
        %5690 = vmatprep.subr.bf16.mxu0 0
        %5691 = vmatpush1.bf16.msra.mxu0 0
        %5692 = vmatprep.subr.bf16.mxu0 0
        %5693 = vmatpush1.bf16.msra.mxu0 0
        %5694 = vmatprep.subr.bf16.mxu0 0
        %5695 = vmatpush1.bf16.msra.mxu0 0
        %5696 = vmatprep.subr.bf16.mxu0 0
        %5697 = vmatpush1.bf16.msra.mxu0 0
        %5698 = vmatprep.subr.bf16.mxu0 0
        %5699 = vmatpush1.bf16.msra.mxu0 0
        %5700 = vmatprep.subr.bf16.mxu0 0
        %5701 = vmatpush1.bf16.msra.mxu0 0
        %5702 = vmatprep.subr.bf16.mxu0 0
        %5703 = vmatpush1.bf16.msra.mxu0 0
        %5704 = vmatprep.mubr.bf16.mxu0 0
        %5705 = vmatmul.mubr.bf16.gmra.mrb[0].mxu0 %v5667
        %v5706 = vpop.f32.mrb[0].mxu0
        %v5707 = vadd.f32 0.0, %v5706
        %v5708 = vpop.f32.mrb[0].mxu0
        %v5709 = vpop.f32.mrb[0].mxu0
        %v5710 = vpop.f32.mrb[0].mxu0
        %5711 = vdwg.mxu0
        %v5713 = vsel %vm2008, %v5524, 0
        %v5716 = vsel %vm2508, %v3380, 0
        %5718 = vmatprep.subr.bf16.mxu0 0
        %5719 = vmatpush1.bf16.msra.mxu0 %v5716
        %5720 = vmatprep.subr.bf16.mxu0 0
        %5721 = vmatpush1.bf16.msra.mxu0 0
        %5722 = vmatprep.subr.bf16.mxu0 0
        %5723 = vmatpush1.bf16.msra.mxu0 0
        %5724 = vmatprep.subr.bf16.mxu0 0
        %5725 = vmatpush1.bf16.msra.mxu0 0
        %5726 = vmatprep.subr.bf16.mxu0 0
        %5727 = vmatpush1.bf16.msra.mxu0 0
        %5728 = vmatprep.subr.bf16.mxu0 0
        %5729 = vmatpush1.bf16.msra.mxu0 0
        %5730 = vmatprep.subr.bf16.mxu0 0
        %5731 = vmatpush1.bf16.msra.mxu0 0
        %5732 = vmatprep.subr.bf16.mxu0 0
        %5733 = vmatpush1.bf16.msra.mxu0 0
        %5734 = vmatprep.subr.bf16.mxu0 0
        %5735 = vmatpush1.bf16.msra.mxu0 0
        %5736 = vmatprep.subr.bf16.mxu0 0
        %5737 = vmatpush1.bf16.msra.mxu0 0
        %5738 = vmatprep.subr.bf16.mxu0 0
        %5739 = vmatpush1.bf16.msra.mxu0 0
        %5740 = vmatprep.subr.bf16.mxu0 0
        %5741 = vmatpush1.bf16.msra.mxu0 0
        %5742 = vmatprep.subr.bf16.mxu0 0
        %5743 = vmatpush1.bf16.msra.mxu0 0
        %5744 = vmatprep.subr.bf16.mxu0 0
        %5745 = vmatpush1.bf16.msra.mxu0 0
        %5746 = vmatprep.subr.bf16.mxu0 0
        %5747 = vmatpush1.bf16.msra.mxu0 0
        %5748 = vmatprep.subr.bf16.mxu0 0
        %5749 = vmatpush1.bf16.msra.mxu0 0
        %5750 = vmatprep.mubr.bf16.mxu0 0
        %5751 = vmatmul.mubr.bf16.gmra.mrb[0].mxu0 %v5713
        %v5752 = vpop.f32.mrb[0].mxu0
        %v5753 = vadd.f32 0.0, %v5752
        %v5754 = vpop.f32.mrb[0].mxu0
        %v5755 = vpop.f32.mrb[0].mxu0
        %v5756 = vpop.f32.mrb[0].mxu0
        %5757 = vdwg.mxu0
        %v5759 = vsel %vm2008, %v5525, 0
        %v5762 = vsel %vm2508, %v3381, 0
        %5764 = vmatprep.subr.bf16.mxu0 0
        %5765 = vmatpush1.bf16.msra.mxu0 %v5762
        %5766 = vmatprep.subr.bf16.mxu0 0
        %5767 = vmatpush1.bf16.msra.mxu0 0
        %5768 = vmatprep.subr.bf16.mxu0 0
        %5769 = vmatpush1.bf16.msra.mxu0 0
        %5770 = vmatprep.subr.bf16.mxu0 0
        %5771 = vmatpush1.bf16.msra.mxu0 0
        %5772 = vmatprep.subr.bf16.mxu0 0
        %5773 = vmatpush1.bf16.msra.mxu0 0
        %5774 = vmatprep.subr.bf16.mxu0 0
        %5775 = vmatpush1.bf16.msra.mxu0 0
        %5776 = vmatprep.subr.bf16.mxu0 0
        %5777 = vmatpush1.bf16.msra.mxu0 0
        %5778 = vmatprep.subr.bf16.mxu0 0
        %5779 = vmatpush1.bf16.msra.mxu0 0
        %5780 = vmatprep.subr.bf16.mxu0 0
        %5781 = vmatpush1.bf16.msra.mxu0 0
        %5782 = vmatprep.subr.bf16.mxu0 0
        %5783 = vmatpush1.bf16.msra.mxu0 0
        %5784 = vmatprep.subr.bf16.mxu0 0
        %5785 = vmatpush1.bf16.msra.mxu0 0
        %5786 = vmatprep.subr.bf16.mxu0 0
        %5787 = vmatpush1.bf16.msra.mxu0 0
        %5788 = vmatprep.subr.bf16.mxu0 0
        %5789 = vmatpush1.bf16.msra.mxu0 0
        %5790 = vmatprep.subr.bf16.mxu0 0
        %5791 = vmatpush1.bf16.msra.mxu0 0
        %5792 = vmatprep.subr.bf16.mxu0 0
        %5793 = vmatpush1.bf16.msra.mxu0 0
        %5794 = vmatprep.subr.bf16.mxu0 0
        %5795 = vmatpush1.bf16.msra.mxu0 0
        %5796 = vmatprep.mubr.bf16.mxu0 0
        %5797 = vmatmul.mubr.bf16.gmra.mrb[0].mxu0 %v5759
        %v5798 = vpop.f32.mrb[0].mxu0
        %v5799 = vadd.f32 0.0, %v5798
        %v5800 = vpop.f32.mrb[0].mxu0
        %v5801 = vpop.f32.mrb[0].mxu0
        %v5802 = vpop.f32.mrb[0].mxu0
        %5803 = vdwg.mxu0
        %v5805 = vsel %vm2008, %v5526, 0
        %v5808 = vsel %vm2508, %v3382, 0
        %5810 = vmatprep.subr.bf16.mxu0 0
        %5811 = vmatpush1.bf16.msra.mxu0 %v5808
        %5812 = vmatprep.subr.bf16.mxu0 0
        %5813 = vmatpush1.bf16.msra.mxu0 0
        %5814 = vmatprep.subr.bf16.mxu0 0
        %5815 = vmatpush1.bf16.msra.mxu0 0
        %5816 = vmatprep.subr.bf16.mxu0 0
        %5817 = vmatpush1.bf16.msra.mxu0 0
        %5818 = vmatprep.subr.bf16.mxu0 0
        %5819 = vmatpush1.bf16.msra.mxu0 0
        %5820 = vmatprep.subr.bf16.mxu0 0
        %5821 = vmatpush1.bf16.msra.mxu0 0
        %5822 = vmatprep.subr.bf16.mxu0 0
        %5823 = vmatpush1.bf16.msra.mxu0 0
        %5824 = vmatprep.subr.bf16.mxu0 0
        %5825 = vmatpush1.bf16.msra.mxu0 0
        %5826 = vmatprep.subr.bf16.mxu0 0
        %5827 = vmatpush1.bf16.msra.mxu0 0
        %5828 = vmatprep.subr.bf16.mxu0 0
        %5829 = vmatpush1.bf16.msra.mxu0 0
        %5830 = vmatprep.subr.bf16.mxu0 0
        %5831 = vmatpush1.bf16.msra.mxu0 0
        %5832 = vmatprep.subr.bf16.mxu0 0
        %5833 = vmatpush1.bf16.msra.mxu0 0
        %5834 = vmatprep.subr.bf16.mxu0 0
        %5835 = vmatpush1.bf16.msra.mxu0 0
        %5836 = vmatprep.subr.bf16.mxu0 0
        %5837 = vmatpush1.bf16.msra.mxu0 0
        %5838 = vmatprep.subr.bf16.mxu0 0
        %5839 = vmatpush1.bf16.msra.mxu0 0
        %5840 = vmatprep.subr.bf16.mxu0 0
        %5841 = vmatpush1.bf16.msra.mxu0 0
        %5842 = vmatprep.mubr.bf16.mxu0 0
        %5843 = vmatmul.mubr.bf16.gmra.mrb[0].mxu0 %v5805
        %v5844 = vpop.f32.mrb[0].mxu0
        %v5845 = vadd.f32 0.0, %v5844
        %v5846 = vpop.f32.mrb[0].mxu0
        %v5847 = vpop.f32.mrb[0].mxu0
        %v5848 = vpop.f32.mrb[0].mxu0
        %5849 = vdwg.mxu0
        %v5851 = vsel %vm2008, %v5527, 0
        %v5854 = vsel %vm2508, %v3383, 0
        %5856 = vmatprep.subr.bf16.mxu0 0
        %5857 = vmatpush1.bf16.msra.mxu0 %v5854
        %5858 = vmatprep.subr.bf16.mxu0 0
        %5859 = vmatpush1.bf16.msra.mxu0 0
        %5860 = vmatprep.subr.bf16.mxu0 0
        %5861 = vmatpush1.bf16.msra.mxu0 0
        %5862 = vmatprep.subr.bf16.mxu0 0
        %5863 = vmatpush1.bf16.msra.mxu0 0
        %5864 = vmatprep.subr.bf16.mxu0 0
        %5865 = vmatpush1.bf16.msra.mxu0 0
        %5866 = vmatprep.subr.bf16.mxu0 0
        %5867 = vmatpush1.bf16.msra.mxu0 0
        %5868 = vmatprep.subr.bf16.mxu0 0
        %5869 = vmatpush1.bf16.msra.mxu0 0
        %5870 = vmatprep.subr.bf16.mxu0 0
        %5871 = vmatpush1.bf16.msra.mxu0 0
        %5872 = vmatprep.subr.bf16.mxu0 0
        %5873 = vmatpush1.bf16.msra.mxu0 0
        %5874 = vmatprep.subr.bf16.mxu0 0
        %5875 = vmatpush1.bf16.msra.mxu0 0
        %5876 = vmatprep.subr.bf16.mxu0 0
        %5877 = vmatpush1.bf16.msra.mxu0 0
        %5878 = vmatprep.subr.bf16.mxu0 0
        %5879 = vmatpush1.bf16.msra.mxu0 0
        %5880 = vmatprep.subr.bf16.mxu0 0
        %5881 = vmatpush1.bf16.msra.mxu0 0
        %5882 = vmatprep.subr.bf16.mxu0 0
        %5883 = vmatpush1.bf16.msra.mxu0 0
        %5884 = vmatprep.subr.bf16.mxu0 0
        %5885 = vmatpush1.bf16.msra.mxu0 0
        %5886 = vmatprep.subr.bf16.mxu0 0
        %5887 = vmatpush1.bf16.msra.mxu0 0
        %5888 = vmatprep.mubr.bf16.mxu0 0
        %5889 = vmatmul.mubr.bf16.gmra.mrb[0].mxu0 %v5851
        %v5890 = vpop.f32.mrb[0].mxu0
        %v5891 = vadd.f32 0.0, %v5890
        %v5892 = vpop.f32.mrb[0].mxu0
        %v5893 = vpop.f32.mrb[0].mxu0
        %v5894 = vpop.f32.mrb[0].mxu0
        %5895 = vdwg.mxu0
        %v5896 = vsel %vm749, %v5569, 0.0
        %v5897 = vsel %vm749, %v5615, 0.0
        %v5898 = vadd.f32 %v5896, %v5897
        %v5899 = vsel %vm749, %v5661, 0.0
        %v5900 = vadd.f32 %v5898, %v5899
        %v5901 = vsel %vm749, %v5707, 0.0
        %v5902 = vadd.f32 %v5900, %v5901
        %v5903 = vsel %vm749, %v5753, 0.0
        %v5904 = vadd.f32 %v5902, %v5903
        %v5905 = vsel %vm749, %v5799, 0.0
        %v5906 = vadd.f32 %v5904, %v5905
        %v5907 = vsel %vm749, %v5845, 0.0
        %v5908 = vadd.f32 %v5906, %v5907
        %v5909 = vsel %vm749, %v5891, 0.0
        %v5910 = vadd.f32 %v5908, %v5909
        %v5911 = vadd.f32 %v3279, %v5910
        %v5912 = vsel %vm749, %v5911, 0.0
        %5913 = vadd.xlane.f32.xlu0 %v5912
        %v5914 = vpop.xlane.xlu0 %5913
        %v5915 = vmul.f32 %v5914, %v3269
        %v5916 = vsub.f32 %v5911, %v5915
        %v5917 = vmul.f32 %v5916, %v5916
        %v5918 = vsel %vm749, %v5917, 0.0
        %5919 = vadd.xlane.f32.xlu0 %v5918
        %v5920 = vpop.xlane.xlu0 %5919
        %v5921 = vmul.f32 %v5920, %v3269
        %v5922 = vadd.f32 %v5921, 1e-05
        %v5923 = vrsqrt.pop %v5922
        %v5924 = vmul.f32 %v5916, %v5923
        %v5925 = vpack.c.bf16 %v5924, %v5924
        %v5926 = vld [vmem:[%s13] sm:$0xf]
        %v5927 = vld [vmem:[%s13 + $0x4] sm:$0xf]
        %v5928 = vld [vmem:[%s13 + $0x8] sm:$0xf]
        %v5929 = vld [vmem:[%s13 + $0xc] sm:$0xf]
        %v5934 = vunpack.c.l.b16 %v5926
        %v5935 = vunpack.c.l.b16 %v5927
        %v5936 = vunpack.c.l.b16 %v5928
        %v5937 = vunpack.c.l.b16 %v5929
        %v5938 = vpack.c.b16 %v5935, %v5934
        %v5939 = vpack.c.b16 %v5937, %v5936
        %v5943 = vsel %vm749, %v5925, 0
        %5945 = vmatprep.subr.bf16.mxu0 0
        %5946 = vmatpush1.bf16.msra.mxu0 %v5938
        %5947 = vmatprep.subr.bf16.mxu0 0
        %5948 = vmatpush1.bf16.msra.mxu0 %v5939
        %5949 = vmatprep.subr.bf16.mxu0 0
        %5950 = vmatpush1.bf16.msra.mxu0 0
        %5951 = vmatprep.subr.bf16.mxu0 0
        %5952 = vmatpush1.bf16.msra.mxu0 0
        %5953 = vmatprep.subr.bf16.mxu0 0
        %5954 = vmatpush1.bf16.msra.mxu0 0
        %5955 = vmatprep.subr.bf16.mxu0 0
        %5956 = vmatpush1.bf16.msra.mxu0 0
        %5957 = vmatprep.subr.bf16.mxu0 0
        %5958 = vmatpush1.bf16.msra.mxu0 0
        %5959 = vmatprep.subr.bf16.mxu0 0
        %5960 = vmatpush1.bf16.msra.mxu0 0
        %5961 = vmatprep.subr.bf16.mxu0 0
        %5962 = vmatpush1.bf16.msra.mxu0 0
        %5963 = vmatprep.subr.bf16.mxu0 0
        %5964 = vmatpush1.bf16.msra.mxu0 0
        %5965 = vmatprep.subr.bf16.mxu0 0
        %5966 = vmatpush1.bf16.msra.mxu0 0
        %5967 = vmatprep.subr.bf16.mxu0 0
        %5968 = vmatpush1.bf16.msra.mxu0 0
        %5969 = vmatprep.subr.bf16.mxu0 0
        %5970 = vmatpush1.bf16.msra.mxu0 0
        %5971 = vmatprep.subr.bf16.mxu0 0
        %5972 = vmatpush1.bf16.msra.mxu0 0
        %5973 = vmatprep.subr.bf16.mxu0 0
        %5974 = vmatpush1.bf16.msra.mxu0 0
        %5975 = vmatprep.subr.bf16.mxu0 0
        %5976 = vmatpush1.bf16.msra.mxu0 0
        %5977 = vmatprep.mubr.bf16.mxu0 0
        %5978 = vmatmul.mubr.bf16.gmra.mrb[0].mxu0 %v5943
        %v5979 = vpop.f32.mrb[0].mxu0
        %v5980 = vadd.f32 0.0, %v5979
        %v5981 = vpop.f32.mrb[0].mxu0
        %v5982 = vpop.f32.mrb[0].mxu0
        %v5983 = vpop.f32.mrb[0].mxu0
        %5984 = vdwg.mxu0
        %v5985 = vmax.f32 %v5980, 0.0
        %v5986 = vpack.c.bf16 %v5985, %v5985
        %v5987 = vld [vmem:[%s14] sm:$0xf]
        %v5988 = vld [vmem:[%s14 + $0x4] sm:$0xf]
        %v5989 = vld [vmem:[%s14 + $0x8] sm:$0xf]
        %v5990 = vld [vmem:[%s14 + $0xc] sm:$0xf]
        %v5991 = vld [vmem:[%s14 + $0x10] sm:$0xf]
        %v5992 = vld [vmem:[%s14 + $0x14] sm:$0xf]
        %v5993 = vld [vmem:[%s14 + $0x18] sm:$0xf]
        %v5994 = vld [vmem:[%s14 + $0x1c] sm:$0xf]
        %v6003 = vunpack.c.l.b16 %v5987
        %v6004 = vunpack.c.l.b16 %v5988
        %v6005 = vunpack.c.l.b16 %v5989
        %v6006 = vunpack.c.l.b16 %v5990
        %v6007 = vunpack.c.l.b16 %v5991
        %v6008 = vunpack.c.l.b16 %v5992
        %v6009 = vunpack.c.l.b16 %v5993
        %v6010 = vunpack.c.l.b16 %v5994
        %v6011 = vpack.c.b16 %v6004, %v6003
        %v6012 = vpack.c.b16 %v6006, %v6005
        %v6013 = vpack.c.b16 %v6008, %v6007
        %v6014 = vpack.c.b16 %v6010, %v6009
        %vm6019 = vcmask 523264
        %v6021 = vsel %vm6019, %v5986, 0
        %6023 = vmatprep.subr.bf16.mxu0 0
        %6024 = vmatpush1.bf16.msra.mxu0 %v6011
        %6025 = vmatprep.subr.bf16.mxu0 0
        %6026 = vmatpush1.bf16.msra.mxu0 %v6012
        %6027 = vmatprep.subr.bf16.mxu0 0
        %6028 = vmatpush1.bf16.msra.mxu0 %v6013
        %6029 = vmatprep.subr.bf16.mxu0 0
        %6030 = vmatpush1.bf16.msra.mxu0 %v6014
        %6031 = vmatprep.subr.bf16.mxu0 0
        %6032 = vmatpush1.bf16.msra.mxu0 0
        %6033 = vmatprep.subr.bf16.mxu0 0
        %6034 = vmatpush1.bf16.msra.mxu0 0
        %6035 = vmatprep.subr.bf16.mxu0 0
        %6036 = vmatpush1.bf16.msra.mxu0 0
        %6037 = vmatprep.subr.bf16.mxu0 0
        %6038 = vmatpush1.bf16.msra.mxu0 0
        %6039 = vmatprep.subr.bf16.mxu0 0
        %6040 = vmatpush1.bf16.msra.mxu0 0
        %6041 = vmatprep.subr.bf16.mxu0 0
        %6042 = vmatpush1.bf16.msra.mxu0 0
        %6043 = vmatprep.subr.bf16.mxu0 0
        %6044 = vmatpush1.bf16.msra.mxu0 0
        %6045 = vmatprep.subr.bf16.mxu0 0
        %6046 = vmatpush1.bf16.msra.mxu0 0
        %6047 = vmatprep.subr.bf16.mxu0 0
        %6048 = vmatpush1.bf16.msra.mxu0 0
        %6049 = vmatprep.subr.bf16.mxu0 0
        %6050 = vmatpush1.bf16.msra.mxu0 0
        %6051 = vmatprep.subr.bf16.mxu0 0
        %6052 = vmatpush1.bf16.msra.mxu0 0
        %6053 = vmatprep.subr.bf16.mxu0 0
        %6054 = vmatpush1.bf16.msra.mxu0 0
        %6055 = vmatprep.mubr.bf16.mxu0 0
        %6056 = vmatmul.mubr.bf16.gmra.mrb[0].mxu0 %v6021
        %v6057 = vpop.f32.mrb[0].mxu0
        %v6058 = vadd.f32 0.0, %v6057
        %v6059 = vpop.f32.mrb[0].mxu0
        %v6060 = vpop.f32.mrb[0].mxu0
        %v6061 = vpop.f32.mrb[0].mxu0
        %6062 = vdwg.mxu0
        %v6063 = vadd.f32 %v5924, %v6058
        %v6064 = vsel %vm749, %v6063, 0.0
        %6065 = vadd.xlane.f32.xlu0 %v6064
        %v6066 = vpop.xlane.xlu0 %6065
        %v6067 = vmul.f32 %v6066, %v3269
        %v6068 = vsub.f32 %v6063, %v6067
        %v6069 = vmul.f32 %v6068, %v6068
        %v6070 = vsel %vm749, %v6069, 0.0
        %6071 = vadd.xlane.f32.xlu0 %v6070
        %v6072 = vpop.xlane.xlu0 %6071
        %v6073 = vmul.f32 %v6072, %v3269
        %v6074 = vadd.f32 %v6073, 1e-05
        %v6075 = vrsqrt.pop %v6074
        %v6076 = vmul.f32 %v6068, %v6075
        %6077 = vst.msk [vmem:[%s579] sm:$0xff] %vm749, %v6076
        %s6078 = sand.u32 %s397, 1
        %s6079 = scalar_lea.sflag [#allocation3], %s6078
        %s6080 = sand.u32 %s397, 1
        %s6081 = smul.addr %s6080, 8
        %s6082 = scalar_lea.vmem [#allocation2], %s6081
        // Predicated region
        $region81: #{tpu_custom_call.1} parent=79 // pred_check
          %p6083 = pneg %p407
        $region82: #{tpu_custom_call.1} parent=79 // pred_check_branch
          %6085 = sbr.rel (%p6083) target = $region84
        $region83: #{tpu_custom_call.1} parent=79 // pred_region
          %s6087 = ssub.s32 128, 128
          %6088 = vsyncadd %s6079, %s6087
          %s6089 = sadd.s32 %s34, %s33
          %s6090 = smul.addr %s6089, 128
          %s6091 = scalar_lea.hbm %s15, %s6090
          %s6093 = sshll.u32 %s6082, 4
          %s6094 = int_to_ptr.vmem [resolvable:$true] %s6093
          %6096 = dma.vmem_to_hbm [thread:$0]  %s6094, 128, %s6091, %s6079
        $region84: #{tpu_custom_call.1} parent=79 // pred_fallthru
          _
      $region80: #{tpu_custom_call.1} parent=5 // pred_fallthru
        _
      %p6097 = scmp.le.s32.totalorder 2, %s24
      // Predicated region
      $region85: #{tpu_custom_call.1} parent=5 // pred_check
        %p6098 = pneg %p6097
      $region86: #{tpu_custom_call.1} parent=5 // pred_check_branch
        %6100 = sbr.rel (%p6098) target = $region88
      $region87: #{tpu_custom_call.1} parent=5 // pred_region
        %s6101 = ssub.s32 %s24, 2
        // Predicated region
        $region89: #{tpu_custom_call.1} parent=87 // pred_check
          %p6102 = pneg %p413
        $region90: #{tpu_custom_call.1} parent=87 // pred_check_branch
          %6104 = sbr.rel (%p6102) target = $region92
        $region91: #{tpu_custom_call.1} parent=87 // pred_region
          %s6105 = sand.u32 %s398, 1
          %s6106 = scalar_lea.sflag [#allocation3], %s6105
          %s6107 = sand.u32 %s398, 1
          %s6108 = smul.addr %s6107, 8
          %s6109 = scalar_lea.vmem [#allocation2], %s6108
          %6110 = dma.done %s6106, 128
        $region92: #{tpu_custom_call.1} parent=87 // pred_fallthru
          _
      $region88: #{tpu_custom_call.1} parent=5 // pred_fallthru
        _
    $region6: #{tpu_custom_call.1} parent=1 // loop_footer
      %s28 = sadd.s32 1, %s24
    $region7: #{tpu_custom_call.1} parent=1 // loop_footer_branch
      %23 = sbr.rel target = $region3
    $region8: #{tpu_custom_call.1} parent=1 // loop_exit
      _
    %6111 = vsyncpa [#allocation3], 1
    %s6112 = scalar_lea.sflag [#allocation3], 1
    %6113 = vsyncpa %s6112, 1

</llo_original>
